<compile_context>
chip_gen: v7x
topology: tpu7x:2x2x1
jax: 0.10.0
libtpu: 0.0.40
codegen_flags: <defaults>
</compile_context>

<pallas_src>
import jax
import jax.numpy as jnp
from jax.experimental import pallas as pl
from jax.experimental.pallas import tpu as pltpu

HIDDEN_SIZES = [600, 400, 160, 80]
INPUT_SIZE = 784
# output_size in the reference is len(listdir('model/trainingdata')); it is a
# runtime-data-dependent constant, so we fix a deterministic small value here.
OUTPUT_SIZE = 10
LANE = 128
BATCH = 8


def _round_up(x, m):
    return (x + m - 1) // m * m


def mlp_kernel(x_ref,
               w1_ref, b1_ref, w2_ref, b2_ref, w3_ref, b3_ref,
               w4_ref, b4_ref, w5_ref, b5_ref,
               o_ref):
    """Whole MLP forward for one batch tile (all weights resident in VMEM)."""
    h = x_ref[...]                                     # (TM, 784) bf16
    for w_ref, b_ref in ((w1_ref, b1_ref), (w2_ref, b2_ref),
                         (w3_ref, b3_ref), (w4_ref, b4_ref)):
        z = jnp.dot(h, w_ref[...], preferred_element_type=jnp.float32) + b_ref[...]
        h = jnp.maximum(z, 0.0).astype(jnp.bfloat16)   # ReLU in f32, live copy in bf16
    out = jnp.dot(h, w5_ref[...], preferred_element_type=jnp.float32) + b5_ref[...]
    o_ref[...] = out.astype(o_ref.dtype)               # (TM, 128) unmasked lane-dense store


def simple_mlp_pallas(x, params, out_features=OUTPUT_SIZE):
    """params: list of (W_t, b_row) with W_t: (K_pad, N_pad) bf16, b_row: (1, N_pad) f32.
    All feature dims are already zero-padded to multiples of 128 (except K=784)."""
    B = x.shape[0]
    if B >= 256:
        TM = 256          # amortize per-grid-step overhead at large batch
    elif B >= 128:
        TM = 128
    else:
        TM = _round_up(B, 16)
    Bp = _round_up(B, TM)

    x = x.astype(jnp.bfloat16)                         # halve activation DMA
    if Bp != B:
        x = jnp.pad(x, ((0, Bp - B), (0, 0)))

    flat, flat_specs = [], []
    for w, b in params:
        flat.extend([w, b])
        # Constant index_map -> weights/biases fetched once and stay VMEM-resident.
        flat_specs.append(pl.BlockSpec(w.shape, lambda i: (0, 0)))
        flat_specs.append(pl.BlockSpec(b.shape, lambda i: (0, 0)))
    out_pad = params[-1][0].shape[1]
    grid_m = Bp // TM

    flops = 2 * Bp * sum(w.shape[0] * w.shape[1] for w, _ in params)
    bytes_accessed = (
        sum(w.size * w.dtype.itemsize + b.size * b.dtype.itemsize for w, b in params)
        + x.size * x.dtype.itemsize
        + Bp * out_pad * 4
    )

    out = pl.pallas_call(
        mlp_kernel,
        out_shape=jax.ShapeDtypeStruct((Bp, out_pad), jnp.float32),
        grid_spec=pltpu.PrefetchScalarGridSpec(
            num_scalar_prefetch=0,
            grid=(grid_m,),
            in_specs=[pl.BlockSpec((TM, x.shape[1]), lambda i: (i, 0))] + flat_specs,
            out_specs=pl.BlockSpec((TM, out_pad), lambda i: (i, 0)),
        ),
        compiler_params=pltpu.CompilerParams(
            # Megacore sharding only when there is actually more than one batch tile;
            # at grid=1 it would just duplicate the weight fetch per core on v7x.
            dimension_semantics=("parallel",) if grid_m > 1 else ("arbitrary",),
            vmem_limit_bytes=32 << 20,                 # actual footprint ~3 MiB; ample headroom
        ),
        cost_estimate=pl.CostEstimate(
            flops=flops, transcendentals=0, bytes_accessed=bytes_accessed),
    )(x, *flat)
    return out[:B, :out_features]


def init_params(key):
    """Deterministic init mirroring nn.Linear's U(-1/sqrt(fan_in), 1/sqrt(fan_in))."""
    dims = [INPUT_SIZE] + HIDDEN_SIZES + [OUTPUT_SIZE]
    params = []
    for i in range(len(dims) - 1):
        fan_in, fan_out = dims[i], dims[i + 1]
        key, kw, kb = jax.random.split(key, 3)
        bound = 1.0 / (fan_in ** 0.5)
        # Stored already transposed: (in, out). PyTorch stores (out, in) and does x @ W.T.
        w_t = jax.random.uniform(kw, (fan_in, fan_out), jnp.float32, -bound, bound)
        b = jax.random.uniform(kb, (1, fan_out), jnp.float32, -bound, bound)
        params.append((w_t, b))
    return params


def pack_params(params_f32):
    """Cast weights to bf16; zero-pad every layer's feature dims to multiples of 128.

    Exact: padded weight columns + zero bias produce zero activations, ReLU(0)=0, and
    padded weight rows only ever multiply those zero activation columns. The extra
    output columns are sliced off by the wrapper.
    """
    packed = []
    k_pad = INPUT_SIZE                                  # input K left at 784 (full-dim block)
    for w, b in params_f32:
        k, n = w.shape
        n_pad = _round_up(n, LANE)
        w = jnp.pad(w, ((0, k_pad - k), (0, n_pad - n)))
        b = jnp.pad(b, ((0, 0), (0, n_pad - n)))
        packed.append((w.astype(jnp.bfloat16), b))
        k_pad = n_pad
    return packed


def reference_forward(x, params_f32):
    """Pure-JAX reference with the same bf16-activation / f32-accumulate arithmetic."""
    h = x.astype(jnp.bfloat16)
    n = len(params_f32)
    for i, (w, b) in enumerate(params_f32):
        z = jnp.dot(h, w.astype(jnp.bfloat16), preferred_element_type=jnp.float32) + b
        h = jnp.maximum(z, 0.0).astype(jnp.bfloat16) if i < n - 1 else z
    return h


if __name__ == "__main__":
    key = jax.random.PRNGKey(0)
    key, kx = jax.random.split(key)
    x = jax.random.normal(kx, (BATCH, INPUT_SIZE), jnp.float32)
    params_f32 = init_params(key)
    params = pack_params(params_f32)

    out = simple_mlp_pallas(x, params)
    out = jax.block_until_ready(out)

    ref = reference_forward(x, params_f32)
    assert out.shape == (BATCH, OUTPUT_SIZE)
    assert jnp.allclose(out, ref, atol=1e-3, rtol=1e-3), "mismatch vs JAX reference"

    print("KERNEL_OK")
</pallas_src>

<mosaic_0001>
module attributes {stable_mosaic.version = 11 : i64} {
  func.func @mlp_kernel(%arg0: i32, %arg1: memref<16x784xbf16, #tpu.memory_space<vmem>>, %arg2: memref<784x640xbf16, #tpu.memory_space<vmem>>, %arg3: memref<1x640xf32, #tpu.memory_space<vmem>>, %arg4: memref<640x512xbf16, #tpu.memory_space<vmem>>, %arg5: memref<1x512xf32, #tpu.memory_space<vmem>>, %arg6: memref<512x256xbf16, #tpu.memory_space<vmem>>, %arg7: memref<1x256xf32, #tpu.memory_space<vmem>>, %arg8: memref<256x128xbf16, #tpu.memory_space<vmem>>, %arg9: memref<1x128xf32, #tpu.memory_space<vmem>>, %arg10: memref<128x128xbf16, #tpu.memory_space<vmem>>, %arg11: memref<1x128xf32, #tpu.memory_space<vmem>>, %arg12: memref<16x128xf32, #tpu.memory_space<vmem>>) attributes {dimension_semantics = [#tpu.dimension_semantics<arbitrary>], iteration_bounds = array<i64: 1>, scalar_prefetch = 0 : i64, scratch_operands = 0 : i64, tpu.core_type = #tpu.core_type<tc>, window_params = [{transform_indices = @transform_0, window_bounds = array<i64: 16, 784>}, {pipeline_mode = #tpu.pipeline_mode<synchronous>, transform_indices = @transform_1, window_bounds = array<i64: 784, 640>}, {pipeline_mode = #tpu.pipeline_mode<synchronous>, transform_indices = @transform_2, window_bounds = array<i64: 1, 640>}, {pipeline_mode = #tpu.pipeline_mode<synchronous>, transform_indices = @transform_3, window_bounds = array<i64: 640, 512>}, {pipeline_mode = #tpu.pipeline_mode<synchronous>, transform_indices = @transform_4, window_bounds = array<i64: 1, 512>}, {pipeline_mode = #tpu.pipeline_mode<synchronous>, transform_indices = @transform_5, window_bounds = array<i64: 512, 256>}, {pipeline_mode = #tpu.pipeline_mode<synchronous>, transform_indices = @transform_6, window_bounds = array<i64: 1, 256>}, {pipeline_mode = #tpu.pipeline_mode<synchronous>, transform_indices = @transform_7, window_bounds = array<i64: 256, 128>}, {pipeline_mode = #tpu.pipeline_mode<synchronous>, transform_indices = @transform_8, window_bounds = array<i64: 1, 128>}, {pipeline_mode = #tpu.pipeline_mode<synchronous>, transform_indices = @transform_9, window_bounds = array<i64: 128, 128>}, {pipeline_mode = #tpu.pipeline_mode<synchronous>, transform_indices = @transform_10, window_bounds = array<i64: 1, 128>}, {transform_indices = @transform_11, window_bounds = array<i64: 16, 128>}]} {
    %c0 = arith.constant 0 : index
    %c0_0 = arith.constant 0 : index
    %0 = vector.load %arg1[%c0, %c0_0] : memref<16x784xbf16, #tpu.memory_space<vmem>>, vector<16x784xbf16>
    %c0_1 = arith.constant 0 : index
    %c0_2 = arith.constant 0 : index
    %1 = vector.load %arg2[%c0_1, %c0_2] : memref<784x640xbf16, #tpu.memory_space<vmem>>, vector<784x640xbf16>
    %cst = arith.constant dense<0.000000e+00> : vector<16x640xf32>
    %2 = tpu.matmul %0, %1, %cst {dimension_numbers = #tpu.dot_dimension_numbers<[1], [0], [0], [1], [0, 0, 1, 1], [], []>} : vector<16x784xbf16>, vector<784x640xbf16>, vector<16x640xf32> -> vector<16x640xf32>
    %c0_3 = arith.constant 0 : index
    %c0_4 = arith.constant 0 : index
    %3 = vector.load %arg3[%c0_3, %c0_4] : memref<1x640xf32, #tpu.memory_space<vmem>>, vector<1x640xf32>
    %4 = vector.broadcast %3 : vector<1x640xf32> to vector<16x640xf32>
    %5 = arith.addf %2, %4 : vector<16x640xf32>
    %cst_5 = arith.constant 0.000000e+00 : f32
    %6 = vector.broadcast %cst_5 : f32 to vector<16x640xf32>
    %7 = arith.maximumf %5, %6 : vector<16x640xf32>
    %8 = arith.truncf %7 : vector<16x640xf32> to vector<16x640xbf16>
    %c0_6 = arith.constant 0 : index
    %c0_7 = arith.constant 0 : index
    %9 = vector.load %arg4[%c0_6, %c0_7] : memref<640x512xbf16, #tpu.memory_space<vmem>>, vector<640x512xbf16>
    %cst_8 = arith.constant dense<0.000000e+00> : vector<16x512xf32>
    %10 = tpu.matmul %8, %9, %cst_8 {dimension_numbers = #tpu.dot_dimension_numbers<[1], [0], [0], [1], [0, 0, 1, 1], [], []>} : vector<16x640xbf16>, vector<640x512xbf16>, vector<16x512xf32> -> vector<16x512xf32>
    %c0_9 = arith.constant 0 : index
    %c0_10 = arith.constant 0 : index
    %11 = vector.load %arg5[%c0_9, %c0_10] : memref<1x512xf32, #tpu.memory_space<vmem>>, vector<1x512xf32>
    %12 = vector.broadcast %11 : vector<1x512xf32> to vector<16x512xf32>
    %13 = arith.addf %10, %12 : vector<16x512xf32>
    %cst_11 = arith.constant 0.000000e+00 : f32
    %14 = vector.broadcast %cst_11 : f32 to vector<16x512xf32>
    %15 = arith.maximumf %13, %14 : vector<16x512xf32>
    %16 = arith.truncf %15 : vector<16x512xf32> to vector<16x512xbf16>
    %c0_12 = arith.constant 0 : index
    %c0_13 = arith.constant 0 : index
    %17 = vector.load %arg6[%c0_12, %c0_13] : memref<512x256xbf16, #tpu.memory_space<vmem>>, vector<512x256xbf16>
    %cst_14 = arith.constant dense<0.000000e+00> : vector<16x256xf32>
    %18 = tpu.matmul %16, %17, %cst_14 {dimension_numbers = #tpu.dot_dimension_numbers<[1], [0], [0], [1], [0, 0, 1, 1], [], []>} : vector<16x512xbf16>, vector<512x256xbf16>, vector<16x256xf32> -> vector<16x256xf32>
    %c0_15 = arith.constant 0 : index
    %c0_16 = arith.constant 0 : index
    %19 = vector.load %arg7[%c0_15, %c0_16] : memref<1x256xf32, #tpu.memory_space<vmem>>, vector<1x256xf32>
    %20 = vector.broadcast %19 : vector<1x256xf32> to vector<16x256xf32>
    %21 = arith.addf %18, %20 : vector<16x256xf32>
    %cst_17 = arith.constant 0.000000e+00 : f32
    %22 = vector.broadcast %cst_17 : f32 to vector<16x256xf32>
    %23 = arith.maximumf %21, %22 : vector<16x256xf32>
    %24 = arith.truncf %23 : vector<16x256xf32> to vector<16x256xbf16>
    %c0_18 = arith.constant 0 : index
    %c0_19 = arith.constant 0 : index
    %25 = vector.load %arg8[%c0_18, %c0_19] : memref<256x128xbf16, #tpu.memory_space<vmem>>, vector<256x128xbf16>
    %cst_20 = arith.constant dense<0.000000e+00> : vector<16x128xf32>
    %26 = tpu.matmul %24, %25, %cst_20 {dimension_numbers = #tpu.dot_dimension_numbers<[1], [0], [0], [1], [0, 0, 1, 1], [], []>} : vector<16x256xbf16>, vector<256x128xbf16>, vector<16x128xf32> -> vector<16x128xf32>
    %c0_21 = arith.constant 0 : index
    %c0_22 = arith.constant 0 : index
    %27 = vector.load %arg9[%c0_21, %c0_22] : memref<1x128xf32, #tpu.memory_space<vmem>>, vector<1x128xf32>
    %28 = vector.broadcast %27 : vector<1x128xf32> to vector<16x128xf32>
    %29 = arith.addf %26, %28 : vector<16x128xf32>
    %cst_23 = arith.constant 0.000000e+00 : f32
    %30 = vector.broadcast %cst_23 : f32 to vector<16x128xf32>
    %31 = arith.maximumf %29, %30 : vector<16x128xf32>
    %32 = arith.truncf %31 : vector<16x128xf32> to vector<16x128xbf16>
    %c0_24 = arith.constant 0 : index
    %c0_25 = arith.constant 0 : index
    %33 = vector.load %arg10[%c0_24, %c0_25] : memref<128x128xbf16, #tpu.memory_space<vmem>>, vector<128x128xbf16>
    %cst_26 = arith.constant dense<0.000000e+00> : vector<16x128xf32>
    %34 = tpu.matmul %32, %33, %cst_26 {dimension_numbers = #tpu.dot_dimension_numbers<[1], [0], [0], [1], [0, 0, 1, 1], [], []>} : vector<16x128xbf16>, vector<128x128xbf16>, vector<16x128xf32> -> vector<16x128xf32>
    %c0_27 = arith.constant 0 : index
    %c0_28 = arith.constant 0 : index
    %35 = vector.load %arg11[%c0_27, %c0_28] : memref<1x128xf32, #tpu.memory_space<vmem>>, vector<1x128xf32>
    %36 = vector.broadcast %35 : vector<1x128xf32> to vector<16x128xf32>
    %37 = arith.addf %34, %36 : vector<16x128xf32>
    %c0_29 = arith.constant 0 : index
    %c0_30 = arith.constant 0 : index
    %38 = vector.load %arg12[%c0_29, %c0_30] : memref<16x128xf32, #tpu.memory_space<vmem>>, vector<16x128xf32>
    tpu.vector_store %arg12[%c0_29, %c0_30], %37 {strides = array<i32>} : memref<16x128xf32, #tpu.memory_space<vmem>>, vector<16x128xf32>,
    return
  }
  func.func @transform_0(%arg0: i32) -> (i32, i32) {
    %c0_i32 = arith.constant 0 : i32
    %c0_i32_0 = arith.constant 0 : i32
    return %arg0, %c0_i32 : i32, i32
  }
  func.func @transform_1(%arg0: i32) -> (i32, i32) {
    %c0_i32 = arith.constant 0 : i32
    %c0_i32_0 = arith.constant 0 : i32
    %c0_i32_1 = arith.constant 0 : i32
    return %c0_i32, %c0_i32_0 : i32, i32
  }
  func.func @transform_2(%arg0: i32) -> (i32, i32) {
    %c0_i32 = arith.constant 0 : i32
    %c0_i32_0 = arith.constant 0 : i32
    %c0_i32_1 = arith.constant 0 : i32
    return %c0_i32, %c0_i32_0 : i32, i32
  }
  func.func @transform_3(%arg0: i32) -> (i32, i32) {
    %c0_i32 = arith.constant 0 : i32
    %c0_i32_0 = arith.constant 0 : i32
    %c0_i32_1 = arith.constant 0 : i32
    return %c0_i32, %c0_i32_0 : i32, i32
  }
  func.func @transform_4(%arg0: i32) -> (i32, i32) {
    %c0_i32 = arith.constant 0 : i32
    %c0_i32_0 = arith.constant 0 : i32
    %c0_i32_1 = arith.constant 0 : i32
    return %c0_i32, %c0_i32_0 : i32, i32
  }
  func.func @transform_5(%arg0: i32) -> (i32, i32) {
    %c0_i32 = arith.constant 0 : i32
    %c0_i32_0 = arith.constant 0 : i32
    %c0_i32_1 = arith.constant 0 : i32
    return %c0_i32, %c0_i32_0 : i32, i32
  }
  func.func @transform_6(%arg0: i32) -> (i32, i32) {
    %c0_i32 = arith.constant 0 : i32
    %c0_i32_0 = arith.constant 0 : i32
    %c0_i32_1 = arith.constant 0 : i32
    return %c0_i32, %c0_i32_0 : i32, i32
  }
  func.func @transform_7(%arg0: i32) -> (i32, i32) {
    %c0_i32 = arith.constant 0 : i32
    %c0_i32_0 = arith.constant 0 : i32
    %c0_i32_1 = arith.constant 0 : i32
    return %c0_i32, %c0_i32_0 : i32, i32
  }
  func.func @transform_8(%arg0: i32) -> (i32, i32) {
    %c0_i32 = arith.constant 0 : i32
    %c0_i32_0 = arith.constant 0 : i32
    %c0_i32_1 = arith.constant 0 : i32
    return %c0_i32, %c0_i32_0 : i32, i32
  }
  func.func @transform_9(%arg0: i32) -> (i32, i32) {
    %c0_i32 = arith.constant 0 : i32
    %c0_i32_0 = arith.constant 0 : i32
    %c0_i32_1 = arith.constant 0 : i32
    return %c0_i32, %c0_i32_0 : i32, i32
  }
  func.func @transform_10(%arg0: i32) -> (i32, i32) {
    %c0_i32 = arith.constant 0 : i32
    %c0_i32_0 = arith.constant 0 : i32
    %c0_i32_1 = arith.constant 0 : i32
    return %c0_i32, %c0_i32_0 : i32, i32
  }
  func.func @transform_11(%arg0: i32) -> (i32, i32) {
    %c0_i32 = arith.constant 0 : i32
    %c0_i32_0 = arith.constant 0 : i32
    return %arg0, %c0_i32 : i32, i32
  }
}

</mosaic_0001>

<llo_original>
// kernel: tpu_custom_call.1
$region0: #{tpu_custom_call.1}
  #allocation0 [shape = 'u32[]', space=smem, size = 0x4, offset = 0x4, fixed_abs, tag = 'smem constant byte address 0x4 - core index']
  #allocation1 [shape = 'u32[144,128]{1,0:T(1,128)}', space=vmem, size = 0x12000, scoped, tag = 'internal scratch']
  %s0 = inlined_call_operand.hbm [shape: bf16[16,784], index: 0, kind: input, shape index: {}]
  %s1 = inlined_call_operand.hbm [shape: bf16[784,640], index: 1, kind: input, shape index: {}]
  %s2 = inlined_call_operand.vmem [shape: f32[1,640], index: 2, kind: input, shape index: {}]
  %s3 = inlined_call_operand.hbm [shape: bf16[640,512], index: 3, kind: input, shape index: {}]
  %s4 = inlined_call_operand.vmem [shape: f32[1,512], index: 4, kind: input, shape index: {}]
  %s5 = inlined_call_operand.hbm [shape: bf16[512,256], index: 5, kind: input, shape index: {}]
  %s6 = inlined_call_operand.vmem [shape: f32[1,256], index: 6, kind: input, shape index: {}]
  %s7 = inlined_call_operand.hbm [shape: bf16[256,128], index: 7, kind: input, shape index: {}]
  %s8 = inlined_call_operand.vmem [shape: f32[1,128], index: 8, kind: input, shape index: {}]
  %s9 = inlined_call_operand.hbm [shape: bf16[128,128], index: 9, kind: input, shape index: {}]
  %s10 = inlined_call_operand.vmem [shape: f32[1,128], index: 10, kind: input, shape index: {}]
  %s11 = inlined_call_operand.hbm [shape: f32[16,128], index: 11, kind: output, shape index: {}]
  %s12 = sld [smem:[#allocation0]]
  $region78: #{tpu_custom_call.1} parent=0
    _
  %s14 = ssub.s32 1, %s12
  %s15 = scalar_select 0, %s14, %s12
  $region1: #{tpu_custom_call.1} parent=0
    #allocation2 [shape = 'u8[28672]{0}', space=vmem, size = 0x7000, scoped, tag = 'input window, operand 0, single buffered']
    #allocation3 [shape = 's32[1]{0}', space=sflag, size = 0x4, scoped, tag = 'scoped memory for tpu_custom_call.1']
    #allocation4 [shape = 's32[1]{0}', space=sflag, size = 0x4, scoped, tag = 'scoped memory for tpu_custom_call.1']
    #allocation5 [shape = 'u8[1003520]{0}', space=vmem, size = 0xf5000, scoped, tag = 'input window, operand 1, single buffered']
    #allocation6 [shape = 's32[1]{0}', space=sflag, size = 0x4, scoped, tag = 'scoped memory for tpu_custom_call.1']
    #allocation7 [shape = 'u8[655360]{0}', space=vmem, size = 0xa0000, scoped, tag = 'input window, operand 3, single buffered']
    #allocation8 [shape = 'u8[262144]{0}', space=vmem, size = 0x40000, scoped, tag = 'input window, operand 5, single buffered']
    #allocation9 [shape = 's32[1]{0}', space=sflag, size = 0x4, scoped, tag = 'scoped memory for tpu_custom_call.1']
    #allocation10 [shape = 'u8[65536]{0}', space=vmem, size = 0x10000, scoped, tag = 'input window, operand 7, single buffered']
    #allocation11 [shape = 'u8[32768]{0}', space=vmem, size = 0x8000, scoped, tag = 'input window, operand 9, single buffered']
    #allocation12 [shape = 's32[1]{0}', space=sflag, size = 0x4, scoped, tag = 'scoped memory for tpu_custom_call.1']
    #allocation13 [shape = 'u8[8192]{0}', space=vmem, size = 0x2000, scoped, tag = 'output window, operand 0, single buffered']
    %16 = vsyncpa [#allocation3], 0
    %17 = vsyncpa [#allocation6], 0
    %18 = vsyncpa [#allocation9], 0
    %19 = vsyncpa [#allocation12], 0
    %20 = vsyncpa [#allocation4], 0
    // Predicated region
    $region2: #{tpu_custom_call.1} parent=1 // pred_check
      _
    $region3: #{tpu_custom_call.1} parent=1 // pred_check_branch
      %22 = sbr.rel (0) target = $region5
    $region4: #{tpu_custom_call.1} parent=1 // pred_region
      %s24 = ssub.s32 896, 896
      %25 = vsyncadd [#allocation3], %s24
      %s26 = sshll.u32 [#allocation2], 4
      %s27 = int_to_ptr.vmem [resolvable:$true] %s26
      %32 = dma.hbm_to_vmem [thread:$0]  %s0, 896, %s27, [#allocation3], 448, 448, 28
    $region5: #{tpu_custom_call.1} parent=1 // pred_fallthru
      _
    // Predicated region
    $region6: #{tpu_custom_call.1} parent=1 // pred_check
      _
    $region7: #{tpu_custom_call.1} parent=1 // pred_check_branch
      %34 = sbr.rel (0) target = $region9
    $region8: #{tpu_custom_call.1} parent=1 // pred_region
      %s36 = ssub.s32 31360, 31360
      %37 = vsyncadd [#allocation6], %s36
      %s38 = sshll.u32 [#allocation5], 4
      %s39 = int_to_ptr.vmem [resolvable:$true] %s38
      %44 = dma.hbm_to_vmem [thread:$0]  %s1, 31360, %s39, [#allocation6], 320, 320, 20
    $region9: #{tpu_custom_call.1} parent=1 // pred_fallthru
      _
    // Predicated region
    $region10: #{tpu_custom_call.1} parent=1 // pred_check
      _
    $region11: #{tpu_custom_call.1} parent=1 // pred_check_branch
      %46 = sbr.rel (0) target = $region13
    $region12: #{tpu_custom_call.1} parent=1 // pred_region
      _
    $region13: #{tpu_custom_call.1} parent=1 // pred_fallthru
      _
    // Predicated region
    $region14: #{tpu_custom_call.1} parent=1 // pred_check
      _
    $region15: #{tpu_custom_call.1} parent=1 // pred_check_branch
      %48 = sbr.rel (0) target = $region17
    $region16: #{tpu_custom_call.1} parent=1 // pred_region
      %s50 = ssub.s32 20480, 20480
      %51 = vsyncadd [#allocation6], %s50
      %s52 = sshll.u32 [#allocation7], 4
      %s53 = int_to_ptr.vmem [resolvable:$true] %s52
      %58 = dma.hbm_to_vmem [thread:$0]  %s3, 20480, %s53, [#allocation6], 256, 256, 16
    $region17: #{tpu_custom_call.1} parent=1 // pred_fallthru
      _
    // Predicated region
    $region18: #{tpu_custom_call.1} parent=1 // pred_check
      _
    $region19: #{tpu_custom_call.1} parent=1 // pred_check_branch
      %60 = sbr.rel (0) target = $region21
    $region20: #{tpu_custom_call.1} parent=1 // pred_region
      _
    $region21: #{tpu_custom_call.1} parent=1 // pred_fallthru
      _
    // Predicated region
    $region22: #{tpu_custom_call.1} parent=1 // pred_check
      _
    $region23: #{tpu_custom_call.1} parent=1 // pred_check_branch
      %62 = sbr.rel (0) target = $region25
    $region24: #{tpu_custom_call.1} parent=1 // pred_region
      %s64 = ssub.s32 8192, 8192
      %65 = vsyncadd [#allocation9], %s64
      %s66 = sshll.u32 [#allocation8], 4
      %s67 = int_to_ptr.vmem [resolvable:$true] %s66
      %72 = dma.hbm_to_vmem [thread:$0]  %s5, 8192, %s67, [#allocation9], 128, 128, 8
    $region25: #{tpu_custom_call.1} parent=1 // pred_fallthru
      _
    // Predicated region
    $region26: #{tpu_custom_call.1} parent=1 // pred_check
      _
    $region27: #{tpu_custom_call.1} parent=1 // pred_check_branch
      %74 = sbr.rel (0) target = $region29
    $region28: #{tpu_custom_call.1} parent=1 // pred_region
      _
    $region29: #{tpu_custom_call.1} parent=1 // pred_fallthru
      _
    // Predicated region
    $region30: #{tpu_custom_call.1} parent=1 // pred_check
      _
    $region31: #{tpu_custom_call.1} parent=1 // pred_check_branch
      %76 = sbr.rel (0) target = $region33
    $region32: #{tpu_custom_call.1} parent=1 // pred_region
      %s78 = ssub.s32 2048, 2048
      %79 = vsyncadd [#allocation9], %s78
      %s80 = sshll.u32 [#allocation10], 4
      %s81 = int_to_ptr.vmem [resolvable:$true] %s80
      %86 = dma.hbm_to_vmem [thread:$0]  %s7, 2048, %s81, [#allocation9], 64, 64, 4
    $region33: #{tpu_custom_call.1} parent=1 // pred_fallthru
      _
    // Predicated region
    $region34: #{tpu_custom_call.1} parent=1 // pred_check
      _
    $region35: #{tpu_custom_call.1} parent=1 // pred_check_branch
      %88 = sbr.rel (0) target = $region37
    $region36: #{tpu_custom_call.1} parent=1 // pred_region
      _
    $region37: #{tpu_custom_call.1} parent=1 // pred_fallthru
      _
    // Predicated region
    $region38: #{tpu_custom_call.1} parent=1 // pred_check
      _
    $region39: #{tpu_custom_call.1} parent=1 // pred_check_branch
      %90 = sbr.rel (0) target = $region41
    $region40: #{tpu_custom_call.1} parent=1 // pred_region
      %s92 = ssub.s32 1024, 1024
      %93 = vsyncadd [#allocation12], %s92
      %s94 = sshll.u32 [#allocation11], 4
      %s95 = int_to_ptr.vmem [resolvable:$true] %s94
      %100 = dma.hbm_to_vmem [thread:$0]  %s9, 1024, %s95, [#allocation12], 64, 64, 4
    $region41: #{tpu_custom_call.1} parent=1 // pred_fallthru
      _
    // Predicated region
    $region42: #{tpu_custom_call.1} parent=1 // pred_check
      _
    $region43: #{tpu_custom_call.1} parent=1 // pred_check_branch
      %102 = sbr.rel (0) target = $region45
    $region44: #{tpu_custom_call.1} parent=1 // pred_region
      _
    $region45: #{tpu_custom_call.1} parent=1 // pred_fallthru
      _
    // Predicated region
    $region46: #{tpu_custom_call.1} parent=1 // pred_check
      _
    $region47: #{tpu_custom_call.1} parent=1 // pred_check_branch
      %104 = sbr.rel (0) target = $region49
    $region48: #{tpu_custom_call.1} parent=1 // pred_region
      %105 = dma.done [#allocation3], 896
    $region49: #{tpu_custom_call.1} parent=1 // pred_fallthru
      _
    // Predicated region
    $region50: #{tpu_custom_call.1} parent=1 // pred_check
      _
    $region51: #{tpu_custom_call.1} parent=1 // pred_check_branch
      %107 = sbr.rel (0) target = $region53
    $region52: #{tpu_custom_call.1} parent=1 // pred_region
      %108 = dma.done [#allocation6], 31360
    $region53: #{tpu_custom_call.1} parent=1 // pred_fallthru
      _
    // Predicated region
    $region54: #{tpu_custom_call.1} parent=1 // pred_check
      _
    $region55: #{tpu_custom_call.1} parent=1 // pred_check_branch
      %110 = sbr.rel (0) target = $region57
    $region56: #{tpu_custom_call.1} parent=1 // pred_region
      %111 = dma.done [#allocation6], 20480
    $region57: #{tpu_custom_call.1} parent=1 // pred_fallthru
      _
    // Predicated region
    $region58: #{tpu_custom_call.1} parent=1 // pred_check
      _
    $region59: #{tpu_custom_call.1} parent=1 // pred_check_branch
      %113 = sbr.rel (0) target = $region61
    $region60: #{tpu_custom_call.1} parent=1 // pred_region
      %114 = dma.done [#allocation9], 8192
    $region61: #{tpu_custom_call.1} parent=1 // pred_fallthru
      _
    // Predicated region
    $region62: #{tpu_custom_call.1} parent=1 // pred_check
      _
    $region63: #{tpu_custom_call.1} parent=1 // pred_check_branch
      %116 = sbr.rel (0) target = $region65
    $region64: #{tpu_custom_call.1} parent=1 // pred_region
      %117 = dma.done [#allocation9], 2048
    $region65: #{tpu_custom_call.1} parent=1 // pred_fallthru
      _
    // Predicated region
    $region66: #{tpu_custom_call.1} parent=1 // pred_check
      _
    $region67: #{tpu_custom_call.1} parent=1 // pred_check_branch
      %119 = sbr.rel (0) target = $region69
    $region68: #{tpu_custom_call.1} parent=1 // pred_region
      %120 = dma.done [#allocation12], 1024
    $region69: #{tpu_custom_call.1} parent=1 // pred_fallthru
      _
    %v122 = vld [vmem:[#allocation2] sm:$0xff]
    %v123 = vld [vmem:[#allocation2 + $0x8] sm:$0xff]
    %v124 = vld [vmem:[#allocation2 + $0x10] sm:$0xff]
    %v125 = vld [vmem:[#allocation2 + $0x18] sm:$0xf]
    %v126 = vld [vmem:[#allocation2 + $0x1c] sm:$0xff]
    %v127 = vld [vmem:[#allocation2 + $0x24] sm:$0xff]
    %v128 = vld [vmem:[#allocation2 + $0x2c] sm:$0xff]
    %v129 = vld [vmem:[#allocation2 + $0x34] sm:$0xf]
    %v130 = vld [vmem:[#allocation5] sm:$0xff]
    %v131 = vld [vmem:[#allocation5 + $0x8] sm:$0xff]
    %v132 = vld [vmem:[#allocation5 + $0x10] sm:$0xf]
    %v133 = vld [vmem:[#allocation5 + $0x14] sm:$0xff]
    %v134 = vld [vmem:[#allocation5 + $0x1c] sm:$0xff]
    %v135 = vld [vmem:[#allocation5 + $0x24] sm:$0xf]
    %v136 = vld [vmem:[#allocation5 + $0x28] sm:$0xff]
    %v137 = vld [vmem:[#allocation5 + $0x30] sm:$0xff]
    %v138 = vld [vmem:[#allocation5 + $0x38] sm:$0xf]
    %v139 = vld [vmem:[#allocation5 + $0x3c] sm:$0xff]
    %v140 = vld [vmem:[#allocation5 + $0x44] sm:$0xff]
    %v141 = vld [vmem:[#allocation5 + $0x4c] sm:$0xf]
    %v142 = vld [vmem:[#allocation5 + $0x50] sm:$0xff]
    %v143 = vld [vmem:[#allocation5 + $0x58] sm:$0xff]
    %v144 = vld [vmem:[#allocation5 + $0x60] sm:$0xf]
    %v145 = vld [vmem:[#allocation5 + $0x64] sm:$0xff]
    %v146 = vld [vmem:[#allocation5 + $0x6c] sm:$0xff]
    %v147 = vld [vmem:[#allocation5 + $0x74] sm:$0xf]
    %v148 = vld [vmem:[#allocation5 + $0x78] sm:$0xff]
    %v149 = vld [vmem:[#allocation5 + $0x80] sm:$0xff]
    %v150 = vld [vmem:[#allocation5 + $0x88] sm:$0xf]
    %v151 = vld [vmem:[#allocation5 + $0x8c] sm:$0xff]
    %v152 = vld [vmem:[#allocation5 + $0x94] sm:$0xff]
    %v153 = vld [vmem:[#allocation5 + $0x9c] sm:$0xf]
    %v154 = vld [vmem:[#allocation5 + $0xa0] sm:$0xff]
    %v155 = vld [vmem:[#allocation5 + $0xa8] sm:$0xff]
    %v156 = vld [vmem:[#allocation5 + $0xb0] sm:$0xf]
    %v157 = vld [vmem:[#allocation5 + $0xb4] sm:$0xff]
    %v158 = vld [vmem:[#allocation5 + $0xbc] sm:$0xff]
    %v159 = vld [vmem:[#allocation5 + $0xc4] sm:$0xf]
    %v160 = vld [vmem:[#allocation5 + $0xc8] sm:$0xff]
    %v161 = vld [vmem:[#allocation5 + $0xd0] sm:$0xff]
    %v162 = vld [vmem:[#allocation5 + $0xd8] sm:$0xf]
    %v163 = vld [vmem:[#allocation5 + $0xdc] sm:$0xff]
    %v164 = vld [vmem:[#allocation5 + $0xe4] sm:$0xff]
    %v165 = vld [vmem:[#allocation5 + $0xec] sm:$0xf]
    %v166 = vld [vmem:[#allocation5 + $0xf0] sm:$0xff]
    %v167 = vld [vmem:[#allocation5 + $0xf8] sm:$0xff]
    %v168 = vld [vmem:[#allocation5 + $0x100] sm:$0xf]
    %v169 = vld [vmem:[#allocation5 + $0x104] sm:$0xff]
    %v170 = vld [vmem:[#allocation5 + $0x10c] sm:$0xff]
    %v171 = vld [vmem:[#allocation5 + $0x114] sm:$0xf]
    %v172 = vld [vmem:[#allocation5 + $0x118] sm:$0xff]
    %v173 = vld [vmem:[#allocation5 + $0x120] sm:$0xff]
    %v174 = vld [vmem:[#allocation5 + $0x128] sm:$0xf]
    %v175 = vld [vmem:[#allocation5 + $0x12c] sm:$0xff]
    %v176 = vld [vmem:[#allocation5 + $0x134] sm:$0xff]
    %v177 = vld [vmem:[#allocation5 + $0x13c] sm:$0xf]
    %v178 = vld [vmem:[#allocation5 + $0x140] sm:$0xff]
    %v179 = vld [vmem:[#allocation5 + $0x148] sm:$0xff]
    %v180 = vld [vmem:[#allocation5 + $0x150] sm:$0xf]
    %v181 = vld [vmem:[#allocation5 + $0x154] sm:$0xff]
    %v182 = vld [vmem:[#allocation5 + $0x15c] sm:$0xff]
    %v183 = vld [vmem:[#allocation5 + $0x164] sm:$0xf]
    %v184 = vld [vmem:[#allocation5 + $0x168] sm:$0xff]
    %v185 = vld [vmem:[#allocation5 + $0x170] sm:$0xff]
    %v186 = vld [vmem:[#allocation5 + $0x178] sm:$0xf]
    %v187 = vld [vmem:[#allocation5 + $0x17c] sm:$0xff]
    %v188 = vld [vmem:[#allocation5 + $0x184] sm:$0xff]
    %v189 = vld [vmem:[#allocation5 + $0x18c] sm:$0xf]
    %v190 = vld [vmem:[#allocation5 + $0x190] sm:$0xff]
    %v191 = vld [vmem:[#allocation5 + $0x198] sm:$0xff]
    %v192 = vld [vmem:[#allocation5 + $0x1a0] sm:$0xf]
    %v193 = vld [vmem:[#allocation5 + $0x1a4] sm:$0xff]
    %v194 = vld [vmem:[#allocation5 + $0x1ac] sm:$0xff]
    %v195 = vld [vmem:[#allocation5 + $0x1b4] sm:$0xf]
    %v196 = vld [vmem:[#allocation5 + $0x1b8] sm:$0xff]
    %v197 = vld [vmem:[#allocation5 + $0x1c0] sm:$0xff]
    %v198 = vld [vmem:[#allocation5 + $0x1c8] sm:$0xf]
    %v199 = vld [vmem:[#allocation5 + $0x1cc] sm:$0xff]
    %v200 = vld [vmem:[#allocation5 + $0x1d4] sm:$0xff]
    %v201 = vld [vmem:[#allocation5 + $0x1dc] sm:$0xf]
    %v202 = vld [vmem:[#allocation5 + $0x1e0] sm:$0xff]
    %v203 = vld [vmem:[#allocation5 + $0x1e8] sm:$0xff]
    %v204 = vld [vmem:[#allocation5 + $0x1f0] sm:$0xf]
    %v205 = vld [vmem:[#allocation5 + $0x1f4] sm:$0xff]
    %v206 = vld [vmem:[#allocation5 + $0x1fc] sm:$0xff]
    %v207 = vld [vmem:[#allocation5 + $0x204] sm:$0xf]
    %v208 = vld [vmem:[#allocation5 + $0x208] sm:$0xff]
    %v209 = vld [vmem:[#allocation5 + $0x210] sm:$0xff]
    %v210 = vld [vmem:[#allocation5 + $0x218] sm:$0xf]
    %v211 = vld [vmem:[#allocation5 + $0x21c] sm:$0xff]
    %v212 = vld [vmem:[#allocation5 + $0x224] sm:$0xff]
    %v213 = vld [vmem:[#allocation5 + $0x22c] sm:$0xf]
    %v214 = vld [vmem:[#allocation5 + $0x230] sm:$0xff]
    %v215 = vld [vmem:[#allocation5 + $0x238] sm:$0xff]
    %v216 = vld [vmem:[#allocation5 + $0x240] sm:$0xf]
    %v217 = vld [vmem:[#allocation5 + $0x244] sm:$0xff]
    %v218 = vld [vmem:[#allocation5 + $0x24c] sm:$0xff]
    %v219 = vld [vmem:[#allocation5 + $0x254] sm:$0xf]
    %v220 = vld [vmem:[#allocation5 + $0x258] sm:$0xff]
    %v221 = vld [vmem:[#allocation5 + $0x260] sm:$0xff]
    %v222 = vld [vmem:[#allocation5 + $0x268] sm:$0xf]
    %v223 = vld [vmem:[#allocation5 + $0x26c] sm:$0xff]
    %v224 = vld [vmem:[#allocation5 + $0x274] sm:$0xff]
    %v225 = vld [vmem:[#allocation5 + $0x27c] sm:$0xf]
    %v226 = vld [vmem:[#allocation5 + $0x280] sm:$0xff]
    %v227 = vld [vmem:[#allocation5 + $0x288] sm:$0xff]
    %v228 = vld [vmem:[#allocation5 + $0x290] sm:$0xf]
    %v229 = vld [vmem:[#allocation5 + $0x294] sm:$0xff]
    %v230 = vld [vmem:[#allocation5 + $0x29c] sm:$0xff]
    %v231 = vld [vmem:[#allocation5 + $0x2a4] sm:$0xf]
    %v232 = vld [vmem:[#allocation5 + $0x2a8] sm:$0xff]
    %v233 = vld [vmem:[#allocation5 + $0x2b0] sm:$0xff]
    %v234 = vld [vmem:[#allocation5 + $0x2b8] sm:$0xf]
    %v235 = vld [vmem:[#allocation5 + $0x2bc] sm:$0xff]
    %v236 = vld [vmem:[#allocation5 + $0x2c4] sm:$0xff]
    %v237 = vld [vmem:[#allocation5 + $0x2cc] sm:$0xf]
    %v238 = vld [vmem:[#allocation5 + $0x2d0] sm:$0xff]
    %v239 = vld [vmem:[#allocation5 + $0x2d8] sm:$0xff]
    %v240 = vld [vmem:[#allocation5 + $0x2e0] sm:$0xf]
    %v241 = vld [vmem:[#allocation5 + $0x2e4] sm:$0xff]
    %v242 = vld [vmem:[#allocation5 + $0x2ec] sm:$0xff]
    %v243 = vld [vmem:[#allocation5 + $0x2f4] sm:$0xf]
    %v244 = vld [vmem:[#allocation5 + $0x2f8] sm:$0xff]
    %v245 = vld [vmem:[#allocation5 + $0x300] sm:$0xff]
    %v246 = vld [vmem:[#allocation5 + $0x308] sm:$0xf]
    %v247 = vld [vmem:[#allocation5 + $0x30c] sm:$0xff]
    %v248 = vld [vmem:[#allocation5 + $0x314] sm:$0xff]
    %v249 = vld [vmem:[#allocation5 + $0x31c] sm:$0xf]
    %v250 = vld [vmem:[#allocation5 + $0x320] sm:$0xff]
    %v251 = vld [vmem:[#allocation5 + $0x328] sm:$0xff]
    %v252 = vld [vmem:[#allocation5 + $0x330] sm:$0xf]
    %v253 = vld [vmem:[#allocation5 + $0x334] sm:$0xff]
    %v254 = vld [vmem:[#allocation5 + $0x33c] sm:$0xff]
    %v255 = vld [vmem:[#allocation5 + $0x344] sm:$0xf]
    %v256 = vld [vmem:[#allocation5 + $0x348] sm:$0xff]
    %v257 = vld [vmem:[#allocation5 + $0x350] sm:$0xff]
    %v258 = vld [vmem:[#allocation5 + $0x358] sm:$0xf]
    %v259 = vld [vmem:[#allocation5 + $0x35c] sm:$0xff]
    %v260 = vld [vmem:[#allocation5 + $0x364] sm:$0xff]
    %v261 = vld [vmem:[#allocation5 + $0x36c] sm:$0xf]
    %v262 = vld [vmem:[#allocation5 + $0x370] sm:$0xff]
    %v263 = vld [vmem:[#allocation5 + $0x378] sm:$0xff]
    %v264 = vld [vmem:[#allocation5 + $0x380] sm:$0xf]
    %v265 = vld [vmem:[#allocation5 + $0x384] sm:$0xff]
    %v266 = vld [vmem:[#allocation5 + $0x38c] sm:$0xff]
    %v267 = vld [vmem:[#allocation5 + $0x394] sm:$0xf]
    %v268 = vld [vmem:[#allocation5 + $0x398] sm:$0xff]
    %v269 = vld [vmem:[#allocation5 + $0x3a0] sm:$0xff]
    %v270 = vld [vmem:[#allocation5 + $0x3a8] sm:$0xf]
    %v271 = vld [vmem:[#allocation5 + $0x3ac] sm:$0xff]
    %v272 = vld [vmem:[#allocation5 + $0x3b4] sm:$0xff]
    %v273 = vld [vmem:[#allocation5 + $0x3bc] sm:$0xf]
    %v274 = vld [vmem:[#allocation5 + $0x3c0] sm:$0xff]
    %v275 = vld [vmem:[#allocation5 + $0x3c8] sm:$0xff]
    %v276 = vld [vmem:[#allocation5 + $0x3d0] sm:$0xf]
    %v277 = vld [vmem:[#allocation5 + $0x3d4] sm:$0xff]
    %v278 = vld [vmem:[#allocation5 + $0x3dc] sm:$0xff]
    %v279 = vld [vmem:[#allocation5 + $0x3e4] sm:$0xf]
    %v280 = vld [vmem:[#allocation5 + $0x3e8] sm:$0xff]
    %v281 = vld [vmem:[#allocation5 + $0x3f0] sm:$0xff]
    %v282 = vld [vmem:[#allocation5 + $0x3f8] sm:$0xf]
    %v283 = vld [vmem:[#allocation5 + $0x3fc] sm:$0xff]
    %v284 = vld [vmem:[#allocation5 + $0x404] sm:$0xff]
    %v285 = vld [vmem:[#allocation5 + $0x40c] sm:$0xf]
    %v286 = vld [vmem:[#allocation5 + $0x410] sm:$0xff]
    %v287 = vld [vmem:[#allocation5 + $0x418] sm:$0xff]
    %v288 = vld [vmem:[#allocation5 + $0x420] sm:$0xf]
    %v289 = vld [vmem:[#allocation5 + $0x424] sm:$0xff]
    %v290 = vld [vmem:[#allocation5 + $0x42c] sm:$0xff]
    %v291 = vld [vmem:[#allocation5 + $0x434] sm:$0xf]
    %v292 = vld [vmem:[#allocation5 + $0x438] sm:$0xff]
    %v293 = vld [vmem:[#allocation5 + $0x440] sm:$0xff]
    %v294 = vld [vmem:[#allocation5 + $0x448] sm:$0xf]
    %v295 = vld [vmem:[#allocation5 + $0x44c] sm:$0xff]
    %v296 = vld [vmem:[#allocation5 + $0x454] sm:$0xff]
    %v297 = vld [vmem:[#allocation5 + $0x45c] sm:$0xf]
    %v298 = vld [vmem:[#allocation5 + $0x460] sm:$0xff]
    %v299 = vld [vmem:[#allocation5 + $0x468] sm:$0xff]
    %v300 = vld [vmem:[#allocation5 + $0x470] sm:$0xf]
    %v301 = vld [vmem:[#allocation5 + $0x474] sm:$0xff]
    %v302 = vld [vmem:[#allocation5 + $0x47c] sm:$0xff]
    %v303 = vld [vmem:[#allocation5 + $0x484] sm:$0xf]
    %v304 = vld [vmem:[#allocation5 + $0x488] sm:$0xff]
    %v305 = vld [vmem:[#allocation5 + $0x490] sm:$0xff]
    %v306 = vld [vmem:[#allocation5 + $0x498] sm:$0xf]
    %v307 = vld [vmem:[#allocation5 + $0x49c] sm:$0xff]
    %v308 = vld [vmem:[#allocation5 + $0x4a4] sm:$0xff]
    %v309 = vld [vmem:[#allocation5 + $0x4ac] sm:$0xf]
    %v310 = vld [vmem:[#allocation5 + $0x4b0] sm:$0xff]
    %v311 = vld [vmem:[#allocation5 + $0x4b8] sm:$0xff]
    %v312 = vld [vmem:[#allocation5 + $0x4c0] sm:$0xf]
    %v313 = vld [vmem:[#allocation5 + $0x4c4] sm:$0xff]
    %v314 = vld [vmem:[#allocation5 + $0x4cc] sm:$0xff]
    %v315 = vld [vmem:[#allocation5 + $0x4d4] sm:$0xf]
    %v316 = vld [vmem:[#allocation5 + $0x4d8] sm:$0xff]
    %v317 = vld [vmem:[#allocation5 + $0x4e0] sm:$0xff]
    %v318 = vld [vmem:[#allocation5 + $0x4e8] sm:$0xf]
    %v319 = vld [vmem:[#allocation5 + $0x4ec] sm:$0xff]
    %v320 = vld [vmem:[#allocation5 + $0x4f4] sm:$0xff]
    %v321 = vld [vmem:[#allocation5 + $0x4fc] sm:$0xf]
    %v322 = vld [vmem:[#allocation5 + $0x500] sm:$0xff]
    %v323 = vld [vmem:[#allocation5 + $0x508] sm:$0xff]
    %v324 = vld [vmem:[#allocation5 + $0x510] sm:$0xf]
    %v325 = vld [vmem:[#allocation5 + $0x514] sm:$0xff]
    %v326 = vld [vmem:[#allocation5 + $0x51c] sm:$0xff]
    %v327 = vld [vmem:[#allocation5 + $0x524] sm:$0xf]
    %v328 = vld [vmem:[#allocation5 + $0x528] sm:$0xff]
    %v329 = vld [vmem:[#allocation5 + $0x530] sm:$0xff]
    %v330 = vld [vmem:[#allocation5 + $0x538] sm:$0xf]
    %v331 = vld [vmem:[#allocation5 + $0x53c] sm:$0xff]
    %v332 = vld [vmem:[#allocation5 + $0x544] sm:$0xff]
    %v333 = vld [vmem:[#allocation5 + $0x54c] sm:$0xf]
    %v334 = vld [vmem:[#allocation5 + $0x550] sm:$0xff]
    %v335 = vld [vmem:[#allocation5 + $0x558] sm:$0xff]
    %v336 = vld [vmem:[#allocation5 + $0x560] sm:$0xf]
    %v337 = vld [vmem:[#allocation5 + $0x564] sm:$0xff]
    %v338 = vld [vmem:[#allocation5 + $0x56c] sm:$0xff]
    %v339 = vld [vmem:[#allocation5 + $0x574] sm:$0xf]
    %v340 = vld [vmem:[#allocation5 + $0x578] sm:$0xff]
    %v341 = vld [vmem:[#allocation5 + $0x580] sm:$0xff]
    %v342 = vld [vmem:[#allocation5 + $0x588] sm:$0xf]
    %v343 = vld [vmem:[#allocation5 + $0x58c] sm:$0xff]
    %v344 = vld [vmem:[#allocation5 + $0x594] sm:$0xff]
    %v345 = vld [vmem:[#allocation5 + $0x59c] sm:$0xf]
    %v346 = vld [vmem:[#allocation5 + $0x5a0] sm:$0xff]
    %v347 = vld [vmem:[#allocation5 + $0x5a8] sm:$0xff]
    %v348 = vld [vmem:[#allocation5 + $0x5b0] sm:$0xf]
    %v349 = vld [vmem:[#allocation5 + $0x5b4] sm:$0xff]
    %v350 = vld [vmem:[#allocation5 + $0x5bc] sm:$0xff]
    %v351 = vld [vmem:[#allocation5 + $0x5c4] sm:$0xf]
    %v352 = vld [vmem:[#allocation5 + $0x5c8] sm:$0xff]
    %v353 = vld [vmem:[#allocation5 + $0x5d0] sm:$0xff]
    %v354 = vld [vmem:[#allocation5 + $0x5d8] sm:$0xf]
    %v355 = vld [vmem:[#allocation5 + $0x5dc] sm:$0xff]
    %v356 = vld [vmem:[#allocation5 + $0x5e4] sm:$0xff]
    %v357 = vld [vmem:[#allocation5 + $0x5ec] sm:$0xf]
    %v358 = vld [vmem:[#allocation5 + $0x5f0] sm:$0xff]
    %v359 = vld [vmem:[#allocation5 + $0x5f8] sm:$0xff]
    %v360 = vld [vmem:[#allocation5 + $0x600] sm:$0xf]
    %v361 = vld [vmem:[#allocation5 + $0x604] sm:$0xff]
    %v362 = vld [vmem:[#allocation5 + $0x60c] sm:$0xff]
    %v363 = vld [vmem:[#allocation5 + $0x614] sm:$0xf]
    %v364 = vld [vmem:[#allocation5 + $0x618] sm:$0xff]
    %v365 = vld [vmem:[#allocation5 + $0x620] sm:$0xff]
    %v366 = vld [vmem:[#allocation5 + $0x628] sm:$0xf]
    %v367 = vld [vmem:[#allocation5 + $0x62c] sm:$0xff]
    %v368 = vld [vmem:[#allocation5 + $0x634] sm:$0xff]
    %v369 = vld [vmem:[#allocation5 + $0x63c] sm:$0xf]
    %v370 = vld [vmem:[#allocation5 + $0x640] sm:$0xff]
    %v371 = vld [vmem:[#allocation5 + $0x648] sm:$0xff]
    %v372 = vld [vmem:[#allocation5 + $0x650] sm:$0xf]
    %v373 = vld [vmem:[#allocation5 + $0x654] sm:$0xff]
    %v374 = vld [vmem:[#allocation5 + $0x65c] sm:$0xff]
    %v375 = vld [vmem:[#allocation5 + $0x664] sm:$0xf]
    %v376 = vld [vmem:[#allocation5 + $0x668] sm:$0xff]
    %v377 = vld [vmem:[#allocation5 + $0x670] sm:$0xff]
    %v378 = vld [vmem:[#allocation5 + $0x678] sm:$0xf]
    %v379 = vld [vmem:[#allocation5 + $0x67c] sm:$0xff]
    %v380 = vld [vmem:[#allocation5 + $0x684] sm:$0xff]
    %v381 = vld [vmem:[#allocation5 + $0x68c] sm:$0xf]
    %v382 = vld [vmem:[#allocation5 + $0x690] sm:$0xff]
    %v383 = vld [vmem:[#allocation5 + $0x698] sm:$0xff]
    %v384 = vld [vmem:[#allocation5 + $0x6a0] sm:$0xf]
    %v385 = vld [vmem:[#allocation5 + $0x6a4] sm:$0xff]
    %v386 = vld [vmem:[#allocation5 + $0x6ac] sm:$0xff]
    %v387 = vld [vmem:[#allocation5 + $0x6b4] sm:$0xf]
    %v388 = vld [vmem:[#allocation5 + $0x6b8] sm:$0xff]
    %v389 = vld [vmem:[#allocation5 + $0x6c0] sm:$0xff]
    %v390 = vld [vmem:[#allocation5 + $0x6c8] sm:$0xf]
    %v391 = vld [vmem:[#allocation5 + $0x6cc] sm:$0xff]
    %v392 = vld [vmem:[#allocation5 + $0x6d4] sm:$0xff]
    %v393 = vld [vmem:[#allocation5 + $0x6dc] sm:$0xf]
    %v394 = vld [vmem:[#allocation5 + $0x6e0] sm:$0xff]
    %v395 = vld [vmem:[#allocation5 + $0x6e8] sm:$0xff]
    %v396 = vld [vmem:[#allocation5 + $0x6f0] sm:$0xf]
    %v397 = vld [vmem:[#allocation5 + $0x6f4] sm:$0xff]
    %v398 = vld [vmem:[#allocation5 + $0x6fc] sm:$0xff]
    %v399 = vld [vmem:[#allocation5 + $0x704] sm:$0xf]
    %v400 = vld [vmem:[#allocation5 + $0x708] sm:$0xff]
    %v401 = vld [vmem:[#allocation5 + $0x710] sm:$0xff]
    %v402 = vld [vmem:[#allocation5 + $0x718] sm:$0xf]
    %v403 = vld [vmem:[#allocation5 + $0x71c] sm:$0xff]
    %v404 = vld [vmem:[#allocation5 + $0x724] sm:$0xff]
    %v405 = vld [vmem:[#allocation5 + $0x72c] sm:$0xf]
    %v406 = vld [vmem:[#allocation5 + $0x730] sm:$0xff]
    %v407 = vld [vmem:[#allocation5 + $0x738] sm:$0xff]
    %v408 = vld [vmem:[#allocation5 + $0x740] sm:$0xf]
    %v409 = vld [vmem:[#allocation5 + $0x744] sm:$0xff]
    %v410 = vld [vmem:[#allocation5 + $0x74c] sm:$0xff]
    %v411 = vld [vmem:[#allocation5 + $0x754] sm:$0xf]
    %v412 = vld [vmem:[#allocation5 + $0x758] sm:$0xff]
    %v413 = vld [vmem:[#allocation5 + $0x760] sm:$0xff]
    %v414 = vld [vmem:[#allocation5 + $0x768] sm:$0xf]
    %v415 = vld [vmem:[#allocation5 + $0x76c] sm:$0xff]
    %v416 = vld [vmem:[#allocation5 + $0x774] sm:$0xff]
    %v417 = vld [vmem:[#allocation5 + $0x77c] sm:$0xf]
    %v418 = vld [vmem:[#allocation5 + $0x780] sm:$0xff]
    %v419 = vld [vmem:[#allocation5 + $0x788] sm:$0xff]
    %v420 = vld [vmem:[#allocation5 + $0x790] sm:$0xf]
    %v421 = vld [vmem:[#allocation5 + $0x794] sm:$0xff]
    %v422 = vld [vmem:[#allocation5 + $0x79c] sm:$0xff]
    %v423 = vld [vmem:[#allocation5 + $0x7a4] sm:$0xf]
    %v424 = vld [vmem:[%s2] sm:$0x1f]
    %v426 = vlaneseq
    %v427 = vshrl.u32 %v426, 7
    %v428 = vsub.s32 0, %v427
    %v429 = vrot.slane %v424, %v428
    %v430 = vlaneseq
    %v431 = vshrl.u32 %v430, 7
    %v432 = vsub.s32 1, %v431
    %v433 = vrot.slane %v424, %v432
    %v434 = vlaneseq
    %v435 = vshrl.u32 %v434, 7
    %v436 = vsub.s32 2, %v435
    %v437 = vrot.slane %v424, %v436
    %v438 = vlaneseq
    %v439 = vshrl.u32 %v438, 7
    %v440 = vsub.s32 3, %v439
    %v441 = vrot.slane %v424, %v440
    %v442 = vlaneseq
    %v443 = vshrl.u32 %v442, 7
    %v444 = vsub.s32 4, %v443
    %v445 = vrot.slane %v424, %v444
    %v459 = vunpack.c.l.b16 %v122
    %v460 = vunpack.c.h.b16 %v122
    %v461 = vunpack.c.l.b16 %v123
    %v462 = vunpack.c.h.b16 %v123
    %v463 = vunpack.c.l.b16 %v124
    %v464 = vunpack.c.h.b16 %v124
    %v465 = vunpack.c.l.b16 %v125
    %v466 = vunpack.c.l.b16 %v126
    %v467 = vunpack.c.h.b16 %v126
    %v468 = vunpack.c.l.b16 %v127
    %v469 = vunpack.c.h.b16 %v127
    %v470 = vunpack.c.l.b16 %v128
    %v471 = vunpack.c.h.b16 %v128
    %v472 = vunpack.c.l.b16 %v129
    %v473 = vpack.c.b16 %v466, %v459
    %v474 = vpack.c.b16 %v467, %v460
    %v475 = vpack.c.b16 %v468, %v461
    %v476 = vpack.c.b16 %v469, %v462
    %v477 = vpack.c.b16 %v470, %v463
    %v478 = vpack.c.b16 %v471, %v464
    %v479 = vpack.c.b16 %v472, %v465
    %v780 = vunpack.c.l.b16 %v130
    %v781 = vunpack.c.h.b16 %v130
    %v782 = vunpack.c.l.b16 %v131
    %v783 = vunpack.c.h.b16 %v131
    %v784 = vunpack.c.l.b16 %v132
    %v785 = vunpack.c.l.b16 %v133
    %v786 = vunpack.c.h.b16 %v133
    %v787 = vunpack.c.l.b16 %v134
    %v788 = vunpack.c.h.b16 %v134
    %v789 = vunpack.c.l.b16 %v135
    %v790 = vunpack.c.l.b16 %v136
    %v791 = vunpack.c.h.b16 %v136
    %v792 = vunpack.c.l.b16 %v137
    %v793 = vunpack.c.h.b16 %v137
    %v794 = vunpack.c.l.b16 %v138
    %v795 = vunpack.c.l.b16 %v139
    %v796 = vunpack.c.h.b16 %v139
    %v797 = vunpack.c.l.b16 %v140
    %v798 = vunpack.c.h.b16 %v140
    %v799 = vunpack.c.l.b16 %v141
    %v800 = vunpack.c.l.b16 %v142
    %v801 = vunpack.c.h.b16 %v142
    %v802 = vunpack.c.l.b16 %v143
    %v803 = vunpack.c.h.b16 %v143
    %v804 = vunpack.c.l.b16 %v144
    %v805 = vunpack.c.l.b16 %v145
    %v806 = vunpack.c.h.b16 %v145
    %v807 = vunpack.c.l.b16 %v146
    %v808 = vunpack.c.h.b16 %v146
    %v809 = vunpack.c.l.b16 %v147
    %v810 = vunpack.c.l.b16 %v148
    %v811 = vunpack.c.h.b16 %v148
    %v812 = vunpack.c.l.b16 %v149
    %v813 = vunpack.c.h.b16 %v149
    %v814 = vunpack.c.l.b16 %v150
    %v815 = vunpack.c.l.b16 %v151
    %v816 = vunpack.c.h.b16 %v151
    %v817 = vunpack.c.l.b16 %v152
    %v818 = vunpack.c.h.b16 %v152
    %v819 = vunpack.c.l.b16 %v153
    %v820 = vunpack.c.l.b16 %v154
    %v821 = vunpack.c.h.b16 %v154
    %v822 = vunpack.c.l.b16 %v155
    %v823 = vunpack.c.h.b16 %v155
    %v824 = vunpack.c.l.b16 %v156
    %v825 = vunpack.c.l.b16 %v157
    %v826 = vunpack.c.h.b16 %v157
    %v827 = vunpack.c.l.b16 %v158
    %v828 = vunpack.c.h.b16 %v158
    %v829 = vunpack.c.l.b16 %v159
    %v830 = vunpack.c.l.b16 %v160
    %v831 = vunpack.c.h.b16 %v160
    %v832 = vunpack.c.l.b16 %v161
    %v833 = vunpack.c.h.b16 %v161
    %v834 = vunpack.c.l.b16 %v162
    %v835 = vunpack.c.l.b16 %v163
    %v836 = vunpack.c.h.b16 %v163
    %v837 = vunpack.c.l.b16 %v164
    %v838 = vunpack.c.h.b16 %v164
    %v839 = vunpack.c.l.b16 %v165
    %v840 = vunpack.c.l.b16 %v166
    %v841 = vunpack.c.h.b16 %v166
    %v842 = vunpack.c.l.b16 %v167
    %v843 = vunpack.c.h.b16 %v167
    %v844 = vunpack.c.l.b16 %v168
    %v845 = vunpack.c.l.b16 %v169
    %v846 = vunpack.c.h.b16 %v169
    %v847 = vunpack.c.l.b16 %v170
    %v848 = vunpack.c.h.b16 %v170
    %v849 = vunpack.c.l.b16 %v171
    %v850 = vunpack.c.l.b16 %v172
    %v851 = vunpack.c.h.b16 %v172
    %v852 = vunpack.c.l.b16 %v173
    %v853 = vunpack.c.h.b16 %v173
    %v854 = vunpack.c.l.b16 %v174
    %v855 = vunpack.c.l.b16 %v175
    %v856 = vunpack.c.h.b16 %v175
    %v857 = vunpack.c.l.b16 %v176
    %v858 = vunpack.c.h.b16 %v176
    %v859 = vunpack.c.l.b16 %v177
    %v860 = vunpack.c.l.b16 %v178
    %v861 = vunpack.c.h.b16 %v178
    %v862 = vunpack.c.l.b16 %v179
    %v863 = vunpack.c.h.b16 %v179
    %v864 = vunpack.c.l.b16 %v180
    %v865 = vunpack.c.l.b16 %v181
    %v866 = vunpack.c.h.b16 %v181
    %v867 = vunpack.c.l.b16 %v182
    %v868 = vunpack.c.h.b16 %v182
    %v869 = vunpack.c.l.b16 %v183
    %v870 = vunpack.c.l.b16 %v184
    %v871 = vunpack.c.h.b16 %v184
    %v872 = vunpack.c.l.b16 %v185
    %v873 = vunpack.c.h.b16 %v185
    %v874 = vunpack.c.l.b16 %v186
    %v875 = vunpack.c.l.b16 %v187
    %v876 = vunpack.c.h.b16 %v187
    %v877 = vunpack.c.l.b16 %v188
    %v878 = vunpack.c.h.b16 %v188
    %v879 = vunpack.c.l.b16 %v189
    %v880 = vunpack.c.l.b16 %v190
    %v881 = vunpack.c.h.b16 %v190
    %v882 = vunpack.c.l.b16 %v191
    %v883 = vunpack.c.h.b16 %v191
    %v884 = vunpack.c.l.b16 %v192
    %v885 = vunpack.c.l.b16 %v193
    %v886 = vunpack.c.h.b16 %v193
    %v887 = vunpack.c.l.b16 %v194
    %v888 = vunpack.c.h.b16 %v194
    %v889 = vunpack.c.l.b16 %v195
    %v890 = vunpack.c.l.b16 %v196
    %v891 = vunpack.c.h.b16 %v196
    %v892 = vunpack.c.l.b16 %v197
    %v893 = vunpack.c.h.b16 %v197
    %v894 = vunpack.c.l.b16 %v198
    %v895 = vunpack.c.l.b16 %v199
    %v896 = vunpack.c.h.b16 %v199
    %v897 = vunpack.c.l.b16 %v200
    %v898 = vunpack.c.h.b16 %v200
    %v899 = vunpack.c.l.b16 %v201
    %v900 = vunpack.c.l.b16 %v202
    %v901 = vunpack.c.h.b16 %v202
    %v902 = vunpack.c.l.b16 %v203
    %v903 = vunpack.c.h.b16 %v203
    %v904 = vunpack.c.l.b16 %v204
    %v905 = vunpack.c.l.b16 %v205
    %v906 = vunpack.c.h.b16 %v205
    %v907 = vunpack.c.l.b16 %v206
    %v908 = vunpack.c.h.b16 %v206
    %v909 = vunpack.c.l.b16 %v207
    %v910 = vunpack.c.l.b16 %v208
    %v911 = vunpack.c.h.b16 %v208
    %v912 = vunpack.c.l.b16 %v209
    %v913 = vunpack.c.h.b16 %v209
    %v914 = vunpack.c.l.b16 %v210
    %v915 = vunpack.c.l.b16 %v211
    %v916 = vunpack.c.h.b16 %v211
    %v917 = vunpack.c.l.b16 %v212
    %v918 = vunpack.c.h.b16 %v212
    %v919 = vunpack.c.l.b16 %v213
    %v920 = vunpack.c.l.b16 %v214
    %v921 = vunpack.c.h.b16 %v214
    %v922 = vunpack.c.l.b16 %v215
    %v923 = vunpack.c.h.b16 %v215
    %v924 = vunpack.c.l.b16 %v216
    %v925 = vunpack.c.l.b16 %v217
    %v926 = vunpack.c.h.b16 %v217
    %v927 = vunpack.c.l.b16 %v218
    %v928 = vunpack.c.h.b16 %v218
    %v929 = vunpack.c.l.b16 %v219
    %v930 = vunpack.c.l.b16 %v220
    %v931 = vunpack.c.h.b16 %v220
    %v932 = vunpack.c.l.b16 %v221
    %v933 = vunpack.c.h.b16 %v221
    %v934 = vunpack.c.l.b16 %v222
    %v935 = vunpack.c.l.b16 %v223
    %v936 = vunpack.c.h.b16 %v223
    %v937 = vunpack.c.l.b16 %v224
    %v938 = vunpack.c.h.b16 %v224
    %v939 = vunpack.c.l.b16 %v225
    %v940 = vunpack.c.l.b16 %v226
    %v941 = vunpack.c.h.b16 %v226
    %v942 = vunpack.c.l.b16 %v227
    %v943 = vunpack.c.h.b16 %v227
    %v944 = vunpack.c.l.b16 %v228
    %v945 = vunpack.c.l.b16 %v229
    %v946 = vunpack.c.h.b16 %v229
    %v947 = vunpack.c.l.b16 %v230
    %v948 = vunpack.c.h.b16 %v230
    %v949 = vunpack.c.l.b16 %v231
    %v950 = vunpack.c.l.b16 %v232
    %v951 = vunpack.c.h.b16 %v232
    %v952 = vunpack.c.l.b16 %v233
    %v953 = vunpack.c.h.b16 %v233
    %v954 = vunpack.c.l.b16 %v234
    %v955 = vunpack.c.l.b16 %v235
    %v956 = vunpack.c.h.b16 %v235
    %v957 = vunpack.c.l.b16 %v236
    %v958 = vunpack.c.h.b16 %v236
    %v959 = vunpack.c.l.b16 %v237
    %v960 = vunpack.c.l.b16 %v238
    %v961 = vunpack.c.h.b16 %v238
    %v962 = vunpack.c.l.b16 %v239
    %v963 = vunpack.c.h.b16 %v239
    %v964 = vunpack.c.l.b16 %v240
    %v965 = vunpack.c.l.b16 %v241
    %v966 = vunpack.c.h.b16 %v241
    %v967 = vunpack.c.l.b16 %v242
    %v968 = vunpack.c.h.b16 %v242
    %v969 = vunpack.c.l.b16 %v243
    %v970 = vunpack.c.l.b16 %v244
    %v971 = vunpack.c.h.b16 %v244
    %v972 = vunpack.c.l.b16 %v245
    %v973 = vunpack.c.h.b16 %v245
    %v974 = vunpack.c.l.b16 %v246
    %v975 = vunpack.c.l.b16 %v247
    %v976 = vunpack.c.h.b16 %v247
    %v977 = vunpack.c.l.b16 %v248
    %v978 = vunpack.c.h.b16 %v248
    %v979 = vunpack.c.l.b16 %v249
    %v980 = vunpack.c.l.b16 %v250
    %v981 = vunpack.c.h.b16 %v250
    %v982 = vunpack.c.l.b16 %v251
    %v983 = vunpack.c.h.b16 %v251
    %v984 = vunpack.c.l.b16 %v252
    %v985 = vunpack.c.l.b16 %v253
    %v986 = vunpack.c.h.b16 %v253
    %v987 = vunpack.c.l.b16 %v254
    %v988 = vunpack.c.h.b16 %v254
    %v989 = vunpack.c.l.b16 %v255
    %v990 = vunpack.c.l.b16 %v256
    %v991 = vunpack.c.h.b16 %v256
    %v992 = vunpack.c.l.b16 %v257
    %v993 = vunpack.c.h.b16 %v257
    %v994 = vunpack.c.l.b16 %v258
    %v995 = vunpack.c.l.b16 %v259
    %v996 = vunpack.c.h.b16 %v259
    %v997 = vunpack.c.l.b16 %v260
    %v998 = vunpack.c.h.b16 %v260
    %v999 = vunpack.c.l.b16 %v261
    %v1000 = vunpack.c.l.b16 %v262
    %v1001 = vunpack.c.h.b16 %v262
    %v1002 = vunpack.c.l.b16 %v263
    %v1003 = vunpack.c.h.b16 %v263
    %v1004 = vunpack.c.l.b16 %v264
    %v1005 = vunpack.c.l.b16 %v265
    %v1006 = vunpack.c.h.b16 %v265
    %v1007 = vunpack.c.l.b16 %v266
    %v1008 = vunpack.c.h.b16 %v266
    %v1009 = vunpack.c.l.b16 %v267
    %v1010 = vunpack.c.l.b16 %v268
    %v1011 = vunpack.c.h.b16 %v268
    %v1012 = vunpack.c.l.b16 %v269
    %v1013 = vunpack.c.h.b16 %v269
    %v1014 = vunpack.c.l.b16 %v270
    %v1015 = vunpack.c.l.b16 %v271
    %v1016 = vunpack.c.h.b16 %v271
    %v1017 = vunpack.c.l.b16 %v272
    %v1018 = vunpack.c.h.b16 %v272
    %v1019 = vunpack.c.l.b16 %v273
    %v1020 = vunpack.c.l.b16 %v274
    %v1021 = vunpack.c.h.b16 %v274
    %v1022 = vunpack.c.l.b16 %v275
    %v1023 = vunpack.c.h.b16 %v275
    %v1024 = vunpack.c.l.b16 %v276
    %v1025 = vunpack.c.l.b16 %v277
    %v1026 = vunpack.c.h.b16 %v277
    %v1027 = vunpack.c.l.b16 %v278
    %v1028 = vunpack.c.h.b16 %v278
    %v1029 = vunpack.c.l.b16 %v279
    %v1030 = vunpack.c.l.b16 %v280
    %v1031 = vunpack.c.h.b16 %v280
    %v1032 = vunpack.c.l.b16 %v281
    %v1033 = vunpack.c.h.b16 %v281
    %v1034 = vunpack.c.l.b16 %v282
    %v1035 = vunpack.c.l.b16 %v283
    %v1036 = vunpack.c.h.b16 %v283
    %v1037 = vunpack.c.l.b16 %v284
    %v1038 = vunpack.c.h.b16 %v284
    %v1039 = vunpack.c.l.b16 %v285
    %v1040 = vunpack.c.l.b16 %v286
    %v1041 = vunpack.c.h.b16 %v286
    %v1042 = vunpack.c.l.b16 %v287
    %v1043 = vunpack.c.h.b16 %v287
    %v1044 = vunpack.c.l.b16 %v288
    %v1045 = vunpack.c.l.b16 %v289
    %v1046 = vunpack.c.h.b16 %v289
    %v1047 = vunpack.c.l.b16 %v290
    %v1048 = vunpack.c.h.b16 %v290
    %v1049 = vunpack.c.l.b16 %v291
    %v1050 = vunpack.c.l.b16 %v292
    %v1051 = vunpack.c.h.b16 %v292
    %v1052 = vunpack.c.l.b16 %v293
    %v1053 = vunpack.c.h.b16 %v293
    %v1054 = vunpack.c.l.b16 %v294
    %v1055 = vunpack.c.l.b16 %v295
    %v1056 = vunpack.c.h.b16 %v295
    %v1057 = vunpack.c.l.b16 %v296
    %v1058 = vunpack.c.h.b16 %v296
    %v1059 = vunpack.c.l.b16 %v297
    %v1060 = vunpack.c.l.b16 %v298
    %v1061 = vunpack.c.h.b16 %v298
    %v1062 = vunpack.c.l.b16 %v299
    %v1063 = vunpack.c.h.b16 %v299
    %v1064 = vunpack.c.l.b16 %v300
    %v1065 = vunpack.c.l.b16 %v301
    %v1066 = vunpack.c.h.b16 %v301
    %v1067 = vunpack.c.l.b16 %v302
    %v1068 = vunpack.c.h.b16 %v302
    %v1069 = vunpack.c.l.b16 %v303
    %v1070 = vunpack.c.l.b16 %v304
    %v1071 = vunpack.c.h.b16 %v304
    %v1072 = vunpack.c.l.b16 %v305
    %v1073 = vunpack.c.h.b16 %v305
    %v1074 = vunpack.c.l.b16 %v306
    %v1075 = vunpack.c.l.b16 %v307
    %v1076 = vunpack.c.h.b16 %v307
    %v1077 = vunpack.c.l.b16 %v308
    %v1078 = vunpack.c.h.b16 %v308
    %v1079 = vunpack.c.l.b16 %v309
    %v1080 = vunpack.c.l.b16 %v310
    %v1081 = vunpack.c.h.b16 %v310
    %v1082 = vunpack.c.l.b16 %v311
    %v1083 = vunpack.c.h.b16 %v311
    %v1084 = vunpack.c.l.b16 %v312
    %v1085 = vunpack.c.l.b16 %v313
    %v1086 = vunpack.c.h.b16 %v313
    %v1087 = vunpack.c.l.b16 %v314
    %v1088 = vunpack.c.h.b16 %v314
    %v1089 = vunpack.c.l.b16 %v315
    %v1090 = vunpack.c.l.b16 %v316
    %v1091 = vunpack.c.h.b16 %v316
    %v1092 = vunpack.c.l.b16 %v317
    %v1093 = vunpack.c.h.b16 %v317
    %v1094 = vunpack.c.l.b16 %v318
    %v1095 = vunpack.c.l.b16 %v319
    %v1096 = vunpack.c.h.b16 %v319
    %v1097 = vunpack.c.l.b16 %v320
    %v1098 = vunpack.c.h.b16 %v320
    %v1099 = vunpack.c.l.b16 %v321
    %v1100 = vunpack.c.l.b16 %v322
    %v1101 = vunpack.c.h.b16 %v322
    %v1102 = vunpack.c.l.b16 %v323
    %v1103 = vunpack.c.h.b16 %v323
    %v1104 = vunpack.c.l.b16 %v324
    %v1105 = vunpack.c.l.b16 %v325
    %v1106 = vunpack.c.h.b16 %v325
    %v1107 = vunpack.c.l.b16 %v326
    %v1108 = vunpack.c.h.b16 %v326
    %v1109 = vunpack.c.l.b16 %v327
    %v1110 = vunpack.c.l.b16 %v328
    %v1111 = vunpack.c.h.b16 %v328
    %v1112 = vunpack.c.l.b16 %v329
    %v1113 = vunpack.c.h.b16 %v329
    %v1114 = vunpack.c.l.b16 %v330
    %v1115 = vunpack.c.l.b16 %v331
    %v1116 = vunpack.c.h.b16 %v331
    %v1117 = vunpack.c.l.b16 %v332
    %v1118 = vunpack.c.h.b16 %v332
    %v1119 = vunpack.c.l.b16 %v333
    %v1120 = vunpack.c.l.b16 %v334
    %v1121 = vunpack.c.h.b16 %v334
    %v1122 = vunpack.c.l.b16 %v335
    %v1123 = vunpack.c.h.b16 %v335
    %v1124 = vunpack.c.l.b16 %v336
    %v1125 = vunpack.c.l.b16 %v337
    %v1126 = vunpack.c.h.b16 %v337
    %v1127 = vunpack.c.l.b16 %v338
    %v1128 = vunpack.c.h.b16 %v338
    %v1129 = vunpack.c.l.b16 %v339
    %v1130 = vunpack.c.l.b16 %v340
    %v1131 = vunpack.c.h.b16 %v340
    %v1132 = vunpack.c.l.b16 %v341
    %v1133 = vunpack.c.h.b16 %v341
    %v1134 = vunpack.c.l.b16 %v342
    %v1135 = vunpack.c.l.b16 %v343
    %v1136 = vunpack.c.h.b16 %v343
    %v1137 = vunpack.c.l.b16 %v344
    %v1138 = vunpack.c.h.b16 %v344
    %v1139 = vunpack.c.l.b16 %v345
    %v1140 = vunpack.c.l.b16 %v346
    %v1141 = vunpack.c.h.b16 %v346
    %v1142 = vunpack.c.l.b16 %v347
    %v1143 = vunpack.c.h.b16 %v347
    %v1144 = vunpack.c.l.b16 %v348
    %v1145 = vunpack.c.l.b16 %v349
    %v1146 = vunpack.c.h.b16 %v349
    %v1147 = vunpack.c.l.b16 %v350
    %v1148 = vunpack.c.h.b16 %v350
    %v1149 = vunpack.c.l.b16 %v351
    %v1150 = vunpack.c.l.b16 %v352
    %v1151 = vunpack.c.h.b16 %v352
    %v1152 = vunpack.c.l.b16 %v353
    %v1153 = vunpack.c.h.b16 %v353
    %v1154 = vunpack.c.l.b16 %v354
    %v1155 = vunpack.c.l.b16 %v355
    %v1156 = vunpack.c.h.b16 %v355
    %v1157 = vunpack.c.l.b16 %v356
    %v1158 = vunpack.c.h.b16 %v356
    %v1159 = vunpack.c.l.b16 %v357
    %v1160 = vunpack.c.l.b16 %v358
    %v1161 = vunpack.c.h.b16 %v358
    %v1162 = vunpack.c.l.b16 %v359
    %v1163 = vunpack.c.h.b16 %v359
    %v1164 = vunpack.c.l.b16 %v360
    %v1165 = vunpack.c.l.b16 %v361
    %v1166 = vunpack.c.h.b16 %v361
    %v1167 = vunpack.c.l.b16 %v362
    %v1168 = vunpack.c.h.b16 %v362
    %v1169 = vunpack.c.l.b16 %v363
    %v1170 = vunpack.c.l.b16 %v364
    %v1171 = vunpack.c.h.b16 %v364
    %v1172 = vunpack.c.l.b16 %v365
    %v1173 = vunpack.c.h.b16 %v365
    %v1174 = vunpack.c.l.b16 %v366
    %v1175 = vunpack.c.l.b16 %v367
    %v1176 = vunpack.c.h.b16 %v367
    %v1177 = vunpack.c.l.b16 %v368
    %v1178 = vunpack.c.h.b16 %v368
    %v1179 = vunpack.c.l.b16 %v369
    %v1180 = vunpack.c.l.b16 %v370
    %v1181 = vunpack.c.h.b16 %v370
    %v1182 = vunpack.c.l.b16 %v371
    %v1183 = vunpack.c.h.b16 %v371
    %v1184 = vunpack.c.l.b16 %v372
    %v1185 = vunpack.c.l.b16 %v373
    %v1186 = vunpack.c.h.b16 %v373
    %v1187 = vunpack.c.l.b16 %v374
    %v1188 = vunpack.c.h.b16 %v374
    %v1189 = vunpack.c.l.b16 %v375
    %v1190 = vunpack.c.l.b16 %v376
    %v1191 = vunpack.c.h.b16 %v376
    %v1192 = vunpack.c.l.b16 %v377
    %v1193 = vunpack.c.h.b16 %v377
    %v1194 = vunpack.c.l.b16 %v378
    %v1195 = vunpack.c.l.b16 %v379
    %v1196 = vunpack.c.h.b16 %v379
    %v1197 = vunpack.c.l.b16 %v380
    %v1198 = vunpack.c.h.b16 %v380
    %v1199 = vunpack.c.l.b16 %v381
    %v1200 = vunpack.c.l.b16 %v382
    %v1201 = vunpack.c.h.b16 %v382
    %v1202 = vunpack.c.l.b16 %v383
    %v1203 = vunpack.c.h.b16 %v383
    %v1204 = vunpack.c.l.b16 %v384
    %v1205 = vunpack.c.l.b16 %v385
    %v1206 = vunpack.c.h.b16 %v385
    %v1207 = vunpack.c.l.b16 %v386
    %v1208 = vunpack.c.h.b16 %v386
    %v1209 = vunpack.c.l.b16 %v387
    %v1210 = vunpack.c.l.b16 %v388
    %v1211 = vunpack.c.h.b16 %v388
    %v1212 = vunpack.c.l.b16 %v389
    %v1213 = vunpack.c.h.b16 %v389
    %v1214 = vunpack.c.l.b16 %v390
    %v1215 = vunpack.c.l.b16 %v391
    %v1216 = vunpack.c.h.b16 %v391
    %v1217 = vunpack.c.l.b16 %v392
    %v1218 = vunpack.c.h.b16 %v392
    %v1219 = vunpack.c.l.b16 %v393
    %v1220 = vunpack.c.l.b16 %v394
    %v1221 = vunpack.c.h.b16 %v394
    %v1222 = vunpack.c.l.b16 %v395
    %v1223 = vunpack.c.h.b16 %v395
    %v1224 = vunpack.c.l.b16 %v396
    %v1225 = vunpack.c.l.b16 %v397
    %v1226 = vunpack.c.h.b16 %v397
    %v1227 = vunpack.c.l.b16 %v398
    %v1228 = vunpack.c.h.b16 %v398
    %v1229 = vunpack.c.l.b16 %v399
    %v1230 = vunpack.c.l.b16 %v400
    %v1231 = vunpack.c.h.b16 %v400
    %v1232 = vunpack.c.l.b16 %v401
    %v1233 = vunpack.c.h.b16 %v401
    %v1234 = vunpack.c.l.b16 %v402
    %v1235 = vunpack.c.l.b16 %v403
    %v1236 = vunpack.c.h.b16 %v403
    %v1237 = vunpack.c.l.b16 %v404
    %v1238 = vunpack.c.h.b16 %v404
    %v1239 = vunpack.c.l.b16 %v405
    %v1240 = vunpack.c.l.b16 %v406
    %v1241 = vunpack.c.h.b16 %v406
    %v1242 = vunpack.c.l.b16 %v407
    %v1243 = vunpack.c.h.b16 %v407
    %v1244 = vunpack.c.l.b16 %v408
    %v1245 = vunpack.c.l.b16 %v409
    %v1246 = vunpack.c.h.b16 %v409
    %v1247 = vunpack.c.l.b16 %v410
    %v1248 = vunpack.c.h.b16 %v410
    %v1249 = vunpack.c.l.b16 %v411
    %v1250 = vunpack.c.l.b16 %v412
    %v1251 = vunpack.c.h.b16 %v412
    %v1252 = vunpack.c.l.b16 %v413
    %v1253 = vunpack.c.h.b16 %v413
    %v1254 = vunpack.c.l.b16 %v414
    %v1255 = vunpack.c.l.b16 %v415
    %v1256 = vunpack.c.h.b16 %v415
    %v1257 = vunpack.c.l.b16 %v416
    %v1258 = vunpack.c.h.b16 %v416
    %v1259 = vunpack.c.l.b16 %v417
    %v1260 = vunpack.c.l.b16 %v418
    %v1261 = vunpack.c.h.b16 %v418
    %v1262 = vunpack.c.l.b16 %v419
    %v1263 = vunpack.c.h.b16 %v419
    %v1264 = vunpack.c.l.b16 %v420
    %v1265 = vunpack.c.l.b16 %v421
    %v1266 = vunpack.c.h.b16 %v421
    %v1267 = vunpack.c.l.b16 %v422
    %v1268 = vunpack.c.h.b16 %v422
    %v1269 = vunpack.c.l.b16 %v423
    %v1270 = vpack.c.b16 %v785, %v780
    %v1271 = vpack.c.b16 %v786, %v781
    %v1272 = vpack.c.b16 %v787, %v782
    %v1273 = vpack.c.b16 %v788, %v783
    %v1274 = vpack.c.b16 %v789, %v784
    %v1275 = vpack.c.b16 %v795, %v790
    %v1276 = vpack.c.b16 %v796, %v791
    %v1277 = vpack.c.b16 %v797, %v792
    %v1278 = vpack.c.b16 %v798, %v793
    %v1279 = vpack.c.b16 %v799, %v794
    %v1280 = vpack.c.b16 %v805, %v800
    %v1281 = vpack.c.b16 %v806, %v801
    %v1282 = vpack.c.b16 %v807, %v802
    %v1283 = vpack.c.b16 %v808, %v803
    %v1284 = vpack.c.b16 %v809, %v804
    %v1285 = vpack.c.b16 %v815, %v810
    %v1286 = vpack.c.b16 %v816, %v811
    %v1287 = vpack.c.b16 %v817, %v812
    %v1288 = vpack.c.b16 %v818, %v813
    %v1289 = vpack.c.b16 %v819, %v814
    %v1290 = vpack.c.b16 %v825, %v820
    %v1291 = vpack.c.b16 %v826, %v821
    %v1292 = vpack.c.b16 %v827, %v822
    %v1293 = vpack.c.b16 %v828, %v823
    %v1294 = vpack.c.b16 %v829, %v824
    %v1295 = vpack.c.b16 %v835, %v830
    %v1296 = vpack.c.b16 %v836, %v831
    %v1297 = vpack.c.b16 %v837, %v832
    %v1298 = vpack.c.b16 %v838, %v833
    %v1299 = vpack.c.b16 %v839, %v834
    %v1300 = vpack.c.b16 %v845, %v840
    %v1301 = vpack.c.b16 %v846, %v841
    %v1302 = vpack.c.b16 %v847, %v842
    %v1303 = vpack.c.b16 %v848, %v843
    %v1304 = vpack.c.b16 %v849, %v844
    %v1305 = vpack.c.b16 %v855, %v850
    %v1306 = vpack.c.b16 %v856, %v851
    %v1307 = vpack.c.b16 %v857, %v852
    %v1308 = vpack.c.b16 %v858, %v853
    %v1309 = vpack.c.b16 %v859, %v854
    %v1310 = vpack.c.b16 %v865, %v860
    %v1311 = vpack.c.b16 %v866, %v861
    %v1312 = vpack.c.b16 %v867, %v862
    %v1313 = vpack.c.b16 %v868, %v863
    %v1314 = vpack.c.b16 %v869, %v864
    %v1315 = vpack.c.b16 %v875, %v870
    %v1316 = vpack.c.b16 %v876, %v871
    %v1317 = vpack.c.b16 %v877, %v872
    %v1318 = vpack.c.b16 %v878, %v873
    %v1319 = vpack.c.b16 %v879, %v874
    %v1320 = vpack.c.b16 %v885, %v880
    %v1321 = vpack.c.b16 %v886, %v881
    %v1322 = vpack.c.b16 %v887, %v882
    %v1323 = vpack.c.b16 %v888, %v883
    %v1324 = vpack.c.b16 %v889, %v884
    %v1325 = vpack.c.b16 %v895, %v890
    %v1326 = vpack.c.b16 %v896, %v891
    %v1327 = vpack.c.b16 %v897, %v892
    %v1328 = vpack.c.b16 %v898, %v893
    %v1329 = vpack.c.b16 %v899, %v894
    %v1330 = vpack.c.b16 %v905, %v900
    %v1331 = vpack.c.b16 %v906, %v901
    %v1332 = vpack.c.b16 %v907, %v902
    %v1333 = vpack.c.b16 %v908, %v903
    %v1334 = vpack.c.b16 %v909, %v904
    %v1335 = vpack.c.b16 %v915, %v910
    %v1336 = vpack.c.b16 %v916, %v911
    %v1337 = vpack.c.b16 %v917, %v912
    %v1338 = vpack.c.b16 %v918, %v913
    %v1339 = vpack.c.b16 %v919, %v914
    %v1340 = vpack.c.b16 %v925, %v920
    %v1341 = vpack.c.b16 %v926, %v921
    %v1342 = vpack.c.b16 %v927, %v922
    %v1343 = vpack.c.b16 %v928, %v923
    %v1344 = vpack.c.b16 %v929, %v924
    %v1345 = vpack.c.b16 %v935, %v930
    %v1346 = vpack.c.b16 %v936, %v931
    %v1347 = vpack.c.b16 %v937, %v932
    %v1348 = vpack.c.b16 %v938, %v933
    %v1349 = vpack.c.b16 %v939, %v934
    %v1350 = vpack.c.b16 %v945, %v940
    %v1351 = vpack.c.b16 %v946, %v941
    %v1352 = vpack.c.b16 %v947, %v942
    %v1353 = vpack.c.b16 %v948, %v943
    %v1354 = vpack.c.b16 %v949, %v944
    %v1355 = vpack.c.b16 %v955, %v950
    %v1356 = vpack.c.b16 %v956, %v951
    %v1357 = vpack.c.b16 %v957, %v952
    %v1358 = vpack.c.b16 %v958, %v953
    %v1359 = vpack.c.b16 %v959, %v954
    %v1360 = vpack.c.b16 %v965, %v960
    %v1361 = vpack.c.b16 %v966, %v961
    %v1362 = vpack.c.b16 %v967, %v962
    %v1363 = vpack.c.b16 %v968, %v963
    %v1364 = vpack.c.b16 %v969, %v964
    %v1365 = vpack.c.b16 %v975, %v970
    %v1366 = vpack.c.b16 %v976, %v971
    %v1367 = vpack.c.b16 %v977, %v972
    %v1368 = vpack.c.b16 %v978, %v973
    %v1369 = vpack.c.b16 %v979, %v974
    %v1370 = vpack.c.b16 %v985, %v980
    %v1371 = vpack.c.b16 %v986, %v981
    %v1372 = vpack.c.b16 %v987, %v982
    %v1373 = vpack.c.b16 %v988, %v983
    %v1374 = vpack.c.b16 %v989, %v984
    %v1375 = vpack.c.b16 %v995, %v990
    %v1376 = vpack.c.b16 %v996, %v991
    %v1377 = vpack.c.b16 %v997, %v992
    %v1378 = vpack.c.b16 %v998, %v993
    %v1379 = vpack.c.b16 %v999, %v994
    %v1380 = vpack.c.b16 %v1005, %v1000
    %v1381 = vpack.c.b16 %v1006, %v1001
    %v1382 = vpack.c.b16 %v1007, %v1002
    %v1383 = vpack.c.b16 %v1008, %v1003
    %v1384 = vpack.c.b16 %v1009, %v1004
    %v1385 = vpack.c.b16 %v1015, %v1010
    %v1386 = vpack.c.b16 %v1016, %v1011
    %v1387 = vpack.c.b16 %v1017, %v1012
    %v1388 = vpack.c.b16 %v1018, %v1013
    %v1389 = vpack.c.b16 %v1019, %v1014
    %v1390 = vpack.c.b16 %v1025, %v1020
    %v1391 = vpack.c.b16 %v1026, %v1021
    %v1392 = vpack.c.b16 %v1027, %v1022
    %v1393 = vpack.c.b16 %v1028, %v1023
    %v1394 = vpack.c.b16 %v1029, %v1024
    %v1395 = vpack.c.b16 %v1035, %v1030
    %v1396 = vpack.c.b16 %v1036, %v1031
    %v1397 = vpack.c.b16 %v1037, %v1032
    %v1398 = vpack.c.b16 %v1038, %v1033
    %v1399 = vpack.c.b16 %v1039, %v1034
    %v1400 = vpack.c.b16 %v1045, %v1040
    %v1401 = vpack.c.b16 %v1046, %v1041
    %v1402 = vpack.c.b16 %v1047, %v1042
    %v1403 = vpack.c.b16 %v1048, %v1043
    %v1404 = vpack.c.b16 %v1049, %v1044
    %v1405 = vpack.c.b16 %v1055, %v1050
    %v1406 = vpack.c.b16 %v1056, %v1051
    %v1407 = vpack.c.b16 %v1057, %v1052
    %v1408 = vpack.c.b16 %v1058, %v1053
    %v1409 = vpack.c.b16 %v1059, %v1054
    %v1410 = vpack.c.b16 %v1065, %v1060
    %v1411 = vpack.c.b16 %v1066, %v1061
    %v1412 = vpack.c.b16 %v1067, %v1062
    %v1413 = vpack.c.b16 %v1068, %v1063
    %v1414 = vpack.c.b16 %v1069, %v1064
    %v1415 = vpack.c.b16 %v1075, %v1070
    %v1416 = vpack.c.b16 %v1076, %v1071
    %v1417 = vpack.c.b16 %v1077, %v1072
    %v1418 = vpack.c.b16 %v1078, %v1073
    %v1419 = vpack.c.b16 %v1079, %v1074
    %v1420 = vpack.c.b16 %v1085, %v1080
    %v1421 = vpack.c.b16 %v1086, %v1081
    %v1422 = vpack.c.b16 %v1087, %v1082
    %v1423 = vpack.c.b16 %v1088, %v1083
    %v1424 = vpack.c.b16 %v1089, %v1084
    %v1425 = vpack.c.b16 %v1095, %v1090
    %v1426 = vpack.c.b16 %v1096, %v1091
    %v1427 = vpack.c.b16 %v1097, %v1092
    %v1428 = vpack.c.b16 %v1098, %v1093
    %v1429 = vpack.c.b16 %v1099, %v1094
    %v1430 = vpack.c.b16 %v1105, %v1100
    %v1431 = vpack.c.b16 %v1106, %v1101
    %v1432 = vpack.c.b16 %v1107, %v1102
    %v1433 = vpack.c.b16 %v1108, %v1103
    %v1434 = vpack.c.b16 %v1109, %v1104
    %v1435 = vpack.c.b16 %v1115, %v1110
    %v1436 = vpack.c.b16 %v1116, %v1111
    %v1437 = vpack.c.b16 %v1117, %v1112
    %v1438 = vpack.c.b16 %v1118, %v1113
    %v1439 = vpack.c.b16 %v1119, %v1114
    %v1440 = vpack.c.b16 %v1125, %v1120
    %v1441 = vpack.c.b16 %v1126, %v1121
    %v1442 = vpack.c.b16 %v1127, %v1122
    %v1443 = vpack.c.b16 %v1128, %v1123
    %v1444 = vpack.c.b16 %v1129, %v1124
    %v1445 = vpack.c.b16 %v1135, %v1130
    %v1446 = vpack.c.b16 %v1136, %v1131
    %v1447 = vpack.c.b16 %v1137, %v1132
    %v1448 = vpack.c.b16 %v1138, %v1133
    %v1449 = vpack.c.b16 %v1139, %v1134
    %v1450 = vpack.c.b16 %v1145, %v1140
    %v1451 = vpack.c.b16 %v1146, %v1141
    %v1452 = vpack.c.b16 %v1147, %v1142
    %v1453 = vpack.c.b16 %v1148, %v1143
    %v1454 = vpack.c.b16 %v1149, %v1144
    %v1455 = vpack.c.b16 %v1155, %v1150
    %v1456 = vpack.c.b16 %v1156, %v1151
    %v1457 = vpack.c.b16 %v1157, %v1152
    %v1458 = vpack.c.b16 %v1158, %v1153
    %v1459 = vpack.c.b16 %v1159, %v1154
    %v1460 = vpack.c.b16 %v1165, %v1160
    %v1461 = vpack.c.b16 %v1166, %v1161
    %v1462 = vpack.c.b16 %v1167, %v1162
    %v1463 = vpack.c.b16 %v1168, %v1163
    %v1464 = vpack.c.b16 %v1169, %v1164
    %v1465 = vpack.c.b16 %v1175, %v1170
    %v1466 = vpack.c.b16 %v1176, %v1171
    %v1467 = vpack.c.b16 %v1177, %v1172
    %v1468 = vpack.c.b16 %v1178, %v1173
    %v1469 = vpack.c.b16 %v1179, %v1174
    %v1470 = vpack.c.b16 %v1185, %v1180
    %v1471 = vpack.c.b16 %v1186, %v1181
    %v1472 = vpack.c.b16 %v1187, %v1182
    %v1473 = vpack.c.b16 %v1188, %v1183
    %v1474 = vpack.c.b16 %v1189, %v1184
    %v1475 = vpack.c.b16 %v1195, %v1190
    %v1476 = vpack.c.b16 %v1196, %v1191
    %v1477 = vpack.c.b16 %v1197, %v1192
    %v1478 = vpack.c.b16 %v1198, %v1193
    %v1479 = vpack.c.b16 %v1199, %v1194
    %v1480 = vpack.c.b16 %v1205, %v1200
    %v1481 = vpack.c.b16 %v1206, %v1201
    %v1482 = vpack.c.b16 %v1207, %v1202
    %v1483 = vpack.c.b16 %v1208, %v1203
    %v1484 = vpack.c.b16 %v1209, %v1204
    %v1485 = vpack.c.b16 %v1215, %v1210
    %v1486 = vpack.c.b16 %v1216, %v1211
    %v1487 = vpack.c.b16 %v1217, %v1212
    %v1488 = vpack.c.b16 %v1218, %v1213
    %v1489 = vpack.c.b16 %v1219, %v1214
    %v1490 = vpack.c.b16 %v1225, %v1220
    %v1491 = vpack.c.b16 %v1226, %v1221
    %v1492 = vpack.c.b16 %v1227, %v1222
    %v1493 = vpack.c.b16 %v1228, %v1223
    %v1494 = vpack.c.b16 %v1229, %v1224
    %v1495 = vpack.c.b16 %v1235, %v1230
    %v1496 = vpack.c.b16 %v1236, %v1231
    %v1497 = vpack.c.b16 %v1237, %v1232
    %v1498 = vpack.c.b16 %v1238, %v1233
    %v1499 = vpack.c.b16 %v1239, %v1234
    %v1500 = vpack.c.b16 %v1245, %v1240
    %v1501 = vpack.c.b16 %v1246, %v1241
    %v1502 = vpack.c.b16 %v1247, %v1242
    %v1503 = vpack.c.b16 %v1248, %v1243
    %v1504 = vpack.c.b16 %v1249, %v1244
    %v1505 = vpack.c.b16 %v1255, %v1250
    %v1506 = vpack.c.b16 %v1256, %v1251
    %v1507 = vpack.c.b16 %v1257, %v1252
    %v1508 = vpack.c.b16 %v1258, %v1253
    %v1509 = vpack.c.b16 %v1259, %v1254
    %v1510 = vpack.c.b16 %v1265, %v1260
    %v1511 = vpack.c.b16 %v1266, %v1261
    %v1512 = vpack.c.b16 %v1267, %v1262
    %v1513 = vpack.c.b16 %v1268, %v1263
    %v1514 = vpack.c.b16 %v1269, %v1264
    %vm1760 = vcmask 130048
    %v1762 = vsel %vm1760, %v479, 0
    %1764 = vmatprep.subr.bf16.mxu0 %v1271
    %1765 = vmatpush1.bf16.msra.mxu0 %v1270
    %1766 = vmatprep.subr.bf16.mxu0 %v1276
    %1767 = vmatpush1.bf16.msra.mxu0 %v1275
    %1768 = vmatprep.subr.bf16.mxu0 %v1281
    %1769 = vmatpush1.bf16.msra.mxu0 %v1280
    %1770 = vmatprep.subr.bf16.mxu0 %v1286
    %1771 = vmatpush1.bf16.msra.mxu0 %v1285
    %1772 = vmatprep.subr.bf16.mxu0 %v1291
    %1773 = vmatpush1.bf16.msra.mxu0 %v1290
    %1774 = vmatprep.subr.bf16.mxu0 %v1296
    %1775 = vmatpush1.bf16.msra.mxu0 %v1295
    %1776 = vmatprep.subr.bf16.mxu0 %v1301
    %1777 = vmatpush1.bf16.msra.mxu0 %v1300
    %1778 = vmatprep.subr.bf16.mxu0 %v1306
    %1779 = vmatpush1.bf16.msra.mxu0 %v1305
    %1780 = vmatprep.subr.bf16.mxu0 %v1311
    %1781 = vmatpush1.bf16.msra.mxu0 %v1310
    %1782 = vmatprep.subr.bf16.mxu0 %v1316
    %1783 = vmatpush1.bf16.msra.mxu0 %v1315
    %1784 = vmatprep.subr.bf16.mxu0 %v1321
    %1785 = vmatpush1.bf16.msra.mxu0 %v1320
    %1786 = vmatprep.subr.bf16.mxu0 %v1326
    %1787 = vmatpush1.bf16.msra.mxu0 %v1325
    %1788 = vmatprep.subr.bf16.mxu0 %v1331
    %1789 = vmatpush1.bf16.msra.mxu0 %v1330
    %1790 = vmatprep.subr.bf16.mxu0 %v1336
    %1791 = vmatpush1.bf16.msra.mxu0 %v1335
    %1792 = vmatprep.subr.bf16.mxu0 %v1341
    %1793 = vmatpush1.bf16.msra.mxu0 %v1340
    %1794 = vmatprep.subr.bf16.mxu0 %v1346
    %1795 = vmatpush1.bf16.msra.mxu0 %v1345
    %1796 = vmatprep.mubr.bf16.mxu0 %v474
    %1797 = vmatmul.mubr.bf16.gmra.mrb[0].mxu0 %v473
    %v1798 = vpop.f32.mrb[0].mxu0
    %v1799 = vadd.f32 %v429, %v1798
    %v1800 = vpop.f32.mrb[0].mxu0
    %v1801 = vadd.f32 %v433, %v1800
    %v1802 = vpop.f32.mrb[0].mxu0
    %v1803 = vadd.f32 %v429, %v1802
    %v1804 = vpop.f32.mrb[0].mxu0
    %v1805 = vadd.f32 %v433, %v1804
    %1806 = vdwg.mxu0
    %1807 = vmatprep.subr.bf16.mxu0 %v1351
    %1808 = vmatpush1.bf16.msra.mxu0 %v1350
    %1809 = vmatprep.subr.bf16.mxu0 %v1356
    %1810 = vmatpush1.bf16.msra.mxu0 %v1355
    %1811 = vmatprep.subr.bf16.mxu0 %v1361
    %1812 = vmatpush1.bf16.msra.mxu0 %v1360
    %1813 = vmatprep.subr.bf16.mxu0 %v1366
    %1814 = vmatpush1.bf16.msra.mxu0 %v1365
    %1815 = vmatprep.subr.bf16.mxu0 %v1371
    %1816 = vmatpush1.bf16.msra.mxu0 %v1370
    %1817 = vmatprep.subr.bf16.mxu0 %v1376
    %1818 = vmatpush1.bf16.msra.mxu0 %v1375
    %1819 = vmatprep.subr.bf16.mxu0 %v1381
    %1820 = vmatpush1.bf16.msra.mxu0 %v1380
    %1821 = vmatprep.subr.bf16.mxu0 %v1386
    %1822 = vmatpush1.bf16.msra.mxu0 %v1385
    %1823 = vmatprep.subr.bf16.mxu0 %v1391
    %1824 = vmatpush1.bf16.msra.mxu0 %v1390
    %1825 = vmatprep.subr.bf16.mxu0 %v1396
    %1826 = vmatpush1.bf16.msra.mxu0 %v1395
    %1827 = vmatprep.subr.bf16.mxu0 %v1401
    %1828 = vmatpush1.bf16.msra.mxu0 %v1400
    %1829 = vmatprep.subr.bf16.mxu0 %v1406
    %1830 = vmatpush1.bf16.msra.mxu0 %v1405
    %1831 = vmatprep.subr.bf16.mxu0 %v1411
    %1832 = vmatpush1.bf16.msra.mxu0 %v1410
    %1833 = vmatprep.subr.bf16.mxu0 %v1416
    %1834 = vmatpush1.bf16.msra.mxu0 %v1415
    %1835 = vmatprep.subr.bf16.mxu0 %v1421
    %1836 = vmatpush1.bf16.msra.mxu0 %v1420
    %1837 = vmatprep.subr.bf16.mxu0 %v1426
    %1838 = vmatpush1.bf16.msra.mxu0 %v1425
    %1839 = vmatprep.mubr.bf16.mxu0 %v476
    %1840 = vmatmul.mubr.bf16.gmra.mrb[0].mxu0 %v475
    %v1841 = vpop.f32.mrb[0].mxu0
    %v1842 = vadd.f32 %v1799, %v1841
    %v1843 = vpop.f32.mrb[0].mxu0
    %v1844 = vadd.f32 %v1801, %v1843
    %v1845 = vpop.f32.mrb[0].mxu0
    %v1846 = vadd.f32 %v1803, %v1845
    %v1847 = vpop.f32.mrb[0].mxu0
    %v1848 = vadd.f32 %v1805, %v1847
    %1849 = vdwg.mxu0
    %1850 = vmatprep.subr.bf16.mxu0 %v1431
    %1851 = vmatpush1.bf16.msra.mxu0 %v1430
    %1852 = vmatprep.subr.bf16.mxu0 %v1436
    %1853 = vmatpush1.bf16.msra.mxu0 %v1435
    %1854 = vmatprep.subr.bf16.mxu0 %v1441
    %1855 = vmatpush1.bf16.msra.mxu0 %v1440
    %1856 = vmatprep.subr.bf16.mxu0 %v1446
    %1857 = vmatpush1.bf16.msra.mxu0 %v1445
    %1858 = vmatprep.subr.bf16.mxu0 %v1451
    %1859 = vmatpush1.bf16.msra.mxu0 %v1450
    %1860 = vmatprep.subr.bf16.mxu0 %v1456
    %1861 = vmatpush1.bf16.msra.mxu0 %v1455
    %1862 = vmatprep.subr.bf16.mxu0 %v1461
    %1863 = vmatpush1.bf16.msra.mxu0 %v1460
    %1864 = vmatprep.subr.bf16.mxu0 %v1466
    %1865 = vmatpush1.bf16.msra.mxu0 %v1465
    %1866 = vmatprep.subr.bf16.mxu0 %v1471
    %1867 = vmatpush1.bf16.msra.mxu0 %v1470
    %1868 = vmatprep.subr.bf16.mxu0 %v1476
    %1869 = vmatpush1.bf16.msra.mxu0 %v1475
    %1870 = vmatprep.subr.bf16.mxu0 %v1481
    %1871 = vmatpush1.bf16.msra.mxu0 %v1480
    %1872 = vmatprep.subr.bf16.mxu0 %v1486
    %1873 = vmatpush1.bf16.msra.mxu0 %v1485
    %1874 = vmatprep.subr.bf16.mxu0 %v1491
    %1875 = vmatpush1.bf16.msra.mxu0 %v1490
    %1876 = vmatprep.subr.bf16.mxu0 %v1496
    %1877 = vmatpush1.bf16.msra.mxu0 %v1495
    %1878 = vmatprep.subr.bf16.mxu0 %v1501
    %1879 = vmatpush1.bf16.msra.mxu0 %v1500
    %1880 = vmatprep.subr.bf16.mxu0 %v1506
    %1881 = vmatpush1.bf16.msra.mxu0 %v1505
    %1882 = vmatprep.mubr.bf16.mxu0 %v478
    %1883 = vmatmul.mubr.bf16.gmra.mrb[0].mxu0 %v477
    %v1884 = vpop.f32.mrb[0].mxu0
    %v1885 = vadd.f32 %v1842, %v1884
    %v1886 = vpop.f32.mrb[0].mxu0
    %v1887 = vadd.f32 %v1844, %v1886
    %v1888 = vpop.f32.mrb[0].mxu0
    %v1889 = vadd.f32 %v1846, %v1888
    %v1890 = vpop.f32.mrb[0].mxu0
    %v1891 = vadd.f32 %v1848, %v1890
    %1892 = vdwg.mxu0
    %1893 = vmatprep.subr.bf16.mxu0 %v1511
    %1894 = vmatpush1.bf16.msra.mxu0 %v1510
    %1895 = vmatprep.subr.bf16.mxu0 0
    %1896 = vmatpush1.bf16.msra.mxu0 0
    %1897 = vmatprep.subr.bf16.mxu0 0
    %1898 = vmatpush1.bf16.msra.mxu0 0
    %1899 = vmatprep.subr.bf16.mxu0 0
    %1900 = vmatpush1.bf16.msra.mxu0 0
    %1901 = vmatprep.subr.bf16.mxu0 0
    %1902 = vmatpush1.bf16.msra.mxu0 0
    %1903 = vmatprep.subr.bf16.mxu0 0
    %1904 = vmatpush1.bf16.msra.mxu0 0
    %1905 = vmatprep.subr.bf16.mxu0 0
    %1906 = vmatpush1.bf16.msra.mxu0 0
    %1907 = vmatprep.subr.bf16.mxu0 0
    %1908 = vmatpush1.bf16.msra.mxu0 0
    %1909 = vmatprep.subr.bf16.mxu0 0
    %1910 = vmatpush1.bf16.msra.mxu0 0
    %1911 = vmatprep.subr.bf16.mxu0 0
    %1912 = vmatpush1.bf16.msra.mxu0 0
    %1913 = vmatprep.subr.bf16.mxu0 0
    %1914 = vmatpush1.bf16.msra.mxu0 0
    %1915 = vmatprep.subr.bf16.mxu0 0
    %1916 = vmatpush1.bf16.msra.mxu0 0
    %1917 = vmatprep.subr.bf16.mxu0 0
    %1918 = vmatpush1.bf16.msra.mxu0 0
    %1919 = vmatprep.subr.bf16.mxu0 0
    %1920 = vmatpush1.bf16.msra.mxu0 0
    %1921 = vmatprep.subr.bf16.mxu0 0
    %1922 = vmatpush1.bf16.msra.mxu0 0
    %1923 = vmatprep.subr.bf16.mxu0 0
    %1924 = vmatpush1.bf16.msra.mxu0 0
    %1925 = vmatprep.mubr.bf16.mxu0 0
    %1926 = vmatmul.mubr.bf16.gmra.mrb[0].mxu0 %v1762
    %v1927 = vpop.f32.mrb[0].mxu0
    %v1928 = vadd.f32 %v1885, %v1927
    %v1929 = vpop.f32.mrb[0].mxu0
    %v1930 = vadd.f32 %v1887, %v1929
    %v1931 = vpop.f32.mrb[0].mxu0
    %v1932 = vadd.f32 %v1889, %v1931
    %v1933 = vpop.f32.mrb[0].mxu0
    %v1934 = vadd.f32 %v1891, %v1933
    %1935 = vdwg.mxu0
    %1936 = vmatprep.subr.bf16.mxu0 %v1273
    %1937 = vmatpush1.bf16.msra.mxu0 %v1272
    %1938 = vmatprep.subr.bf16.mxu0 %v1278
    %1939 = vmatpush1.bf16.msra.mxu0 %v1277
    %1940 = vmatprep.subr.bf16.mxu0 %v1283
    %1941 = vmatpush1.bf16.msra.mxu0 %v1282
    %1942 = vmatprep.subr.bf16.mxu0 %v1288
    %1943 = vmatpush1.bf16.msra.mxu0 %v1287
    %1944 = vmatprep.subr.bf16.mxu0 %v1293
    %1945 = vmatpush1.bf16.msra.mxu0 %v1292
    %1946 = vmatprep.subr.bf16.mxu0 %v1298
    %1947 = vmatpush1.bf16.msra.mxu0 %v1297
    %1948 = vmatprep.subr.bf16.mxu0 %v1303
    %1949 = vmatpush1.bf16.msra.mxu0 %v1302
    %1950 = vmatprep.subr.bf16.mxu0 %v1308
    %1951 = vmatpush1.bf16.msra.mxu0 %v1307
    %1952 = vmatprep.subr.bf16.mxu0 %v1313
    %1953 = vmatpush1.bf16.msra.mxu0 %v1312
    %1954 = vmatprep.subr.bf16.mxu0 %v1318
    %1955 = vmatpush1.bf16.msra.mxu0 %v1317
    %1956 = vmatprep.subr.bf16.mxu0 %v1323
    %1957 = vmatpush1.bf16.msra.mxu0 %v1322
    %1958 = vmatprep.subr.bf16.mxu0 %v1328
    %1959 = vmatpush1.bf16.msra.mxu0 %v1327
    %1960 = vmatprep.subr.bf16.mxu0 %v1333
    %1961 = vmatpush1.bf16.msra.mxu0 %v1332
    %1962 = vmatprep.subr.bf16.mxu0 %v1338
    %1963 = vmatpush1.bf16.msra.mxu0 %v1337
    %1964 = vmatprep.subr.bf16.mxu0 %v1343
    %1965 = vmatpush1.bf16.msra.mxu0 %v1342
    %1966 = vmatprep.subr.bf16.mxu0 %v1348
    %1967 = vmatpush1.bf16.msra.mxu0 %v1347
    %1968 = vmatprep.mubr.bf16.mxu0 %v474
    %1969 = vmatmul.mubr.bf16.gmra.mrb[0].mxu0 %v473
    %v1970 = vpop.f32.mrb[0].mxu0
    %v1971 = vadd.f32 %v437, %v1970
    %v1972 = vpop.f32.mrb[0].mxu0
    %v1973 = vadd.f32 %v441, %v1972
    %v1974 = vpop.f32.mrb[0].mxu0
    %v1975 = vadd.f32 %v437, %v1974
    %v1976 = vpop.f32.mrb[0].mxu0
    %v1977 = vadd.f32 %v441, %v1976
    %1978 = vdwg.mxu0
    %1979 = vmatprep.subr.bf16.mxu0 %v1353
    %1980 = vmatpush1.bf16.msra.mxu0 %v1352
    %1981 = vmatprep.subr.bf16.mxu0 %v1358
    %1982 = vmatpush1.bf16.msra.mxu0 %v1357
    %1983 = vmatprep.subr.bf16.mxu0 %v1363
    %1984 = vmatpush1.bf16.msra.mxu0 %v1362
    %1985 = vmatprep.subr.bf16.mxu0 %v1368
    %1986 = vmatpush1.bf16.msra.mxu0 %v1367
    %1987 = vmatprep.subr.bf16.mxu0 %v1373
    %1988 = vmatpush1.bf16.msra.mxu0 %v1372
    %1989 = vmatprep.subr.bf16.mxu0 %v1378
    %1990 = vmatpush1.bf16.msra.mxu0 %v1377
    %1991 = vmatprep.subr.bf16.mxu0 %v1383
    %1992 = vmatpush1.bf16.msra.mxu0 %v1382
    %1993 = vmatprep.subr.bf16.mxu0 %v1388
    %1994 = vmatpush1.bf16.msra.mxu0 %v1387
    %1995 = vmatprep.subr.bf16.mxu0 %v1393
    %1996 = vmatpush1.bf16.msra.mxu0 %v1392
    %1997 = vmatprep.subr.bf16.mxu0 %v1398
    %1998 = vmatpush1.bf16.msra.mxu0 %v1397
    %1999 = vmatprep.subr.bf16.mxu0 %v1403
    %2000 = vmatpush1.bf16.msra.mxu0 %v1402
    %2001 = vmatprep.subr.bf16.mxu0 %v1408
    %2002 = vmatpush1.bf16.msra.mxu0 %v1407
    %2003 = vmatprep.subr.bf16.mxu0 %v1413
    %2004 = vmatpush1.bf16.msra.mxu0 %v1412
    %2005 = vmatprep.subr.bf16.mxu0 %v1418
    %2006 = vmatpush1.bf16.msra.mxu0 %v1417
    %2007 = vmatprep.subr.bf16.mxu0 %v1423
    %2008 = vmatpush1.bf16.msra.mxu0 %v1422
    %2009 = vmatprep.subr.bf16.mxu0 %v1428
    %2010 = vmatpush1.bf16.msra.mxu0 %v1427
    %2011 = vmatprep.mubr.bf16.mxu0 %v476
    %2012 = vmatmul.mubr.bf16.gmra.mrb[0].mxu0 %v475
    %v2013 = vpop.f32.mrb[0].mxu0
    %v2014 = vadd.f32 %v1971, %v2013
    %v2015 = vpop.f32.mrb[0].mxu0
    %v2016 = vadd.f32 %v1973, %v2015
    %v2017 = vpop.f32.mrb[0].mxu0
    %v2018 = vadd.f32 %v1975, %v2017
    %v2019 = vpop.f32.mrb[0].mxu0
    %v2020 = vadd.f32 %v1977, %v2019
    %2021 = vdwg.mxu0
    %2022 = vmatprep.subr.bf16.mxu0 %v1433
    %2023 = vmatpush1.bf16.msra.mxu0 %v1432
    %2024 = vmatprep.subr.bf16.mxu0 %v1438
    %2025 = vmatpush1.bf16.msra.mxu0 %v1437
    %2026 = vmatprep.subr.bf16.mxu0 %v1443
    %2027 = vmatpush1.bf16.msra.mxu0 %v1442
    %2028 = vmatprep.subr.bf16.mxu0 %v1448
    %2029 = vmatpush1.bf16.msra.mxu0 %v1447
    %2030 = vmatprep.subr.bf16.mxu0 %v1453
    %2031 = vmatpush1.bf16.msra.mxu0 %v1452
    %2032 = vmatprep.subr.bf16.mxu0 %v1458
    %2033 = vmatpush1.bf16.msra.mxu0 %v1457
    %2034 = vmatprep.subr.bf16.mxu0 %v1463
    %2035 = vmatpush1.bf16.msra.mxu0 %v1462
    %2036 = vmatprep.subr.bf16.mxu0 %v1468
    %2037 = vmatpush1.bf16.msra.mxu0 %v1467
    %2038 = vmatprep.subr.bf16.mxu0 %v1473
    %2039 = vmatpush1.bf16.msra.mxu0 %v1472
    %2040 = vmatprep.subr.bf16.mxu0 %v1478
    %2041 = vmatpush1.bf16.msra.mxu0 %v1477
    %2042 = vmatprep.subr.bf16.mxu0 %v1483
    %2043 = vmatpush1.bf16.msra.mxu0 %v1482
    %2044 = vmatprep.subr.bf16.mxu0 %v1488
    %2045 = vmatpush1.bf16.msra.mxu0 %v1487
    %2046 = vmatprep.subr.bf16.mxu0 %v1493
    %2047 = vmatpush1.bf16.msra.mxu0 %v1492
    %2048 = vmatprep.subr.bf16.mxu0 %v1498
    %2049 = vmatpush1.bf16.msra.mxu0 %v1497
    %2050 = vmatprep.subr.bf16.mxu0 %v1503
    %2051 = vmatpush1.bf16.msra.mxu0 %v1502
    %2052 = vmatprep.subr.bf16.mxu0 %v1508
    %2053 = vmatpush1.bf16.msra.mxu0 %v1507
    %2054 = vmatprep.mubr.bf16.mxu0 %v478
    %2055 = vmatmul.mubr.bf16.gmra.mrb[0].mxu0 %v477
    %v2056 = vpop.f32.mrb[0].mxu0
    %v2057 = vadd.f32 %v2014, %v2056
    %v2058 = vpop.f32.mrb[0].mxu0
    %v2059 = vadd.f32 %v2016, %v2058
    %v2060 = vpop.f32.mrb[0].mxu0
    %v2061 = vadd.f32 %v2018, %v2060
    %v2062 = vpop.f32.mrb[0].mxu0
    %v2063 = vadd.f32 %v2020, %v2062
    %2064 = vdwg.mxu0
    %2065 = vmatprep.subr.bf16.mxu0 %v1513
    %2066 = vmatpush1.bf16.msra.mxu0 %v1512
    %2067 = vmatprep.subr.bf16.mxu0 0
    %2068 = vmatpush1.bf16.msra.mxu0 0
    %2069 = vmatprep.subr.bf16.mxu0 0
    %2070 = vmatpush1.bf16.msra.mxu0 0
    %2071 = vmatprep.subr.bf16.mxu0 0
    %2072 = vmatpush1.bf16.msra.mxu0 0
    %2073 = vmatprep.subr.bf16.mxu0 0
    %2074 = vmatpush1.bf16.msra.mxu0 0
    %2075 = vmatprep.subr.bf16.mxu0 0
    %2076 = vmatpush1.bf16.msra.mxu0 0
    %2077 = vmatprep.subr.bf16.mxu0 0
    %2078 = vmatpush1.bf16.msra.mxu0 0
    %2079 = vmatprep.subr.bf16.mxu0 0
    %2080 = vmatpush1.bf16.msra.mxu0 0
    %2081 = vmatprep.subr.bf16.mxu0 0
    %2082 = vmatpush1.bf16.msra.mxu0 0
    %2083 = vmatprep.subr.bf16.mxu0 0
    %2084 = vmatpush1.bf16.msra.mxu0 0
    %2085 = vmatprep.subr.bf16.mxu0 0
    %2086 = vmatpush1.bf16.msra.mxu0 0
    %2087 = vmatprep.subr.bf16.mxu0 0
    %2088 = vmatpush1.bf16.msra.mxu0 0
    %2089 = vmatprep.subr.bf16.mxu0 0
    %2090 = vmatpush1.bf16.msra.mxu0 0
    %2091 = vmatprep.subr.bf16.mxu0 0
    %2092 = vmatpush1.bf16.msra.mxu0 0
    %2093 = vmatprep.subr.bf16.mxu0 0
    %2094 = vmatpush1.bf16.msra.mxu0 0
    %2095 = vmatprep.subr.bf16.mxu0 0
    %2096 = vmatpush1.bf16.msra.mxu0 0
    %2097 = vmatprep.mubr.bf16.mxu0 0
    %2098 = vmatmul.mubr.bf16.gmra.mrb[0].mxu0 %v1762
    %v2099 = vpop.f32.mrb[0].mxu0
    %v2100 = vadd.f32 %v2057, %v2099
    %v2101 = vpop.f32.mrb[0].mxu0
    %v2102 = vadd.f32 %v2059, %v2101
    %v2103 = vpop.f32.mrb[0].mxu0
    %v2104 = vadd.f32 %v2061, %v2103
    %v2105 = vpop.f32.mrb[0].mxu0
    %v2106 = vadd.f32 %v2063, %v2105
    %2107 = vdwg.mxu0
    %2108 = vmatprep.subr.bf16.mxu0 0
    %2109 = vmatpush1.bf16.msra.mxu0 %v1274
    %2110 = vmatprep.subr.bf16.mxu0 0
    %2111 = vmatpush1.bf16.msra.mxu0 %v1279
    %2112 = vmatprep.subr.bf16.mxu0 0
    %2113 = vmatpush1.bf16.msra.mxu0 %v1284
    %2114 = vmatprep.subr.bf16.mxu0 0
    %2115 = vmatpush1.bf16.msra.mxu0 %v1289
    %2116 = vmatprep.subr.bf16.mxu0 0
    %2117 = vmatpush1.bf16.msra.mxu0 %v1294
    %2118 = vmatprep.subr.bf16.mxu0 0
    %2119 = vmatpush1.bf16.msra.mxu0 %v1299
    %2120 = vmatprep.subr.bf16.mxu0 0
    %2121 = vmatpush1.bf16.msra.mxu0 %v1304
    %2122 = vmatprep.subr.bf16.mxu0 0
    %2123 = vmatpush1.bf16.msra.mxu0 %v1309
    %2124 = vmatprep.subr.bf16.mxu0 0
    %2125 = vmatpush1.bf16.msra.mxu0 %v1314
    %2126 = vmatprep.subr.bf16.mxu0 0
    %2127 = vmatpush1.bf16.msra.mxu0 %v1319
    %2128 = vmatprep.subr.bf16.mxu0 0
    %2129 = vmatpush1.bf16.msra.mxu0 %v1324
    %2130 = vmatprep.subr.bf16.mxu0 0
    %2131 = vmatpush1.bf16.msra.mxu0 %v1329
    %2132 = vmatprep.subr.bf16.mxu0 0
    %2133 = vmatpush1.bf16.msra.mxu0 %v1334
    %2134 = vmatprep.subr.bf16.mxu0 0
    %2135 = vmatpush1.bf16.msra.mxu0 %v1339
    %2136 = vmatprep.subr.bf16.mxu0 0
    %2137 = vmatpush1.bf16.msra.mxu0 %v1344
    %2138 = vmatprep.subr.bf16.mxu0 0
    %2139 = vmatpush1.bf16.msra.mxu0 %v1349
    %2140 = vmatprep.mubr.bf16.mxu0 %v474
    %2141 = vmatmul.mubr.bf16.gmra.mrb[0].mxu0 %v473
    %v2142 = vpop.f32.mrb[0].mxu0
    %v2143 = vadd.f32 %v445, %v2142
    %v2144 = vpop.f32.mrb[0].mxu0
    %v2145 = vpop.f32.mrb[0].mxu0
    %v2146 = vadd.f32 %v445, %v2145
    %v2147 = vpop.f32.mrb[0].mxu0
    %2148 = vdwg.mxu0
    %2149 = vmatprep.subr.bf16.mxu0 0
    %2150 = vmatpush1.bf16.msra.mxu0 %v1354
    %2151 = vmatprep.subr.bf16.mxu0 0
    %2152 = vmatpush1.bf16.msra.mxu0 %v1359
    %2153 = vmatprep.subr.bf16.mxu0 0
    %2154 = vmatpush1.bf16.msra.mxu0 %v1364
    %2155 = vmatprep.subr.bf16.mxu0 0
    %2156 = vmatpush1.bf16.msra.mxu0 %v1369
    %2157 = vmatprep.subr.bf16.mxu0 0
    %2158 = vmatpush1.bf16.msra.mxu0 %v1374
    %2159 = vmatprep.subr.bf16.mxu0 0
    %2160 = vmatpush1.bf16.msra.mxu0 %v1379
    %2161 = vmatprep.subr.bf16.mxu0 0
    %2162 = vmatpush1.bf16.msra.mxu0 %v1384
    %2163 = vmatprep.subr.bf16.mxu0 0
    %2164 = vmatpush1.bf16.msra.mxu0 %v1389
    %2165 = vmatprep.subr.bf16.mxu0 0
    %2166 = vmatpush1.bf16.msra.mxu0 %v1394
    %2167 = vmatprep.subr.bf16.mxu0 0
    %2168 = vmatpush1.bf16.msra.mxu0 %v1399
    %2169 = vmatprep.subr.bf16.mxu0 0
    %2170 = vmatpush1.bf16.msra.mxu0 %v1404
    %2171 = vmatprep.subr.bf16.mxu0 0
    %2172 = vmatpush1.bf16.msra.mxu0 %v1409
    %2173 = vmatprep.subr.bf16.mxu0 0
    %2174 = vmatpush1.bf16.msra.mxu0 %v1414
    %2175 = vmatprep.subr.bf16.mxu0 0
    %2176 = vmatpush1.bf16.msra.mxu0 %v1419
    %2177 = vmatprep.subr.bf16.mxu0 0
    %2178 = vmatpush1.bf16.msra.mxu0 %v1424
    %2179 = vmatprep.subr.bf16.mxu0 0
    %2180 = vmatpush1.bf16.msra.mxu0 %v1429
    %2181 = vmatprep.mubr.bf16.mxu0 %v476
    %2182 = vmatmul.mubr.bf16.gmra.mrb[0].mxu0 %v475
    %v2183 = vpop.f32.mrb[0].mxu0
    %v2184 = vadd.f32 %v2143, %v2183
    %v2185 = vpop.f32.mrb[0].mxu0
    %v2186 = vpop.f32.mrb[0].mxu0
    %v2187 = vadd.f32 %v2146, %v2186
    %v2188 = vpop.f32.mrb[0].mxu0
    %2189 = vdwg.mxu0
    %2190 = vmatprep.subr.bf16.mxu0 0
    %2191 = vmatpush1.bf16.msra.mxu0 %v1434
    %2192 = vmatprep.subr.bf16.mxu0 0
    %2193 = vmatpush1.bf16.msra.mxu0 %v1439
    %2194 = vmatprep.subr.bf16.mxu0 0
    %2195 = vmatpush1.bf16.msra.mxu0 %v1444
    %2196 = vmatprep.subr.bf16.mxu0 0
    %2197 = vmatpush1.bf16.msra.mxu0 %v1449
    %2198 = vmatprep.subr.bf16.mxu0 0
    %2199 = vmatpush1.bf16.msra.mxu0 %v1454
    %2200 = vmatprep.subr.bf16.mxu0 0
    %2201 = vmatpush1.bf16.msra.mxu0 %v1459
    %2202 = vmatprep.subr.bf16.mxu0 0
    %2203 = vmatpush1.bf16.msra.mxu0 %v1464
    %2204 = vmatprep.subr.bf16.mxu0 0
    %2205 = vmatpush1.bf16.msra.mxu0 %v1469
    %2206 = vmatprep.subr.bf16.mxu0 0
    %2207 = vmatpush1.bf16.msra.mxu0 %v1474
    %2208 = vmatprep.subr.bf16.mxu0 0
    %2209 = vmatpush1.bf16.msra.mxu0 %v1479
    %2210 = vmatprep.subr.bf16.mxu0 0
    %2211 = vmatpush1.bf16.msra.mxu0 %v1484
    %2212 = vmatprep.subr.bf16.mxu0 0
    %2213 = vmatpush1.bf16.msra.mxu0 %v1489
    %2214 = vmatprep.subr.bf16.mxu0 0
    %2215 = vmatpush1.bf16.msra.mxu0 %v1494
    %2216 = vmatprep.subr.bf16.mxu0 0
    %2217 = vmatpush1.bf16.msra.mxu0 %v1499
    %2218 = vmatprep.subr.bf16.mxu0 0
    %2219 = vmatpush1.bf16.msra.mxu0 %v1504
    %2220 = vmatprep.subr.bf16.mxu0 0
    %2221 = vmatpush1.bf16.msra.mxu0 %v1509
    %2222 = vmatprep.mubr.bf16.mxu0 %v478
    %2223 = vmatmul.mubr.bf16.gmra.mrb[0].mxu0 %v477
    %v2224 = vpop.f32.mrb[0].mxu0
    %v2225 = vadd.f32 %v2184, %v2224
    %v2226 = vpop.f32.mrb[0].mxu0
    %v2227 = vpop.f32.mrb[0].mxu0
    %v2228 = vadd.f32 %v2187, %v2227
    %v2229 = vpop.f32.mrb[0].mxu0
    %2230 = vdwg.mxu0
    %2231 = vmatprep.subr.bf16.mxu0 0
    %2232 = vmatpush1.bf16.msra.mxu0 %v1514
    %2233 = vmatprep.subr.bf16.mxu0 0
    %2234 = vmatpush1.bf16.msra.mxu0 0
    %2235 = vmatprep.subr.bf16.mxu0 0
    %2236 = vmatpush1.bf16.msra.mxu0 0
    %2237 = vmatprep.subr.bf16.mxu0 0
    %2238 = vmatpush1.bf16.msra.mxu0 0
    %2239 = vmatprep.subr.bf16.mxu0 0
    %2240 = vmatpush1.bf16.msra.mxu0 0
    %2241 = vmatprep.subr.bf16.mxu0 0
    %2242 = vmatpush1.bf16.msra.mxu0 0
    %2243 = vmatprep.subr.bf16.mxu0 0
    %2244 = vmatpush1.bf16.msra.mxu0 0
    %2245 = vmatprep.subr.bf16.mxu0 0
    %2246 = vmatpush1.bf16.msra.mxu0 0
    %2247 = vmatprep.subr.bf16.mxu0 0
    %2248 = vmatpush1.bf16.msra.mxu0 0
    %2249 = vmatprep.subr.bf16.mxu0 0
    %2250 = vmatpush1.bf16.msra.mxu0 0
    %2251 = vmatprep.subr.bf16.mxu0 0
    %2252 = vmatpush1.bf16.msra.mxu0 0
    %2253 = vmatprep.subr.bf16.mxu0 0
    %2254 = vmatpush1.bf16.msra.mxu0 0
    %2255 = vmatprep.subr.bf16.mxu0 0
    %2256 = vmatpush1.bf16.msra.mxu0 0
    %2257 = vmatprep.subr.bf16.mxu0 0
    %2258 = vmatpush1.bf16.msra.mxu0 0
    %2259 = vmatprep.subr.bf16.mxu0 0
    %2260 = vmatpush1.bf16.msra.mxu0 0
    %2261 = vmatprep.subr.bf16.mxu0 0
    %2262 = vmatpush1.bf16.msra.mxu0 0
    %2263 = vmatprep.mubr.bf16.mxu0 0
    %2264 = vmatmul.mubr.bf16.gmra.mrb[0].mxu0 %v1762
    %v2265 = vpop.f32.mrb[0].mxu0
    %v2266 = vadd.f32 %v2225, %v2265
    %v2267 = vpop.f32.mrb[0].mxu0
    %v2268 = vpop.f32.mrb[0].mxu0
    %v2269 = vadd.f32 %v2228, %v2268
    %v2270 = vpop.f32.mrb[0].mxu0
    %2271 = vdwg.mxu0
    %v2272 = vmax.f32 %v1928, 0.0
    %v2273 = vmax.f32 %v1930, 0.0
    %v2274 = vmax.f32 %v2100, 0.0
    %v2275 = vmax.f32 %v2102, 0.0
    %v2276 = vmax.f32 %v2266, 0.0
    %v2277 = vmax.f32 %v1932, 0.0
    %v2278 = vmax.f32 %v1934, 0.0
    %v2279 = vmax.f32 %v2104, 0.0
    %v2280 = vmax.f32 %v2106, 0.0
    %v2281 = vmax.f32 %v2269, 0.0
    %v2282 = vpack.c.bf16 %v2277, %v2272
    %v2283 = vpack.c.bf16 %v2278, %v2273
    %v2284 = vpack.c.bf16 %v2279, %v2274
    %v2285 = vpack.c.bf16 %v2280, %v2275
    %v2286 = vpack.c.bf16 %v2281, %v2276
    %v2287 = vld [vmem:[#allocation7] sm:$0xff]
    %v2288 = vld [vmem:[#allocation7 + $0x8] sm:$0xff]
    %v2289 = vld [vmem:[#allocation7 + $0x10] sm:$0xff]
    %v2290 = vld [vmem:[#allocation7 + $0x18] sm:$0xff]
    %v2291 = vld [vmem:[#allocation7 + $0x20] sm:$0xff]
    %v2292 = vld [vmem:[#allocation7 + $0x28] sm:$0xff]
    %v2293 = vld [vmem:[#allocation7 + $0x30] sm:$0xff]
    %v2294 = vld [vmem:[#allocation7 + $0x38] sm:$0xff]
    %v2295 = vld [vmem:[#allocation7 + $0x40] sm:$0xff]
    %v2296 = vld [vmem:[#allocation7 + $0x48] sm:$0xff]
    %v2297 = vld [vmem:[#allocation7 + $0x50] sm:$0xff]
    %v2298 = vld [vmem:[#allocation7 + $0x58] sm:$0xff]
    %v2299 = vld [vmem:[#allocation7 + $0x60] sm:$0xff]
    %v2300 = vld [vmem:[#allocation7 + $0x68] sm:$0xff]
    %v2301 = vld [vmem:[#allocation7 + $0x70] sm:$0xff]
    %v2302 = vld [vmem:[#allocation7 + $0x78] sm:$0xff]
    %v2303 = vld [vmem:[#allocation7 + $0x80] sm:$0xff]
    %v2304 = vld [vmem:[#allocation7 + $0x88] sm:$0xff]
    %v2305 = vld [vmem:[#allocation7 + $0x90] sm:$0xff]
    %v2306 = vld [vmem:[#allocation7 + $0x98] sm:$0xff]
    %v2307 = vld [vmem:[#allocation7 + $0xa0] sm:$0xff]
    %v2308 = vld [vmem:[#allocation7 + $0xa8] sm:$0xff]
    %v2309 = vld [vmem:[#allocation7 + $0xb0] sm:$0xff]
    %v2310 = vld [vmem:[#allocation7 + $0xb8] sm:$0xff]
    %v2311 = vld [vmem:[#allocation7 + $0xc0] sm:$0xff]
    %v2312 = vld [vmem:[#allocation7 + $0xc8] sm:$0xff]
    %v2313 = vld [vmem:[#allocation7 + $0xd0] sm:$0xff]
    %v2314 = vld [vmem:[#allocation7 + $0xd8] sm:$0xff]
    %v2315 = vld [vmem:[#allocation7 + $0xe0] sm:$0xff]
    %v2316 = vld [vmem:[#allocation7 + $0xe8] sm:$0xff]
    %v2317 = vld [vmem:[#allocation7 + $0xf0] sm:$0xff]
    %v2318 = vld [vmem:[#allocation7 + $0xf8] sm:$0xff]
    %v2319 = vld [vmem:[#allocation7 + $0x100] sm:$0xff]
    %v2320 = vld [vmem:[#allocation7 + $0x108] sm:$0xff]
    %v2321 = vld [vmem:[#allocation7 + $0x110] sm:$0xff]
    %v2322 = vld [vmem:[#allocation7 + $0x118] sm:$0xff]
    %v2323 = vld [vmem:[#allocation7 + $0x120] sm:$0xff]
    %v2324 = vld [vmem:[#allocation7 + $0x128] sm:$0xff]
    %v2325 = vld [vmem:[#allocation7 + $0x130] sm:$0xff]
    %v2326 = vld [vmem:[#allocation7 + $0x138] sm:$0xff]
    %v2327 = vld [vmem:[#allocation7 + $0x140] sm:$0xff]
    %v2328 = vld [vmem:[#allocation7 + $0x148] sm:$0xff]
    %v2329 = vld [vmem:[#allocation7 + $0x150] sm:$0xff]
    %v2330 = vld [vmem:[#allocation7 + $0x158] sm:$0xff]
    %v2331 = vld [vmem:[#allocation7 + $0x160] sm:$0xff]
    %v2332 = vld [vmem:[#allocation7 + $0x168] sm:$0xff]
    %v2333 = vld [vmem:[#allocation7 + $0x170] sm:$0xff]
    %v2334 = vld [vmem:[#allocation7 + $0x178] sm:$0xff]
    %v2335 = vld [vmem:[#allocation7 + $0x180] sm:$0xff]
    %v2336 = vld [vmem:[#allocation7 + $0x188] sm:$0xff]
    %v2337 = vld [vmem:[#allocation7 + $0x190] sm:$0xff]
    %v2338 = vld [vmem:[#allocation7 + $0x198] sm:$0xff]
    %v2339 = vld [vmem:[#allocation7 + $0x1a0] sm:$0xff]
    %v2340 = vld [vmem:[#allocation7 + $0x1a8] sm:$0xff]
    %v2341 = vld [vmem:[#allocation7 + $0x1b0] sm:$0xff]
    %v2342 = vld [vmem:[#allocation7 + $0x1b8] sm:$0xff]
    %v2343 = vld [vmem:[#allocation7 + $0x1c0] sm:$0xff]
    %v2344 = vld [vmem:[#allocation7 + $0x1c8] sm:$0xff]
    %v2345 = vld [vmem:[#allocation7 + $0x1d0] sm:$0xff]
    %v2346 = vld [vmem:[#allocation7 + $0x1d8] sm:$0xff]
    %v2347 = vld [vmem:[#allocation7 + $0x1e0] sm:$0xff]
    %v2348 = vld [vmem:[#allocation7 + $0x1e8] sm:$0xff]
    %v2349 = vld [vmem:[#allocation7 + $0x1f0] sm:$0xff]
    %v2350 = vld [vmem:[#allocation7 + $0x1f8] sm:$0xff]
    %v2351 = vld [vmem:[#allocation7 + $0x200] sm:$0xff]
    %v2352 = vld [vmem:[#allocation7 + $0x208] sm:$0xff]
    %v2353 = vld [vmem:[#allocation7 + $0x210] sm:$0xff]
    %v2354 = vld [vmem:[#allocation7 + $0x218] sm:$0xff]
    %v2355 = vld [vmem:[#allocation7 + $0x220] sm:$0xff]
    %v2356 = vld [vmem:[#allocation7 + $0x228] sm:$0xff]
    %v2357 = vld [vmem:[#allocation7 + $0x230] sm:$0xff]
    %v2358 = vld [vmem:[#allocation7 + $0x238] sm:$0xff]
    %v2359 = vld [vmem:[#allocation7 + $0x240] sm:$0xff]
    %v2360 = vld [vmem:[#allocation7 + $0x248] sm:$0xff]
    %v2361 = vld [vmem:[#allocation7 + $0x250] sm:$0xff]
    %v2362 = vld [vmem:[#allocation7 + $0x258] sm:$0xff]
    %v2363 = vld [vmem:[#allocation7 + $0x260] sm:$0xff]
    %v2364 = vld [vmem:[#allocation7 + $0x268] sm:$0xff]
    %v2365 = vld [vmem:[#allocation7 + $0x270] sm:$0xff]
    %v2366 = vld [vmem:[#allocation7 + $0x278] sm:$0xff]
    %v2367 = vld [vmem:[#allocation7 + $0x280] sm:$0xff]
    %v2368 = vld [vmem:[#allocation7 + $0x288] sm:$0xff]
    %v2369 = vld [vmem:[#allocation7 + $0x290] sm:$0xff]
    %v2370 = vld [vmem:[#allocation7 + $0x298] sm:$0xff]
    %v2371 = vld [vmem:[#allocation7 + $0x2a0] sm:$0xff]
    %v2372 = vld [vmem:[#allocation7 + $0x2a8] sm:$0xff]
    %v2373 = vld [vmem:[#allocation7 + $0x2b0] sm:$0xff]
    %v2374 = vld [vmem:[#allocation7 + $0x2b8] sm:$0xff]
    %v2375 = vld [vmem:[#allocation7 + $0x2c0] sm:$0xff]
    %v2376 = vld [vmem:[#allocation7 + $0x2c8] sm:$0xff]
    %v2377 = vld [vmem:[#allocation7 + $0x2d0] sm:$0xff]
    %v2378 = vld [vmem:[#allocation7 + $0x2d8] sm:$0xff]
    %v2379 = vld [vmem:[#allocation7 + $0x2e0] sm:$0xff]
    %v2380 = vld [vmem:[#allocation7 + $0x2e8] sm:$0xff]
    %v2381 = vld [vmem:[#allocation7 + $0x2f0] sm:$0xff]
    %v2382 = vld [vmem:[#allocation7 + $0x2f8] sm:$0xff]
    %v2383 = vld [vmem:[#allocation7 + $0x300] sm:$0xff]
    %v2384 = vld [vmem:[#allocation7 + $0x308] sm:$0xff]
    %v2385 = vld [vmem:[#allocation7 + $0x310] sm:$0xff]
    %v2386 = vld [vmem:[#allocation7 + $0x318] sm:$0xff]
    %v2387 = vld [vmem:[#allocation7 + $0x320] sm:$0xff]
    %v2388 = vld [vmem:[#allocation7 + $0x328] sm:$0xff]
    %v2389 = vld [vmem:[#allocation7 + $0x330] sm:$0xff]
    %v2390 = vld [vmem:[#allocation7 + $0x338] sm:$0xff]
    %v2391 = vld [vmem:[#allocation7 + $0x340] sm:$0xff]
    %v2392 = vld [vmem:[#allocation7 + $0x348] sm:$0xff]
    %v2393 = vld [vmem:[#allocation7 + $0x350] sm:$0xff]
    %v2394 = vld [vmem:[#allocation7 + $0x358] sm:$0xff]
    %v2395 = vld [vmem:[#allocation7 + $0x360] sm:$0xff]
    %v2396 = vld [vmem:[#allocation7 + $0x368] sm:$0xff]
    %v2397 = vld [vmem:[#allocation7 + $0x370] sm:$0xff]
    %v2398 = vld [vmem:[#allocation7 + $0x378] sm:$0xff]
    %v2399 = vld [vmem:[#allocation7 + $0x380] sm:$0xff]
    %v2400 = vld [vmem:[#allocation7 + $0x388] sm:$0xff]
    %v2401 = vld [vmem:[#allocation7 + $0x390] sm:$0xff]
    %v2402 = vld [vmem:[#allocation7 + $0x398] sm:$0xff]
    %v2403 = vld [vmem:[#allocation7 + $0x3a0] sm:$0xff]
    %v2404 = vld [vmem:[#allocation7 + $0x3a8] sm:$0xff]
    %v2405 = vld [vmem:[#allocation7 + $0x3b0] sm:$0xff]
    %v2406 = vld [vmem:[#allocation7 + $0x3b8] sm:$0xff]
    %v2407 = vld [vmem:[#allocation7 + $0x3c0] sm:$0xff]
    %v2408 = vld [vmem:[#allocation7 + $0x3c8] sm:$0xff]
    %v2409 = vld [vmem:[#allocation7 + $0x3d0] sm:$0xff]
    %v2410 = vld [vmem:[#allocation7 + $0x3d8] sm:$0xff]
    %v2411 = vld [vmem:[#allocation7 + $0x3e0] sm:$0xff]
    %v2412 = vld [vmem:[#allocation7 + $0x3e8] sm:$0xff]
    %v2413 = vld [vmem:[#allocation7 + $0x3f0] sm:$0xff]
    %v2414 = vld [vmem:[#allocation7 + $0x3f8] sm:$0xff]
    %v2415 = vld [vmem:[#allocation7 + $0x400] sm:$0xff]
    %v2416 = vld [vmem:[#allocation7 + $0x408] sm:$0xff]
    %v2417 = vld [vmem:[#allocation7 + $0x410] sm:$0xff]
    %v2418 = vld [vmem:[#allocation7 + $0x418] sm:$0xff]
    %v2419 = vld [vmem:[#allocation7 + $0x420] sm:$0xff]
    %v2420 = vld [vmem:[#allocation7 + $0x428] sm:$0xff]
    %v2421 = vld [vmem:[#allocation7 + $0x430] sm:$0xff]
    %v2422 = vld [vmem:[#allocation7 + $0x438] sm:$0xff]
    %v2423 = vld [vmem:[#allocation7 + $0x440] sm:$0xff]
    %v2424 = vld [vmem:[#allocation7 + $0x448] sm:$0xff]
    %v2425 = vld [vmem:[#allocation7 + $0x450] sm:$0xff]
    %v2426 = vld [vmem:[#allocation7 + $0x458] sm:$0xff]
    %v2427 = vld [vmem:[#allocation7 + $0x460] sm:$0xff]
    %v2428 = vld [vmem:[#allocation7 + $0x468] sm:$0xff]
    %v2429 = vld [vmem:[#allocation7 + $0x470] sm:$0xff]
    %v2430 = vld [vmem:[#allocation7 + $0x478] sm:$0xff]
    %v2431 = vld [vmem:[#allocation7 + $0x480] sm:$0xff]
    %v2432 = vld [vmem:[#allocation7 + $0x488] sm:$0xff]
    %v2433 = vld [vmem:[#allocation7 + $0x490] sm:$0xff]
    %v2434 = vld [vmem:[#allocation7 + $0x498] sm:$0xff]
    %v2435 = vld [vmem:[#allocation7 + $0x4a0] sm:$0xff]
    %v2436 = vld [vmem:[#allocation7 + $0x4a8] sm:$0xff]
    %v2437 = vld [vmem:[#allocation7 + $0x4b0] sm:$0xff]
    %v2438 = vld [vmem:[#allocation7 + $0x4b8] sm:$0xff]
    %v2439 = vld [vmem:[#allocation7 + $0x4c0] sm:$0xff]
    %v2440 = vld [vmem:[#allocation7 + $0x4c8] sm:$0xff]
    %v2441 = vld [vmem:[#allocation7 + $0x4d0] sm:$0xff]
    %v2442 = vld [vmem:[#allocation7 + $0x4d8] sm:$0xff]
    %v2443 = vld [vmem:[#allocation7 + $0x4e0] sm:$0xff]
    %v2444 = vld [vmem:[#allocation7 + $0x4e8] sm:$0xff]
    %v2445 = vld [vmem:[#allocation7 + $0x4f0] sm:$0xff]
    %v2446 = vld [vmem:[#allocation7 + $0x4f8] sm:$0xff]
    %v2447 = vld [vmem:[%s4] sm:$0xf]
    %v2449 = vlaneseq
    %v2450 = vshrl.u32 %v2449, 7
    %v2451 = vsub.s32 0, %v2450
    %v2452 = vrot.slane %v2447, %v2451
    %v2453 = vlaneseq
    %v2454 = vshrl.u32 %v2453, 7
    %v2455 = vsub.s32 1, %v2454
    %v2456 = vrot.slane %v2447, %v2455
    %v2457 = vlaneseq
    %v2458 = vshrl.u32 %v2457, 7
    %v2459 = vsub.s32 2, %v2458
    %v2460 = vrot.slane %v2447, %v2459
    %v2461 = vlaneseq
    %v2462 = vshrl.u32 %v2461, 7
    %v2463 = vsub.s32 3, %v2462
    %v2464 = vrot.slane %v2447, %v2463
    %v2629 = vunpack.c.l.b16 %v2287
    %v2630 = vunpack.c.h.b16 %v2287
    %v2631 = vunpack.c.l.b16 %v2288
    %v2632 = vunpack.c.h.b16 %v2288
    %v2633 = vunpack.c.l.b16 %v2289
    %v2634 = vunpack.c.h.b16 %v2289
    %v2635 = vunpack.c.l.b16 %v2290
    %v2636 = vunpack.c.h.b16 %v2290
    %v2637 = vunpack.c.l.b16 %v2291
    %v2638 = vunpack.c.h.b16 %v2291
    %v2639 = vunpack.c.l.b16 %v2292
    %v2640 = vunpack.c.h.b16 %v2292
    %v2641 = vunpack.c.l.b16 %v2293
    %v2642 = vunpack.c.h.b16 %v2293
    %v2643 = vunpack.c.l.b16 %v2294
    %v2644 = vunpack.c.h.b16 %v2294
    %v2645 = vunpack.c.l.b16 %v2295
    %v2646 = vunpack.c.h.b16 %v2295
    %v2647 = vunpack.c.l.b16 %v2296
    %v2648 = vunpack.c.h.b16 %v2296
    %v2649 = vunpack.c.l.b16 %v2297
    %v2650 = vunpack.c.h.b16 %v2297
    %v2651 = vunpack.c.l.b16 %v2298
    %v2652 = vunpack.c.h.b16 %v2298
    %v2653 = vunpack.c.l.b16 %v2299
    %v2654 = vunpack.c.h.b16 %v2299
    %v2655 = vunpack.c.l.b16 %v2300
    %v2656 = vunpack.c.h.b16 %v2300
    %v2657 = vunpack.c.l.b16 %v2301
    %v2658 = vunpack.c.h.b16 %v2301
    %v2659 = vunpack.c.l.b16 %v2302
    %v2660 = vunpack.c.h.b16 %v2302
    %v2661 = vunpack.c.l.b16 %v2303
    %v2662 = vunpack.c.h.b16 %v2303
    %v2663 = vunpack.c.l.b16 %v2304
    %v2664 = vunpack.c.h.b16 %v2304
    %v2665 = vunpack.c.l.b16 %v2305
    %v2666 = vunpack.c.h.b16 %v2305
    %v2667 = vunpack.c.l.b16 %v2306
    %v2668 = vunpack.c.h.b16 %v2306
    %v2669 = vunpack.c.l.b16 %v2307
    %v2670 = vunpack.c.h.b16 %v2307
    %v2671 = vunpack.c.l.b16 %v2308
    %v2672 = vunpack.c.h.b16 %v2308
    %v2673 = vunpack.c.l.b16 %v2309
    %v2674 = vunpack.c.h.b16 %v2309
    %v2675 = vunpack.c.l.b16 %v2310
    %v2676 = vunpack.c.h.b16 %v2310
    %v2677 = vunpack.c.l.b16 %v2311
    %v2678 = vunpack.c.h.b16 %v2311
    %v2679 = vunpack.c.l.b16 %v2312
    %v2680 = vunpack.c.h.b16 %v2312
    %v2681 = vunpack.c.l.b16 %v2313
    %v2682 = vunpack.c.h.b16 %v2313
    %v2683 = vunpack.c.l.b16 %v2314
    %v2684 = vunpack.c.h.b16 %v2314
    %v2685 = vunpack.c.l.b16 %v2315
    %v2686 = vunpack.c.h.b16 %v2315
    %v2687 = vunpack.c.l.b16 %v2316
    %v2688 = vunpack.c.h.b16 %v2316
    %v2689 = vunpack.c.l.b16 %v2317
    %v2690 = vunpack.c.h.b16 %v2317
    %v2691 = vunpack.c.l.b16 %v2318
    %v2692 = vunpack.c.h.b16 %v2318
    %v2693 = vunpack.c.l.b16 %v2319
    %v2694 = vunpack.c.h.b16 %v2319
    %v2695 = vunpack.c.l.b16 %v2320
    %v2696 = vunpack.c.h.b16 %v2320
    %v2697 = vunpack.c.l.b16 %v2321
    %v2698 = vunpack.c.h.b16 %v2321
    %v2699 = vunpack.c.l.b16 %v2322
    %v2700 = vunpack.c.h.b16 %v2322
    %v2701 = vunpack.c.l.b16 %v2323
    %v2702 = vunpack.c.h.b16 %v2323
    %v2703 = vunpack.c.l.b16 %v2324
    %v2704 = vunpack.c.h.b16 %v2324
    %v2705 = vunpack.c.l.b16 %v2325
    %v2706 = vunpack.c.h.b16 %v2325
    %v2707 = vunpack.c.l.b16 %v2326
    %v2708 = vunpack.c.h.b16 %v2326
    %v2709 = vunpack.c.l.b16 %v2327
    %v2710 = vunpack.c.h.b16 %v2327
    %v2711 = vunpack.c.l.b16 %v2328
    %v2712 = vunpack.c.h.b16 %v2328
    %v2713 = vunpack.c.l.b16 %v2329
    %v2714 = vunpack.c.h.b16 %v2329
    %v2715 = vunpack.c.l.b16 %v2330
    %v2716 = vunpack.c.h.b16 %v2330
    %v2717 = vunpack.c.l.b16 %v2331
    %v2718 = vunpack.c.h.b16 %v2331
    %v2719 = vunpack.c.l.b16 %v2332
    %v2720 = vunpack.c.h.b16 %v2332
    %v2721 = vunpack.c.l.b16 %v2333
    %v2722 = vunpack.c.h.b16 %v2333
    %v2723 = vunpack.c.l.b16 %v2334
    %v2724 = vunpack.c.h.b16 %v2334
    %v2725 = vunpack.c.l.b16 %v2335
    %v2726 = vunpack.c.h.b16 %v2335
    %v2727 = vunpack.c.l.b16 %v2336
    %v2728 = vunpack.c.h.b16 %v2336
    %v2729 = vunpack.c.l.b16 %v2337
    %v2730 = vunpack.c.h.b16 %v2337
    %v2731 = vunpack.c.l.b16 %v2338
    %v2732 = vunpack.c.h.b16 %v2338
    %v2733 = vunpack.c.l.b16 %v2339
    %v2734 = vunpack.c.h.b16 %v2339
    %v2735 = vunpack.c.l.b16 %v2340
    %v2736 = vunpack.c.h.b16 %v2340
    %v2737 = vunpack.c.l.b16 %v2341
    %v2738 = vunpack.c.h.b16 %v2341
    %v2739 = vunpack.c.l.b16 %v2342
    %v2740 = vunpack.c.h.b16 %v2342
    %v2741 = vunpack.c.l.b16 %v2343
    %v2742 = vunpack.c.h.b16 %v2343
    %v2743 = vunpack.c.l.b16 %v2344
    %v2744 = vunpack.c.h.b16 %v2344
    %v2745 = vunpack.c.l.b16 %v2345
    %v2746 = vunpack.c.h.b16 %v2345
    %v2747 = vunpack.c.l.b16 %v2346
    %v2748 = vunpack.c.h.b16 %v2346
    %v2749 = vunpack.c.l.b16 %v2347
    %v2750 = vunpack.c.h.b16 %v2347
    %v2751 = vunpack.c.l.b16 %v2348
    %v2752 = vunpack.c.h.b16 %v2348
    %v2753 = vunpack.c.l.b16 %v2349
    %v2754 = vunpack.c.h.b16 %v2349
    %v2755 = vunpack.c.l.b16 %v2350
    %v2756 = vunpack.c.h.b16 %v2350
    %v2757 = vunpack.c.l.b16 %v2351
    %v2758 = vunpack.c.h.b16 %v2351
    %v2759 = vunpack.c.l.b16 %v2352
    %v2760 = vunpack.c.h.b16 %v2352
    %v2761 = vunpack.c.l.b16 %v2353
    %v2762 = vunpack.c.h.b16 %v2353
    %v2763 = vunpack.c.l.b16 %v2354
    %v2764 = vunpack.c.h.b16 %v2354
    %v2765 = vunpack.c.l.b16 %v2355
    %v2766 = vunpack.c.h.b16 %v2355
    %v2767 = vunpack.c.l.b16 %v2356
    %v2768 = vunpack.c.h.b16 %v2356
    %v2769 = vunpack.c.l.b16 %v2357
    %v2770 = vunpack.c.h.b16 %v2357
    %v2771 = vunpack.c.l.b16 %v2358
    %v2772 = vunpack.c.h.b16 %v2358
    %v2773 = vunpack.c.l.b16 %v2359
    %v2774 = vunpack.c.h.b16 %v2359
    %v2775 = vunpack.c.l.b16 %v2360
    %v2776 = vunpack.c.h.b16 %v2360
    %v2777 = vunpack.c.l.b16 %v2361
    %v2778 = vunpack.c.h.b16 %v2361
    %v2779 = vunpack.c.l.b16 %v2362
    %v2780 = vunpack.c.h.b16 %v2362
    %v2781 = vunpack.c.l.b16 %v2363
    %v2782 = vunpack.c.h.b16 %v2363
    %v2783 = vunpack.c.l.b16 %v2364
    %v2784 = vunpack.c.h.b16 %v2364
    %v2785 = vunpack.c.l.b16 %v2365
    %v2786 = vunpack.c.h.b16 %v2365
    %v2787 = vunpack.c.l.b16 %v2366
    %v2788 = vunpack.c.h.b16 %v2366
    %v2789 = vunpack.c.l.b16 %v2367
    %v2790 = vunpack.c.h.b16 %v2367
    %v2791 = vunpack.c.l.b16 %v2368
    %v2792 = vunpack.c.h.b16 %v2368
    %v2793 = vunpack.c.l.b16 %v2369
    %v2794 = vunpack.c.h.b16 %v2369
    %v2795 = vunpack.c.l.b16 %v2370
    %v2796 = vunpack.c.h.b16 %v2370
    %v2797 = vunpack.c.l.b16 %v2371
    %v2798 = vunpack.c.h.b16 %v2371
    %v2799 = vunpack.c.l.b16 %v2372
    %v2800 = vunpack.c.h.b16 %v2372
    %v2801 = vunpack.c.l.b16 %v2373
    %v2802 = vunpack.c.h.b16 %v2373
    %v2803 = vunpack.c.l.b16 %v2374
    %v2804 = vunpack.c.h.b16 %v2374
    %v2805 = vunpack.c.l.b16 %v2375
    %v2806 = vunpack.c.h.b16 %v2375
    %v2807 = vunpack.c.l.b16 %v2376
    %v2808 = vunpack.c.h.b16 %v2376
    %v2809 = vunpack.c.l.b16 %v2377
    %v2810 = vunpack.c.h.b16 %v2377
    %v2811 = vunpack.c.l.b16 %v2378
    %v2812 = vunpack.c.h.b16 %v2378
    %v2813 = vunpack.c.l.b16 %v2379
    %v2814 = vunpack.c.h.b16 %v2379
    %v2815 = vunpack.c.l.b16 %v2380
    %v2816 = vunpack.c.h.b16 %v2380
    %v2817 = vunpack.c.l.b16 %v2381
    %v2818 = vunpack.c.h.b16 %v2381
    %v2819 = vunpack.c.l.b16 %v2382
    %v2820 = vunpack.c.h.b16 %v2382
    %v2821 = vunpack.c.l.b16 %v2383
    %v2822 = vunpack.c.h.b16 %v2383
    %v2823 = vunpack.c.l.b16 %v2384
    %v2824 = vunpack.c.h.b16 %v2384
    %v2825 = vunpack.c.l.b16 %v2385
    %v2826 = vunpack.c.h.b16 %v2385
    %v2827 = vunpack.c.l.b16 %v2386
    %v2828 = vunpack.c.h.b16 %v2386
    %v2829 = vunpack.c.l.b16 %v2387
    %v2830 = vunpack.c.h.b16 %v2387
    %v2831 = vunpack.c.l.b16 %v2388
    %v2832 = vunpack.c.h.b16 %v2388
    %v2833 = vunpack.c.l.b16 %v2389
    %v2834 = vunpack.c.h.b16 %v2389
    %v2835 = vunpack.c.l.b16 %v2390
    %v2836 = vunpack.c.h.b16 %v2390
    %v2837 = vunpack.c.l.b16 %v2391
    %v2838 = vunpack.c.h.b16 %v2391
    %v2839 = vunpack.c.l.b16 %v2392
    %v2840 = vunpack.c.h.b16 %v2392
    %v2841 = vunpack.c.l.b16 %v2393
    %v2842 = vunpack.c.h.b16 %v2393
    %v2843 = vunpack.c.l.b16 %v2394
    %v2844 = vunpack.c.h.b16 %v2394
    %v2845 = vunpack.c.l.b16 %v2395
    %v2846 = vunpack.c.h.b16 %v2395
    %v2847 = vunpack.c.l.b16 %v2396
    %v2848 = vunpack.c.h.b16 %v2396
    %v2849 = vunpack.c.l.b16 %v2397
    %v2850 = vunpack.c.h.b16 %v2397
    %v2851 = vunpack.c.l.b16 %v2398
    %v2852 = vunpack.c.h.b16 %v2398
    %v2853 = vunpack.c.l.b16 %v2399
    %v2854 = vunpack.c.h.b16 %v2399
    %v2855 = vunpack.c.l.b16 %v2400
    %v2856 = vunpack.c.h.b16 %v2400
    %v2857 = vunpack.c.l.b16 %v2401
    %v2858 = vunpack.c.h.b16 %v2401
    %v2859 = vunpack.c.l.b16 %v2402
    %v2860 = vunpack.c.h.b16 %v2402
    %v2861 = vunpack.c.l.b16 %v2403
    %v2862 = vunpack.c.h.b16 %v2403
    %v2863 = vunpack.c.l.b16 %v2404
    %v2864 = vunpack.c.h.b16 %v2404
    %v2865 = vunpack.c.l.b16 %v2405
    %v2866 = vunpack.c.h.b16 %v2405
    %v2867 = vunpack.c.l.b16 %v2406
    %v2868 = vunpack.c.h.b16 %v2406
    %v2869 = vunpack.c.l.b16 %v2407
    %v2870 = vunpack.c.h.b16 %v2407
    %v2871 = vunpack.c.l.b16 %v2408
    %v2872 = vunpack.c.h.b16 %v2408
    %v2873 = vunpack.c.l.b16 %v2409
    %v2874 = vunpack.c.h.b16 %v2409
    %v2875 = vunpack.c.l.b16 %v2410
    %v2876 = vunpack.c.h.b16 %v2410
    %v2877 = vunpack.c.l.b16 %v2411
    %v2878 = vunpack.c.h.b16 %v2411
    %v2879 = vunpack.c.l.b16 %v2412
    %v2880 = vunpack.c.h.b16 %v2412
    %v2881 = vunpack.c.l.b16 %v2413
    %v2882 = vunpack.c.h.b16 %v2413
    %v2883 = vunpack.c.l.b16 %v2414
    %v2884 = vunpack.c.h.b16 %v2414
    %v2885 = vunpack.c.l.b16 %v2415
    %v2886 = vunpack.c.h.b16 %v2415
    %v2887 = vunpack.c.l.b16 %v2416
    %v2888 = vunpack.c.h.b16 %v2416
    %v2889 = vunpack.c.l.b16 %v2417
    %v2890 = vunpack.c.h.b16 %v2417
    %v2891 = vunpack.c.l.b16 %v2418
    %v2892 = vunpack.c.h.b16 %v2418
    %v2893 = vunpack.c.l.b16 %v2419
    %v2894 = vunpack.c.h.b16 %v2419
    %v2895 = vunpack.c.l.b16 %v2420
    %v2896 = vunpack.c.h.b16 %v2420
    %v2897 = vunpack.c.l.b16 %v2421
    %v2898 = vunpack.c.h.b16 %v2421
    %v2899 = vunpack.c.l.b16 %v2422
    %v2900 = vunpack.c.h.b16 %v2422
    %v2901 = vunpack.c.l.b16 %v2423
    %v2902 = vunpack.c.h.b16 %v2423
    %v2903 = vunpack.c.l.b16 %v2424
    %v2904 = vunpack.c.h.b16 %v2424
    %v2905 = vunpack.c.l.b16 %v2425
    %v2906 = vunpack.c.h.b16 %v2425
    %v2907 = vunpack.c.l.b16 %v2426
    %v2908 = vunpack.c.h.b16 %v2426
    %v2909 = vunpack.c.l.b16 %v2427
    %v2910 = vunpack.c.h.b16 %v2427
    %v2911 = vunpack.c.l.b16 %v2428
    %v2912 = vunpack.c.h.b16 %v2428
    %v2913 = vunpack.c.l.b16 %v2429
    %v2914 = vunpack.c.h.b16 %v2429
    %v2915 = vunpack.c.l.b16 %v2430
    %v2916 = vunpack.c.h.b16 %v2430
    %v2917 = vunpack.c.l.b16 %v2431
    %v2918 = vunpack.c.h.b16 %v2431
    %v2919 = vunpack.c.l.b16 %v2432
    %v2920 = vunpack.c.h.b16 %v2432
    %v2921 = vunpack.c.l.b16 %v2433
    %v2922 = vunpack.c.h.b16 %v2433
    %v2923 = vunpack.c.l.b16 %v2434
    %v2924 = vunpack.c.h.b16 %v2434
    %v2925 = vunpack.c.l.b16 %v2435
    %v2926 = vunpack.c.h.b16 %v2435
    %v2927 = vunpack.c.l.b16 %v2436
    %v2928 = vunpack.c.h.b16 %v2436
    %v2929 = vunpack.c.l.b16 %v2437
    %v2930 = vunpack.c.h.b16 %v2437
    %v2931 = vunpack.c.l.b16 %v2438
    %v2932 = vunpack.c.h.b16 %v2438
    %v2933 = vunpack.c.l.b16 %v2439
    %v2934 = vunpack.c.h.b16 %v2439
    %v2935 = vunpack.c.l.b16 %v2440
    %v2936 = vunpack.c.h.b16 %v2440
    %v2937 = vunpack.c.l.b16 %v2441
    %v2938 = vunpack.c.h.b16 %v2441
    %v2939 = vunpack.c.l.b16 %v2442
    %v2940 = vunpack.c.h.b16 %v2442
    %v2941 = vunpack.c.l.b16 %v2443
    %v2942 = vunpack.c.h.b16 %v2443
    %v2943 = vunpack.c.l.b16 %v2444
    %v2944 = vunpack.c.h.b16 %v2444
    %v2945 = vunpack.c.l.b16 %v2445
    %v2946 = vunpack.c.h.b16 %v2445
    %v2947 = vunpack.c.l.b16 %v2446
    %v2948 = vunpack.c.h.b16 %v2446
    %v2949 = vpack.c.b16 %v2633, %v2629
    %v2950 = vpack.c.b16 %v2634, %v2630
    %v2951 = vpack.c.b16 %v2635, %v2631
    %v2952 = vpack.c.b16 %v2636, %v2632
    %v2953 = vpack.c.b16 %v2641, %v2637
    %v2954 = vpack.c.b16 %v2642, %v2638
    %v2955 = vpack.c.b16 %v2643, %v2639
    %v2956 = vpack.c.b16 %v2644, %v2640
    %v2957 = vpack.c.b16 %v2649, %v2645
    %v2958 = vpack.c.b16 %v2650, %v2646
    %v2959 = vpack.c.b16 %v2651, %v2647
    %v2960 = vpack.c.b16 %v2652, %v2648
    %v2961 = vpack.c.b16 %v2657, %v2653
    %v2962 = vpack.c.b16 %v2658, %v2654
    %v2963 = vpack.c.b16 %v2659, %v2655
    %v2964 = vpack.c.b16 %v2660, %v2656
    %v2965 = vpack.c.b16 %v2665, %v2661
    %v2966 = vpack.c.b16 %v2666, %v2662
    %v2967 = vpack.c.b16 %v2667, %v2663
    %v2968 = vpack.c.b16 %v2668, %v2664
    %v2969 = vpack.c.b16 %v2673, %v2669
    %v2970 = vpack.c.b16 %v2674, %v2670
    %v2971 = vpack.c.b16 %v2675, %v2671
    %v2972 = vpack.c.b16 %v2676, %v2672
    %v2973 = vpack.c.b16 %v2681, %v2677
    %v2974 = vpack.c.b16 %v2682, %v2678
    %v2975 = vpack.c.b16 %v2683, %v2679
    %v2976 = vpack.c.b16 %v2684, %v2680
    %v2977 = vpack.c.b16 %v2689, %v2685
    %v2978 = vpack.c.b16 %v2690, %v2686
    %v2979 = vpack.c.b16 %v2691, %v2687
    %v2980 = vpack.c.b16 %v2692, %v2688
    %v2981 = vpack.c.b16 %v2697, %v2693
    %v2982 = vpack.c.b16 %v2698, %v2694
    %v2983 = vpack.c.b16 %v2699, %v2695
    %v2984 = vpack.c.b16 %v2700, %v2696
    %v2985 = vpack.c.b16 %v2705, %v2701
    %v2986 = vpack.c.b16 %v2706, %v2702
    %v2987 = vpack.c.b16 %v2707, %v2703
    %v2988 = vpack.c.b16 %v2708, %v2704
    %v2989 = vpack.c.b16 %v2713, %v2709
    %v2990 = vpack.c.b16 %v2714, %v2710
    %v2991 = vpack.c.b16 %v2715, %v2711
    %v2992 = vpack.c.b16 %v2716, %v2712
    %v2993 = vpack.c.b16 %v2721, %v2717
    %v2994 = vpack.c.b16 %v2722, %v2718
    %v2995 = vpack.c.b16 %v2723, %v2719
    %v2996 = vpack.c.b16 %v2724, %v2720
    %v2997 = vpack.c.b16 %v2729, %v2725
    %v2998 = vpack.c.b16 %v2730, %v2726
    %v2999 = vpack.c.b16 %v2731, %v2727
    %v3000 = vpack.c.b16 %v2732, %v2728
    %v3001 = vpack.c.b16 %v2737, %v2733
    %v3002 = vpack.c.b16 %v2738, %v2734
    %v3003 = vpack.c.b16 %v2739, %v2735
    %v3004 = vpack.c.b16 %v2740, %v2736
    %v3005 = vpack.c.b16 %v2745, %v2741
    %v3006 = vpack.c.b16 %v2746, %v2742
    %v3007 = vpack.c.b16 %v2747, %v2743
    %v3008 = vpack.c.b16 %v2748, %v2744
    %v3009 = vpack.c.b16 %v2753, %v2749
    %v3010 = vpack.c.b16 %v2754, %v2750
    %v3011 = vpack.c.b16 %v2755, %v2751
    %v3012 = vpack.c.b16 %v2756, %v2752
    %v3013 = vpack.c.b16 %v2761, %v2757
    %v3014 = vpack.c.b16 %v2762, %v2758
    %v3015 = vpack.c.b16 %v2763, %v2759
    %v3016 = vpack.c.b16 %v2764, %v2760
    %v3017 = vpack.c.b16 %v2769, %v2765
    %v3018 = vpack.c.b16 %v2770, %v2766
    %v3019 = vpack.c.b16 %v2771, %v2767
    %v3020 = vpack.c.b16 %v2772, %v2768
    %v3021 = vpack.c.b16 %v2777, %v2773
    %v3022 = vpack.c.b16 %v2778, %v2774
    %v3023 = vpack.c.b16 %v2779, %v2775
    %v3024 = vpack.c.b16 %v2780, %v2776
    %v3025 = vpack.c.b16 %v2785, %v2781
    %v3026 = vpack.c.b16 %v2786, %v2782
    %v3027 = vpack.c.b16 %v2787, %v2783
    %v3028 = vpack.c.b16 %v2788, %v2784
    %v3029 = vpack.c.b16 %v2793, %v2789
    %v3030 = vpack.c.b16 %v2794, %v2790
    %v3031 = vpack.c.b16 %v2795, %v2791
    %v3032 = vpack.c.b16 %v2796, %v2792
    %v3033 = vpack.c.b16 %v2801, %v2797
    %v3034 = vpack.c.b16 %v2802, %v2798
    %v3035 = vpack.c.b16 %v2803, %v2799
    %v3036 = vpack.c.b16 %v2804, %v2800
    %v3037 = vpack.c.b16 %v2809, %v2805
    %v3038 = vpack.c.b16 %v2810, %v2806
    %v3039 = vpack.c.b16 %v2811, %v2807
    %v3040 = vpack.c.b16 %v2812, %v2808
    %v3041 = vpack.c.b16 %v2817, %v2813
    %v3042 = vpack.c.b16 %v2818, %v2814
    %v3043 = vpack.c.b16 %v2819, %v2815
    %v3044 = vpack.c.b16 %v2820, %v2816
    %v3045 = vpack.c.b16 %v2825, %v2821
    %v3046 = vpack.c.b16 %v2826, %v2822
    %v3047 = vpack.c.b16 %v2827, %v2823
    %v3048 = vpack.c.b16 %v2828, %v2824
    %v3049 = vpack.c.b16 %v2833, %v2829
    %v3050 = vpack.c.b16 %v2834, %v2830
    %v3051 = vpack.c.b16 %v2835, %v2831
    %v3052 = vpack.c.b16 %v2836, %v2832
    %v3053 = vpack.c.b16 %v2841, %v2837
    %v3054 = vpack.c.b16 %v2842, %v2838
    %v3055 = vpack.c.b16 %v2843, %v2839
    %v3056 = vpack.c.b16 %v2844, %v2840
    %v3057 = vpack.c.b16 %v2849, %v2845
    %v3058 = vpack.c.b16 %v2850, %v2846
    %v3059 = vpack.c.b16 %v2851, %v2847
    %v3060 = vpack.c.b16 %v2852, %v2848
    %v3061 = vpack.c.b16 %v2857, %v2853
    %v3062 = vpack.c.b16 %v2858, %v2854
    %v3063 = vpack.c.b16 %v2859, %v2855
    %v3064 = vpack.c.b16 %v2860, %v2856
    %v3065 = vpack.c.b16 %v2865, %v2861
    %v3066 = vpack.c.b16 %v2866, %v2862
    %v3067 = vpack.c.b16 %v2867, %v2863
    %v3068 = vpack.c.b16 %v2868, %v2864
    %v3069 = vpack.c.b16 %v2873, %v2869
    %v3070 = vpack.c.b16 %v2874, %v2870
    %v3071 = vpack.c.b16 %v2875, %v2871
    %v3072 = vpack.c.b16 %v2876, %v2872
    %v3073 = vpack.c.b16 %v2881, %v2877
    %v3074 = vpack.c.b16 %v2882, %v2878
    %v3075 = vpack.c.b16 %v2883, %v2879
    %v3076 = vpack.c.b16 %v2884, %v2880
    %v3077 = vpack.c.b16 %v2889, %v2885
    %v3078 = vpack.c.b16 %v2890, %v2886
    %v3079 = vpack.c.b16 %v2891, %v2887
    %v3080 = vpack.c.b16 %v2892, %v2888
    %v3081 = vpack.c.b16 %v2897, %v2893
    %v3082 = vpack.c.b16 %v2898, %v2894
    %v3083 = vpack.c.b16 %v2899, %v2895
    %v3084 = vpack.c.b16 %v2900, %v2896
    %v3085 = vpack.c.b16 %v2905, %v2901
    %v3086 = vpack.c.b16 %v2906, %v2902
    %v3087 = vpack.c.b16 %v2907, %v2903
    %v3088 = vpack.c.b16 %v2908, %v2904
    %v3089 = vpack.c.b16 %v2913, %v2909
    %v3090 = vpack.c.b16 %v2914, %v2910
    %v3091 = vpack.c.b16 %v2915, %v2911
    %v3092 = vpack.c.b16 %v2916, %v2912
    %v3093 = vpack.c.b16 %v2921, %v2917
    %v3094 = vpack.c.b16 %v2922, %v2918
    %v3095 = vpack.c.b16 %v2923, %v2919
    %v3096 = vpack.c.b16 %v2924, %v2920
    %v3097 = vpack.c.b16 %v2929, %v2925
    %v3098 = vpack.c.b16 %v2930, %v2926
    %v3099 = vpack.c.b16 %v2931, %v2927
    %v3100 = vpack.c.b16 %v2932, %v2928
    %v3101 = vpack.c.b16 %v2937, %v2933
    %v3102 = vpack.c.b16 %v2938, %v2934
    %v3103 = vpack.c.b16 %v2939, %v2935
    %v3104 = vpack.c.b16 %v2940, %v2936
    %v3105 = vpack.c.b16 %v2945, %v2941
    %v3106 = vpack.c.b16 %v2946, %v2942
    %v3107 = vpack.c.b16 %v2947, %v2943
    %v3108 = vpack.c.b16 %v2948, %v2944
    %3269 = vmatprep.subr.bf16.mxu0 %v2950
    %3270 = vmatpush1.bf16.msra.mxu0 %v2949
    %3271 = vmatprep.subr.bf16.mxu0 %v2954
    %3272 = vmatpush1.bf16.msra.mxu0 %v2953
    %3273 = vmatprep.subr.bf16.mxu0 %v2958
    %3274 = vmatpush1.bf16.msra.mxu0 %v2957
    %3275 = vmatprep.subr.bf16.mxu0 %v2962
    %3276 = vmatpush1.bf16.msra.mxu0 %v2961
    %3277 = vmatprep.subr.bf16.mxu0 %v2966
    %3278 = vmatpush1.bf16.msra.mxu0 %v2965
    %3279 = vmatprep.subr.bf16.mxu0 %v2970
    %3280 = vmatpush1.bf16.msra.mxu0 %v2969
    %3281 = vmatprep.subr.bf16.mxu0 %v2974
    %3282 = vmatpush1.bf16.msra.mxu0 %v2973
    %3283 = vmatprep.subr.bf16.mxu0 %v2978
    %3284 = vmatpush1.bf16.msra.mxu0 %v2977
    %3285 = vmatprep.subr.bf16.mxu0 %v2982
    %3286 = vmatpush1.bf16.msra.mxu0 %v2981
    %3287 = vmatprep.subr.bf16.mxu0 %v2986
    %3288 = vmatpush1.bf16.msra.mxu0 %v2985
    %3289 = vmatprep.subr.bf16.mxu0 %v2990
    %3290 = vmatpush1.bf16.msra.mxu0 %v2989
    %3291 = vmatprep.subr.bf16.mxu0 %v2994
    %3292 = vmatpush1.bf16.msra.mxu0 %v2993
    %3293 = vmatprep.subr.bf16.mxu0 %v2998
    %3294 = vmatpush1.bf16.msra.mxu0 %v2997
    %3295 = vmatprep.subr.bf16.mxu0 %v3002
    %3296 = vmatpush1.bf16.msra.mxu0 %v3001
    %3297 = vmatprep.subr.bf16.mxu0 %v3006
    %3298 = vmatpush1.bf16.msra.mxu0 %v3005
    %3299 = vmatprep.subr.bf16.mxu0 %v3010
    %3300 = vmatpush1.bf16.msra.mxu0 %v3009
    %3301 = vmatprep.mubr.bf16.mxu0 %v2283
    %3302 = vmatmul.mubr.bf16.gmra.mrb[0].mxu0 %v2282
    %v3303 = vpop.f32.mrb[0].mxu0
    %v3304 = vadd.f32 %v2452, %v3303
    %v3305 = vpop.f32.mrb[0].mxu0
    %v3306 = vadd.f32 %v2456, %v3305
    %v3307 = vpop.f32.mrb[0].mxu0
    %v3308 = vadd.f32 %v2452, %v3307
    %v3309 = vpop.f32.mrb[0].mxu0
    %v3310 = vadd.f32 %v2456, %v3309
    %3311 = vdwg.mxu0
    %3312 = vmatprep.subr.bf16.mxu0 %v3014
    %3313 = vmatpush1.bf16.msra.mxu0 %v3013
    %3314 = vmatprep.subr.bf16.mxu0 %v3018
    %3315 = vmatpush1.bf16.msra.mxu0 %v3017
    %3316 = vmatprep.subr.bf16.mxu0 %v3022
    %3317 = vmatpush1.bf16.msra.mxu0 %v3021
    %3318 = vmatprep.subr.bf16.mxu0 %v3026
    %3319 = vmatpush1.bf16.msra.mxu0 %v3025
    %3320 = vmatprep.subr.bf16.mxu0 %v3030
    %3321 = vmatpush1.bf16.msra.mxu0 %v3029
    %3322 = vmatprep.subr.bf16.mxu0 %v3034
    %3323 = vmatpush1.bf16.msra.mxu0 %v3033
    %3324 = vmatprep.subr.bf16.mxu0 %v3038
    %3325 = vmatpush1.bf16.msra.mxu0 %v3037
    %3326 = vmatprep.subr.bf16.mxu0 %v3042
    %3327 = vmatpush1.bf16.msra.mxu0 %v3041
    %3328 = vmatprep.subr.bf16.mxu0 %v3046
    %3329 = vmatpush1.bf16.msra.mxu0 %v3045
    %3330 = vmatprep.subr.bf16.mxu0 %v3050
    %3331 = vmatpush1.bf16.msra.mxu0 %v3049
    %3332 = vmatprep.subr.bf16.mxu0 %v3054
    %3333 = vmatpush1.bf16.msra.mxu0 %v3053
    %3334 = vmatprep.subr.bf16.mxu0 %v3058
    %3335 = vmatpush1.bf16.msra.mxu0 %v3057
    %3336 = vmatprep.subr.bf16.mxu0 %v3062
    %3337 = vmatpush1.bf16.msra.mxu0 %v3061
    %3338 = vmatprep.subr.bf16.mxu0 %v3066
    %3339 = vmatpush1.bf16.msra.mxu0 %v3065
    %3340 = vmatprep.subr.bf16.mxu0 %v3070
    %3341 = vmatpush1.bf16.msra.mxu0 %v3069
    %3342 = vmatprep.subr.bf16.mxu0 %v3074
    %3343 = vmatpush1.bf16.msra.mxu0 %v3073
    %3344 = vmatprep.mubr.bf16.mxu0 %v2285
    %3345 = vmatmul.mubr.bf16.gmra.mrb[0].mxu0 %v2284
    %v3346 = vpop.f32.mrb[0].mxu0
    %v3347 = vadd.f32 %v3304, %v3346
    %v3348 = vpop.f32.mrb[0].mxu0
    %v3349 = vadd.f32 %v3306, %v3348
    %v3350 = vpop.f32.mrb[0].mxu0
    %v3351 = vadd.f32 %v3308, %v3350
    %v3352 = vpop.f32.mrb[0].mxu0
    %v3353 = vadd.f32 %v3310, %v3352
    %3354 = vdwg.mxu0
    %3355 = vmatprep.subr.bf16.mxu0 %v3078
    %3356 = vmatpush1.bf16.msra.mxu0 %v3077
    %3357 = vmatprep.subr.bf16.mxu0 %v3082
    %3358 = vmatpush1.bf16.msra.mxu0 %v3081
    %3359 = vmatprep.subr.bf16.mxu0 %v3086
    %3360 = vmatpush1.bf16.msra.mxu0 %v3085
    %3361 = vmatprep.subr.bf16.mxu0 %v3090
    %3362 = vmatpush1.bf16.msra.mxu0 %v3089
    %3363 = vmatprep.subr.bf16.mxu0 %v3094
    %3364 = vmatpush1.bf16.msra.mxu0 %v3093
    %3365 = vmatprep.subr.bf16.mxu0 %v3098
    %3366 = vmatpush1.bf16.msra.mxu0 %v3097
    %3367 = vmatprep.subr.bf16.mxu0 %v3102
    %3368 = vmatpush1.bf16.msra.mxu0 %v3101
    %3369 = vmatprep.subr.bf16.mxu0 %v3106
    %3370 = vmatpush1.bf16.msra.mxu0 %v3105
    %3371 = vmatprep.subr.bf16.mxu0 0
    %3372 = vmatpush1.bf16.msra.mxu0 0
    %3373 = vmatprep.subr.bf16.mxu0 0
    %3374 = vmatpush1.bf16.msra.mxu0 0
    %3375 = vmatprep.subr.bf16.mxu0 0
    %3376 = vmatpush1.bf16.msra.mxu0 0
    %3377 = vmatprep.subr.bf16.mxu0 0
    %3378 = vmatpush1.bf16.msra.mxu0 0
    %3379 = vmatprep.subr.bf16.mxu0 0
    %3380 = vmatpush1.bf16.msra.mxu0 0
    %3381 = vmatprep.subr.bf16.mxu0 0
    %3382 = vmatpush1.bf16.msra.mxu0 0
    %3383 = vmatprep.subr.bf16.mxu0 0
    %3384 = vmatpush1.bf16.msra.mxu0 0
    %3385 = vmatprep.subr.bf16.mxu0 0
    %3386 = vmatpush1.bf16.msra.mxu0 0
    %3387 = vmatprep.mubr.bf16.mxu0 0
    %3388 = vmatmul.mubr.bf16.gmra.mrb[0].mxu0 %v2286
    %v3389 = vpop.f32.mrb[0].mxu0
    %v3390 = vadd.f32 %v3347, %v3389
    %v3391 = vpop.f32.mrb[0].mxu0
    %v3392 = vadd.f32 %v3349, %v3391
    %v3393 = vpop.f32.mrb[0].mxu0
    %v3394 = vadd.f32 %v3351, %v3393
    %v3395 = vpop.f32.mrb[0].mxu0
    %v3396 = vadd.f32 %v3353, %v3395
    %3397 = vdwg.mxu0
    %3398 = vmatprep.subr.bf16.mxu0 %v2952
    %3399 = vmatpush1.bf16.msra.mxu0 %v2951
    %3400 = vmatprep.subr.bf16.mxu0 %v2956
    %3401 = vmatpush1.bf16.msra.mxu0 %v2955
    %3402 = vmatprep.subr.bf16.mxu0 %v2960
    %3403 = vmatpush1.bf16.msra.mxu0 %v2959
    %3404 = vmatprep.subr.bf16.mxu0 %v2964
    %3405 = vmatpush1.bf16.msra.mxu0 %v2963
    %3406 = vmatprep.subr.bf16.mxu0 %v2968
    %3407 = vmatpush1.bf16.msra.mxu0 %v2967
    %3408 = vmatprep.subr.bf16.mxu0 %v2972
    %3409 = vmatpush1.bf16.msra.mxu0 %v2971
    %3410 = vmatprep.subr.bf16.mxu0 %v2976
    %3411 = vmatpush1.bf16.msra.mxu0 %v2975
    %3412 = vmatprep.subr.bf16.mxu0 %v2980
    %3413 = vmatpush1.bf16.msra.mxu0 %v2979
    %3414 = vmatprep.subr.bf16.mxu0 %v2984
    %3415 = vmatpush1.bf16.msra.mxu0 %v2983
    %3416 = vmatprep.subr.bf16.mxu0 %v2988
    %3417 = vmatpush1.bf16.msra.mxu0 %v2987
    %3418 = vmatprep.subr.bf16.mxu0 %v2992
    %3419 = vmatpush1.bf16.msra.mxu0 %v2991
    %3420 = vmatprep.subr.bf16.mxu0 %v2996
    %3421 = vmatpush1.bf16.msra.mxu0 %v2995
    %3422 = vmatprep.subr.bf16.mxu0 %v3000
    %3423 = vmatpush1.bf16.msra.mxu0 %v2999
    %3424 = vmatprep.subr.bf16.mxu0 %v3004
    %3425 = vmatpush1.bf16.msra.mxu0 %v3003
    %3426 = vmatprep.subr.bf16.mxu0 %v3008
    %3427 = vmatpush1.bf16.msra.mxu0 %v3007
    %3428 = vmatprep.subr.bf16.mxu0 %v3012
    %3429 = vmatpush1.bf16.msra.mxu0 %v3011
    %3430 = vmatprep.mubr.bf16.mxu0 %v2283
    %3431 = vmatmul.mubr.bf16.gmra.mrb[0].mxu0 %v2282
    %v3432 = vpop.f32.mrb[0].mxu0
    %v3433 = vadd.f32 %v2460, %v3432
    %v3434 = vpop.f32.mrb[0].mxu0
    %v3435 = vadd.f32 %v2464, %v3434
    %v3436 = vpop.f32.mrb[0].mxu0
    %v3437 = vadd.f32 %v2460, %v3436
    %v3438 = vpop.f32.mrb[0].mxu0
    %v3439 = vadd.f32 %v2464, %v3438
    %3440 = vdwg.mxu0
    %3441 = vmatprep.subr.bf16.mxu0 %v3016
    %3442 = vmatpush1.bf16.msra.mxu0 %v3015
    %3443 = vmatprep.subr.bf16.mxu0 %v3020
    %3444 = vmatpush1.bf16.msra.mxu0 %v3019
    %3445 = vmatprep.subr.bf16.mxu0 %v3024
    %3446 = vmatpush1.bf16.msra.mxu0 %v3023
    %3447 = vmatprep.subr.bf16.mxu0 %v3028
    %3448 = vmatpush1.bf16.msra.mxu0 %v3027
    %3449 = vmatprep.subr.bf16.mxu0 %v3032
    %3450 = vmatpush1.bf16.msra.mxu0 %v3031
    %3451 = vmatprep.subr.bf16.mxu0 %v3036
    %3452 = vmatpush1.bf16.msra.mxu0 %v3035
    %3453 = vmatprep.subr.bf16.mxu0 %v3040
    %3454 = vmatpush1.bf16.msra.mxu0 %v3039
    %3455 = vmatprep.subr.bf16.mxu0 %v3044
    %3456 = vmatpush1.bf16.msra.mxu0 %v3043
    %3457 = vmatprep.subr.bf16.mxu0 %v3048
    %3458 = vmatpush1.bf16.msra.mxu0 %v3047
    %3459 = vmatprep.subr.bf16.mxu0 %v3052
    %3460 = vmatpush1.bf16.msra.mxu0 %v3051
    %3461 = vmatprep.subr.bf16.mxu0 %v3056
    %3462 = vmatpush1.bf16.msra.mxu0 %v3055
    %3463 = vmatprep.subr.bf16.mxu0 %v3060
    %3464 = vmatpush1.bf16.msra.mxu0 %v3059
    %3465 = vmatprep.subr.bf16.mxu0 %v3064
    %3466 = vmatpush1.bf16.msra.mxu0 %v3063
    %3467 = vmatprep.subr.bf16.mxu0 %v3068
    %3468 = vmatpush1.bf16.msra.mxu0 %v3067
    %3469 = vmatprep.subr.bf16.mxu0 %v3072
    %3470 = vmatpush1.bf16.msra.mxu0 %v3071
    %3471 = vmatprep.subr.bf16.mxu0 %v3076
    %3472 = vmatpush1.bf16.msra.mxu0 %v3075
    %3473 = vmatprep.mubr.bf16.mxu0 %v2285
    %3474 = vmatmul.mubr.bf16.gmra.mrb[0].mxu0 %v2284
    %v3475 = vpop.f32.mrb[0].mxu0
    %v3476 = vadd.f32 %v3433, %v3475
    %v3477 = vpop.f32.mrb[0].mxu0
    %v3478 = vadd.f32 %v3435, %v3477
    %v3479 = vpop.f32.mrb[0].mxu0
    %v3480 = vadd.f32 %v3437, %v3479
    %v3481 = vpop.f32.mrb[0].mxu0
    %v3482 = vadd.f32 %v3439, %v3481
    %3483 = vdwg.mxu0
    %3484 = vmatprep.subr.bf16.mxu0 %v3080
    %3485 = vmatpush1.bf16.msra.mxu0 %v3079
    %3486 = vmatprep.subr.bf16.mxu0 %v3084
    %3487 = vmatpush1.bf16.msra.mxu0 %v3083
    %3488 = vmatprep.subr.bf16.mxu0 %v3088
    %3489 = vmatpush1.bf16.msra.mxu0 %v3087
    %3490 = vmatprep.subr.bf16.mxu0 %v3092
    %3491 = vmatpush1.bf16.msra.mxu0 %v3091
    %3492 = vmatprep.subr.bf16.mxu0 %v3096
    %3493 = vmatpush1.bf16.msra.mxu0 %v3095
    %3494 = vmatprep.subr.bf16.mxu0 %v3100
    %3495 = vmatpush1.bf16.msra.mxu0 %v3099
    %3496 = vmatprep.subr.bf16.mxu0 %v3104
    %3497 = vmatpush1.bf16.msra.mxu0 %v3103
    %3498 = vmatprep.subr.bf16.mxu0 %v3108
    %3499 = vmatpush1.bf16.msra.mxu0 %v3107
    %3500 = vmatprep.subr.bf16.mxu0 0
    %3501 = vmatpush1.bf16.msra.mxu0 0
    %3502 = vmatprep.subr.bf16.mxu0 0
    %3503 = vmatpush1.bf16.msra.mxu0 0
    %3504 = vmatprep.subr.bf16.mxu0 0
    %3505 = vmatpush1.bf16.msra.mxu0 0
    %3506 = vmatprep.subr.bf16.mxu0 0
    %3507 = vmatpush1.bf16.msra.mxu0 0
    %3508 = vmatprep.subr.bf16.mxu0 0
    %3509 = vmatpush1.bf16.msra.mxu0 0
    %3510 = vmatprep.subr.bf16.mxu0 0
    %3511 = vmatpush1.bf16.msra.mxu0 0
    %3512 = vmatprep.subr.bf16.mxu0 0
    %3513 = vmatpush1.bf16.msra.mxu0 0
    %3514 = vmatprep.subr.bf16.mxu0 0
    %3515 = vmatpush1.bf16.msra.mxu0 0
    %3516 = vmatprep.mubr.bf16.mxu0 0
    %3517 = vmatmul.mubr.bf16.gmra.mrb[0].mxu0 %v2286
    %v3518 = vpop.f32.mrb[0].mxu0
    %v3519 = vadd.f32 %v3476, %v3518
    %v3520 = vpop.f32.mrb[0].mxu0
    %v3521 = vadd.f32 %v3478, %v3520
    %v3522 = vpop.f32.mrb[0].mxu0
    %v3523 = vadd.f32 %v3480, %v3522
    %v3524 = vpop.f32.mrb[0].mxu0
    %v3525 = vadd.f32 %v3482, %v3524
    %3526 = vdwg.mxu0
    %v3527 = vmax.f32 %v3390, 0.0
    %v3528 = vmax.f32 %v3392, 0.0
    %v3529 = vmax.f32 %v3519, 0.0
    %v3530 = vmax.f32 %v3521, 0.0
    %v3531 = vmax.f32 %v3394, 0.0
    %v3532 = vmax.f32 %v3396, 0.0
    %v3533 = vmax.f32 %v3523, 0.0
    %v3534 = vmax.f32 %v3525, 0.0
    %v3535 = vpack.c.bf16 %v3531, %v3527
    %v3536 = vpack.c.bf16 %v3532, %v3528
    %v3537 = vpack.c.bf16 %v3533, %v3529
    %v3538 = vpack.c.bf16 %v3534, %v3530
    %v3539 = vld [vmem:[#allocation8] sm:$0xff]
    %v3540 = vld [vmem:[#allocation8 + $0x8] sm:$0xff]
    %v3541 = vld [vmem:[#allocation8 + $0x10] sm:$0xff]
    %v3542 = vld [vmem:[#allocation8 + $0x18] sm:$0xff]
    %v3543 = vld [vmem:[#allocation8 + $0x20] sm:$0xff]
    %v3544 = vld [vmem:[#allocation8 + $0x28] sm:$0xff]
    %v3545 = vld [vmem:[#allocation8 + $0x30] sm:$0xff]
    %v3546 = vld [vmem:[#allocation8 + $0x38] sm:$0xff]
    %v3547 = vld [vmem:[#allocation8 + $0x40] sm:$0xff]
    %v3548 = vld [vmem:[#allocation8 + $0x48] sm:$0xff]
    %v3549 = vld [vmem:[#allocation8 + $0x50] sm:$0xff]
    %v3550 = vld [vmem:[#allocation8 + $0x58] sm:$0xff]
    %v3551 = vld [vmem:[#allocation8 + $0x60] sm:$0xff]
    %v3552 = vld [vmem:[#allocation8 + $0x68] sm:$0xff]
    %v3553 = vld [vmem:[#allocation8 + $0x70] sm:$0xff]
    %v3554 = vld [vmem:[#allocation8 + $0x78] sm:$0xff]
    %v3555 = vld [vmem:[#allocation8 + $0x80] sm:$0xff]
    %v3556 = vld [vmem:[#allocation8 + $0x88] sm:$0xff]
    %v3557 = vld [vmem:[#allocation8 + $0x90] sm:$0xff]
    %v3558 = vld [vmem:[#allocation8 + $0x98] sm:$0xff]
    %v3559 = vld [vmem:[#allocation8 + $0xa0] sm:$0xff]
    %v3560 = vld [vmem:[#allocation8 + $0xa8] sm:$0xff]
    %v3561 = vld [vmem:[#allocation8 + $0xb0] sm:$0xff]
    %v3562 = vld [vmem:[#allocation8 + $0xb8] sm:$0xff]
    %v3563 = vld [vmem:[#allocation8 + $0xc0] sm:$0xff]
    %v3564 = vld [vmem:[#allocation8 + $0xc8] sm:$0xff]
    %v3565 = vld [vmem:[#allocation8 + $0xd0] sm:$0xff]
    %v3566 = vld [vmem:[#allocation8 + $0xd8] sm:$0xff]
    %v3567 = vld [vmem:[#allocation8 + $0xe0] sm:$0xff]
    %v3568 = vld [vmem:[#allocation8 + $0xe8] sm:$0xff]
    %v3569 = vld [vmem:[#allocation8 + $0xf0] sm:$0xff]
    %v3570 = vld [vmem:[#allocation8 + $0xf8] sm:$0xff]
    %v3571 = vld [vmem:[#allocation8 + $0x100] sm:$0xff]
    %v3572 = vld [vmem:[#allocation8 + $0x108] sm:$0xff]
    %v3573 = vld [vmem:[#allocation8 + $0x110] sm:$0xff]
    %v3574 = vld [vmem:[#allocation8 + $0x118] sm:$0xff]
    %v3575 = vld [vmem:[#allocation8 + $0x120] sm:$0xff]
    %v3576 = vld [vmem:[#allocation8 + $0x128] sm:$0xff]
    %v3577 = vld [vmem:[#allocation8 + $0x130] sm:$0xff]
    %v3578 = vld [vmem:[#allocation8 + $0x138] sm:$0xff]
    %v3579 = vld [vmem:[#allocation8 + $0x140] sm:$0xff]
    %v3580 = vld [vmem:[#allocation8 + $0x148] sm:$0xff]
    %v3581 = vld [vmem:[#allocation8 + $0x150] sm:$0xff]
    %v3582 = vld [vmem:[#allocation8 + $0x158] sm:$0xff]
    %v3583 = vld [vmem:[#allocation8 + $0x160] sm:$0xff]
    %v3584 = vld [vmem:[#allocation8 + $0x168] sm:$0xff]
    %v3585 = vld [vmem:[#allocation8 + $0x170] sm:$0xff]
    %v3586 = vld [vmem:[#allocation8 + $0x178] sm:$0xff]
    %v3587 = vld [vmem:[#allocation8 + $0x180] sm:$0xff]
    %v3588 = vld [vmem:[#allocation8 + $0x188] sm:$0xff]
    %v3589 = vld [vmem:[#allocation8 + $0x190] sm:$0xff]
    %v3590 = vld [vmem:[#allocation8 + $0x198] sm:$0xff]
    %v3591 = vld [vmem:[#allocation8 + $0x1a0] sm:$0xff]
    %v3592 = vld [vmem:[#allocation8 + $0x1a8] sm:$0xff]
    %v3593 = vld [vmem:[#allocation8 + $0x1b0] sm:$0xff]
    %v3594 = vld [vmem:[#allocation8 + $0x1b8] sm:$0xff]
    %v3595 = vld [vmem:[#allocation8 + $0x1c0] sm:$0xff]
    %v3596 = vld [vmem:[#allocation8 + $0x1c8] sm:$0xff]
    %v3597 = vld [vmem:[#allocation8 + $0x1d0] sm:$0xff]
    %v3598 = vld [vmem:[#allocation8 + $0x1d8] sm:$0xff]
    %v3599 = vld [vmem:[#allocation8 + $0x1e0] sm:$0xff]
    %v3600 = vld [vmem:[#allocation8 + $0x1e8] sm:$0xff]
    %v3601 = vld [vmem:[#allocation8 + $0x1f0] sm:$0xff]
    %v3602 = vld [vmem:[#allocation8 + $0x1f8] sm:$0xff]
    %v3603 = vld [vmem:[%s6] sm:$0x3]
    %v3605 = vlaneseq
    %v3606 = vshrl.u32 %v3605, 7
    %v3607 = vsub.s32 0, %v3606
    %v3608 = vrot.slane %v3603, %v3607
    %v3609 = vlaneseq
    %v3610 = vshrl.u32 %v3609, 7
    %v3611 = vsub.s32 1, %v3610
    %v3612 = vrot.slane %v3603, %v3611
    %v3679 = vunpack.c.l.b16 %v3539
    %v3680 = vunpack.c.h.b16 %v3539
    %v3681 = vunpack.c.l.b16 %v3540
    %v3682 = vunpack.c.h.b16 %v3540
    %v3683 = vunpack.c.l.b16 %v3541
    %v3684 = vunpack.c.h.b16 %v3541
    %v3685 = vunpack.c.l.b16 %v3542
    %v3686 = vunpack.c.h.b16 %v3542
    %v3687 = vunpack.c.l.b16 %v3543
    %v3688 = vunpack.c.h.b16 %v3543
    %v3689 = vunpack.c.l.b16 %v3544
    %v3690 = vunpack.c.h.b16 %v3544
    %v3691 = vunpack.c.l.b16 %v3545
    %v3692 = vunpack.c.h.b16 %v3545
    %v3693 = vunpack.c.l.b16 %v3546
    %v3694 = vunpack.c.h.b16 %v3546
    %v3695 = vunpack.c.l.b16 %v3547
    %v3696 = vunpack.c.h.b16 %v3547
    %v3697 = vunpack.c.l.b16 %v3548
    %v3698 = vunpack.c.h.b16 %v3548
    %v3699 = vunpack.c.l.b16 %v3549
    %v3700 = vunpack.c.h.b16 %v3549
    %v3701 = vunpack.c.l.b16 %v3550
    %v3702 = vunpack.c.h.b16 %v3550
    %v3703 = vunpack.c.l.b16 %v3551
    %v3704 = vunpack.c.h.b16 %v3551
    %v3705 = vunpack.c.l.b16 %v3552
    %v3706 = vunpack.c.h.b16 %v3552
    %v3707 = vunpack.c.l.b16 %v3553
    %v3708 = vunpack.c.h.b16 %v3553
    %v3709 = vunpack.c.l.b16 %v3554
    %v3710 = vunpack.c.h.b16 %v3554
    %v3711 = vunpack.c.l.b16 %v3555
    %v3712 = vunpack.c.h.b16 %v3555
    %v3713 = vunpack.c.l.b16 %v3556
    %v3714 = vunpack.c.h.b16 %v3556
    %v3715 = vunpack.c.l.b16 %v3557
    %v3716 = vunpack.c.h.b16 %v3557
    %v3717 = vunpack.c.l.b16 %v3558
    %v3718 = vunpack.c.h.b16 %v3558
    %v3719 = vunpack.c.l.b16 %v3559
    %v3720 = vunpack.c.h.b16 %v3559
    %v3721 = vunpack.c.l.b16 %v3560
    %v3722 = vunpack.c.h.b16 %v3560
    %v3723 = vunpack.c.l.b16 %v3561
    %v3724 = vunpack.c.h.b16 %v3561
    %v3725 = vunpack.c.l.b16 %v3562
    %v3726 = vunpack.c.h.b16 %v3562
    %v3727 = vunpack.c.l.b16 %v3563
    %v3728 = vunpack.c.h.b16 %v3563
    %v3729 = vunpack.c.l.b16 %v3564
    %v3730 = vunpack.c.h.b16 %v3564
    %v3731 = vunpack.c.l.b16 %v3565
    %v3732 = vunpack.c.h.b16 %v3565
    %v3733 = vunpack.c.l.b16 %v3566
    %v3734 = vunpack.c.h.b16 %v3566
    %v3735 = vunpack.c.l.b16 %v3567
    %v3736 = vunpack.c.h.b16 %v3567
    %v3737 = vunpack.c.l.b16 %v3568
    %v3738 = vunpack.c.h.b16 %v3568
    %v3739 = vunpack.c.l.b16 %v3569
    %v3740 = vunpack.c.h.b16 %v3569
    %v3741 = vunpack.c.l.b16 %v3570
    %v3742 = vunpack.c.h.b16 %v3570
    %v3743 = vunpack.c.l.b16 %v3571
    %v3744 = vunpack.c.h.b16 %v3571
    %v3745 = vunpack.c.l.b16 %v3572
    %v3746 = vunpack.c.h.b16 %v3572
    %v3747 = vunpack.c.l.b16 %v3573
    %v3748 = vunpack.c.h.b16 %v3573
    %v3749 = vunpack.c.l.b16 %v3574
    %v3750 = vunpack.c.h.b16 %v3574
    %v3751 = vunpack.c.l.b16 %v3575
    %v3752 = vunpack.c.h.b16 %v3575
    %v3753 = vunpack.c.l.b16 %v3576
    %v3754 = vunpack.c.h.b16 %v3576
    %v3755 = vunpack.c.l.b16 %v3577
    %v3756 = vunpack.c.h.b16 %v3577
    %v3757 = vunpack.c.l.b16 %v3578
    %v3758 = vunpack.c.h.b16 %v3578
    %v3759 = vunpack.c.l.b16 %v3579
    %v3760 = vunpack.c.h.b16 %v3579
    %v3761 = vunpack.c.l.b16 %v3580
    %v3762 = vunpack.c.h.b16 %v3580
    %v3763 = vunpack.c.l.b16 %v3581
    %v3764 = vunpack.c.h.b16 %v3581
    %v3765 = vunpack.c.l.b16 %v3582
    %v3766 = vunpack.c.h.b16 %v3582
    %v3767 = vunpack.c.l.b16 %v3583
    %v3768 = vunpack.c.h.b16 %v3583
    %v3769 = vunpack.c.l.b16 %v3584
    %v3770 = vunpack.c.h.b16 %v3584
    %v3771 = vunpack.c.l.b16 %v3585
    %v3772 = vunpack.c.h.b16 %v3585
    %v3773 = vunpack.c.l.b16 %v3586
    %v3774 = vunpack.c.h.b16 %v3586
    %v3775 = vunpack.c.l.b16 %v3587
    %v3776 = vunpack.c.h.b16 %v3587
    %v3777 = vunpack.c.l.b16 %v3588
    %v3778 = vunpack.c.h.b16 %v3588
    %v3779 = vunpack.c.l.b16 %v3589
    %v3780 = vunpack.c.h.b16 %v3589
    %v3781 = vunpack.c.l.b16 %v3590
    %v3782 = vunpack.c.h.b16 %v3590
    %v3783 = vunpack.c.l.b16 %v3591
    %v3784 = vunpack.c.h.b16 %v3591
    %v3785 = vunpack.c.l.b16 %v3592
    %v3786 = vunpack.c.h.b16 %v3592
    %v3787 = vunpack.c.l.b16 %v3593
    %v3788 = vunpack.c.h.b16 %v3593
    %v3789 = vunpack.c.l.b16 %v3594
    %v3790 = vunpack.c.h.b16 %v3594
    %v3791 = vunpack.c.l.b16 %v3595
    %v3792 = vunpack.c.h.b16 %v3595
    %v3793 = vunpack.c.l.b16 %v3596
    %v3794 = vunpack.c.h.b16 %v3596
    %v3795 = vunpack.c.l.b16 %v3597
    %v3796 = vunpack.c.h.b16 %v3597
    %v3797 = vunpack.c.l.b16 %v3598
    %v3798 = vunpack.c.h.b16 %v3598
    %v3799 = vunpack.c.l.b16 %v3599
    %v3800 = vunpack.c.h.b16 %v3599
    %v3801 = vunpack.c.l.b16 %v3600
    %v3802 = vunpack.c.h.b16 %v3600
    %v3803 = vunpack.c.l.b16 %v3601
    %v3804 = vunpack.c.h.b16 %v3601
    %v3805 = vunpack.c.l.b16 %v3602
    %v3806 = vunpack.c.h.b16 %v3602
    %v3807 = vpack.c.b16 %v3681, %v3679
    %v3808 = vpack.c.b16 %v3682, %v3680
    %v3809 = vpack.c.b16 %v3685, %v3683
    %v3810 = vpack.c.b16 %v3686, %v3684
    %v3811 = vpack.c.b16 %v3689, %v3687
    %v3812 = vpack.c.b16 %v3690, %v3688
    %v3813 = vpack.c.b16 %v3693, %v3691
    %v3814 = vpack.c.b16 %v3694, %v3692
    %v3815 = vpack.c.b16 %v3697, %v3695
    %v3816 = vpack.c.b16 %v3698, %v3696
    %v3817 = vpack.c.b16 %v3701, %v3699
    %v3818 = vpack.c.b16 %v3702, %v3700
    %v3819 = vpack.c.b16 %v3705, %v3703
    %v3820 = vpack.c.b16 %v3706, %v3704
    %v3821 = vpack.c.b16 %v3709, %v3707
    %v3822 = vpack.c.b16 %v3710, %v3708
    %v3823 = vpack.c.b16 %v3713, %v3711
    %v3824 = vpack.c.b16 %v3714, %v3712
    %v3825 = vpack.c.b16 %v3717, %v3715
    %v3826 = vpack.c.b16 %v3718, %v3716
    %v3827 = vpack.c.b16 %v3721, %v3719
    %v3828 = vpack.c.b16 %v3722, %v3720
    %v3829 = vpack.c.b16 %v3725, %v3723
    %v3830 = vpack.c.b16 %v3726, %v3724
    %v3831 = vpack.c.b16 %v3729, %v3727
    %v3832 = vpack.c.b16 %v3730, %v3728
    %v3833 = vpack.c.b16 %v3733, %v3731
    %v3834 = vpack.c.b16 %v3734, %v3732
    %v3835 = vpack.c.b16 %v3737, %v3735
    %v3836 = vpack.c.b16 %v3738, %v3736
    %v3837 = vpack.c.b16 %v3741, %v3739
    %v3838 = vpack.c.b16 %v3742, %v3740
    %v3839 = vpack.c.b16 %v3745, %v3743
    %v3840 = vpack.c.b16 %v3746, %v3744
    %v3841 = vpack.c.b16 %v3749, %v3747
    %v3842 = vpack.c.b16 %v3750, %v3748
    %v3843 = vpack.c.b16 %v3753, %v3751
    %v3844 = vpack.c.b16 %v3754, %v3752
    %v3845 = vpack.c.b16 %v3757, %v3755
    %v3846 = vpack.c.b16 %v3758, %v3756
    %v3847 = vpack.c.b16 %v3761, %v3759
    %v3848 = vpack.c.b16 %v3762, %v3760
    %v3849 = vpack.c.b16 %v3765, %v3763
    %v3850 = vpack.c.b16 %v3766, %v3764
    %v3851 = vpack.c.b16 %v3769, %v3767
    %v3852 = vpack.c.b16 %v3770, %v3768
    %v3853 = vpack.c.b16 %v3773, %v3771
    %v3854 = vpack.c.b16 %v3774, %v3772
    %v3855 = vpack.c.b16 %v3777, %v3775
    %v3856 = vpack.c.b16 %v3778, %v3776
    %v3857 = vpack.c.b16 %v3781, %v3779
    %v3858 = vpack.c.b16 %v3782, %v3780
    %v3859 = vpack.c.b16 %v3785, %v3783
    %v3860 = vpack.c.b16 %v3786, %v3784
    %v3861 = vpack.c.b16 %v3789, %v3787
    %v3862 = vpack.c.b16 %v3790, %v3788
    %v3863 = vpack.c.b16 %v3793, %v3791
    %v3864 = vpack.c.b16 %v3794, %v3792
    %v3865 = vpack.c.b16 %v3797, %v3795
    %v3866 = vpack.c.b16 %v3798, %v3796
    %v3867 = vpack.c.b16 %v3801, %v3799
    %v3868 = vpack.c.b16 %v3802, %v3800
    %v3869 = vpack.c.b16 %v3805, %v3803
    %v3870 = vpack.c.b16 %v3806, %v3804
    %3935 = vmatprep.subr.bf16.mxu0 %v3808
    %3936 = vmatpush1.bf16.msra.mxu0 %v3807
    %3937 = vmatprep.subr.bf16.mxu0 %v3810
    %3938 = vmatpush1.bf16.msra.mxu0 %v3809
    %3939 = vmatprep.subr.bf16.mxu0 %v3812
    %3940 = vmatpush1.bf16.msra.mxu0 %v3811
    %3941 = vmatprep.subr.bf16.mxu0 %v3814
    %3942 = vmatpush1.bf16.msra.mxu0 %v3813
    %3943 = vmatprep.subr.bf16.mxu0 %v3816
    %3944 = vmatpush1.bf16.msra.mxu0 %v3815
    %3945 = vmatprep.subr.bf16.mxu0 %v3818
    %3946 = vmatpush1.bf16.msra.mxu0 %v3817
    %3947 = vmatprep.subr.bf16.mxu0 %v3820
    %3948 = vmatpush1.bf16.msra.mxu0 %v3819
    %3949 = vmatprep.subr.bf16.mxu0 %v3822
    %3950 = vmatpush1.bf16.msra.mxu0 %v3821
    %3951 = vmatprep.subr.bf16.mxu0 %v3824
    %3952 = vmatpush1.bf16.msra.mxu0 %v3823
    %3953 = vmatprep.subr.bf16.mxu0 %v3826
    %3954 = vmatpush1.bf16.msra.mxu0 %v3825
    %3955 = vmatprep.subr.bf16.mxu0 %v3828
    %3956 = vmatpush1.bf16.msra.mxu0 %v3827
    %3957 = vmatprep.subr.bf16.mxu0 %v3830
    %3958 = vmatpush1.bf16.msra.mxu0 %v3829
    %3959 = vmatprep.subr.bf16.mxu0 %v3832
    %3960 = vmatpush1.bf16.msra.mxu0 %v3831
    %3961 = vmatprep.subr.bf16.mxu0 %v3834
    %3962 = vmatpush1.bf16.msra.mxu0 %v3833
    %3963 = vmatprep.subr.bf16.mxu0 %v3836
    %3964 = vmatpush1.bf16.msra.mxu0 %v3835
    %3965 = vmatprep.subr.bf16.mxu0 %v3838
    %3966 = vmatpush1.bf16.msra.mxu0 %v3837
    %3967 = vmatprep.mubr.bf16.mxu0 %v3536
    %3968 = vmatmul.mubr.bf16.gmra.mrb[0].mxu0 %v3535
    %v3969 = vpop.f32.mrb[0].mxu0
    %v3970 = vadd.f32 %v3608, %v3969
    %v3971 = vpop.f32.mrb[0].mxu0
    %v3972 = vadd.f32 %v3612, %v3971
    %v3973 = vpop.f32.mrb[0].mxu0
    %v3974 = vadd.f32 %v3608, %v3973
    %v3975 = vpop.f32.mrb[0].mxu0
    %v3976 = vadd.f32 %v3612, %v3975
    %3977 = vdwg.mxu0
    %3978 = vmatprep.subr.bf16.mxu0 %v3840
    %3979 = vmatpush1.bf16.msra.mxu0 %v3839
    %3980 = vmatprep.subr.bf16.mxu0 %v3842
    %3981 = vmatpush1.bf16.msra.mxu0 %v3841
    %3982 = vmatprep.subr.bf16.mxu0 %v3844
    %3983 = vmatpush1.bf16.msra.mxu0 %v3843
    %3984 = vmatprep.subr.bf16.mxu0 %v3846
    %3985 = vmatpush1.bf16.msra.mxu0 %v3845
    %3986 = vmatprep.subr.bf16.mxu0 %v3848
    %3987 = vmatpush1.bf16.msra.mxu0 %v3847
    %3988 = vmatprep.subr.bf16.mxu0 %v3850
    %3989 = vmatpush1.bf16.msra.mxu0 %v3849
    %3990 = vmatprep.subr.bf16.mxu0 %v3852
    %3991 = vmatpush1.bf16.msra.mxu0 %v3851
    %3992 = vmatprep.subr.bf16.mxu0 %v3854
    %3993 = vmatpush1.bf16.msra.mxu0 %v3853
    %3994 = vmatprep.subr.bf16.mxu0 %v3856
    %3995 = vmatpush1.bf16.msra.mxu0 %v3855
    %3996 = vmatprep.subr.bf16.mxu0 %v3858
    %3997 = vmatpush1.bf16.msra.mxu0 %v3857
    %3998 = vmatprep.subr.bf16.mxu0 %v3860
    %3999 = vmatpush1.bf16.msra.mxu0 %v3859
    %4000 = vmatprep.subr.bf16.mxu0 %v3862
    %4001 = vmatpush1.bf16.msra.mxu0 %v3861
    %4002 = vmatprep.subr.bf16.mxu0 %v3864
    %4003 = vmatpush1.bf16.msra.mxu0 %v3863
    %4004 = vmatprep.subr.bf16.mxu0 %v3866
    %4005 = vmatpush1.bf16.msra.mxu0 %v3865
    %4006 = vmatprep.subr.bf16.mxu0 %v3868
    %4007 = vmatpush1.bf16.msra.mxu0 %v3867
    %4008 = vmatprep.subr.bf16.mxu0 %v3870
    %4009 = vmatpush1.bf16.msra.mxu0 %v3869
    %4010 = vmatprep.mubr.bf16.mxu0 %v3538
    %4011 = vmatmul.mubr.bf16.gmra.mrb[0].mxu0 %v3537
    %v4012 = vpop.f32.mrb[0].mxu0
    %v4013 = vadd.f32 %v3970, %v4012
    %v4014 = vpop.f32.mrb[0].mxu0
    %v4015 = vadd.f32 %v3972, %v4014
    %v4016 = vpop.f32.mrb[0].mxu0
    %v4017 = vadd.f32 %v3974, %v4016
    %v4018 = vpop.f32.mrb[0].mxu0
    %v4019 = vadd.f32 %v3976, %v4018
    %4020 = vdwg.mxu0
    %v4021 = vmax.f32 %v4013, 0.0
    %v4022 = vmax.f32 %v4015, 0.0
    %v4023 = vmax.f32 %v4017, 0.0
    %v4024 = vmax.f32 %v4019, 0.0
    %v4025 = vpack.c.bf16 %v4023, %v4021
    %v4026 = vpack.c.bf16 %v4024, %v4022
    %v4027 = vld [vmem:[#allocation10] sm:$0xf]
    %v4028 = vld [vmem:[#allocation10 + $0x4] sm:$0xf]
    %v4029 = vld [vmem:[#allocation10 + $0x8] sm:$0xf]
    %v4030 = vld [vmem:[#allocation10 + $0xc] sm:$0xf]
    %v4031 = vld [vmem:[#allocation10 + $0x10] sm:$0xf]
    %v4032 = vld [vmem:[#allocation10 + $0x14] sm:$0xf]
    %v4033 = vld [vmem:[#allocation10 + $0x18] sm:$0xf]
    %v4034 = vld [vmem:[#allocation10 + $0x1c] sm:$0xf]
    %v4035 = vld [vmem:[#allocation10 + $0x20] sm:$0xf]
    %v4036 = vld [vmem:[#allocation10 + $0x24] sm:$0xf]
    %v4037 = vld [vmem:[#allocation10 + $0x28] sm:$0xf]
    %v4038 = vld [vmem:[#allocation10 + $0x2c] sm:$0xf]
    %v4039 = vld [vmem:[#allocation10 + $0x30] sm:$0xf]
    %v4040 = vld [vmem:[#allocation10 + $0x34] sm:$0xf]
    %v4041 = vld [vmem:[#allocation10 + $0x38] sm:$0xf]
    %v4042 = vld [vmem:[#allocation10 + $0x3c] sm:$0xf]
    %v4043 = vld [vmem:[#allocation10 + $0x40] sm:$0xf]
    %v4044 = vld [vmem:[#allocation10 + $0x44] sm:$0xf]
    %v4045 = vld [vmem:[#allocation10 + $0x48] sm:$0xf]
    %v4046 = vld [vmem:[#allocation10 + $0x4c] sm:$0xf]
    %v4047 = vld [vmem:[#allocation10 + $0x50] sm:$0xf]
    %v4048 = vld [vmem:[#allocation10 + $0x54] sm:$0xf]
    %v4049 = vld [vmem:[#allocation10 + $0x58] sm:$0xf]
    %v4050 = vld [vmem:[#allocation10 + $0x5c] sm:$0xf]
    %v4051 = vld [vmem:[#allocation10 + $0x60] sm:$0xf]
    %v4052 = vld [vmem:[#allocation10 + $0x64] sm:$0xf]
    %v4053 = vld [vmem:[#allocation10 + $0x68] sm:$0xf]
    %v4054 = vld [vmem:[#allocation10 + $0x6c] sm:$0xf]
    %v4055 = vld [vmem:[#allocation10 + $0x70] sm:$0xf]
    %v4056 = vld [vmem:[#allocation10 + $0x74] sm:$0xf]
    %v4057 = vld [vmem:[#allocation10 + $0x78] sm:$0xf]
    %v4058 = vld [vmem:[#allocation10 + $0x7c] sm:$0xf]
    %v4059 = vld [vmem:[%s8] sm:$0x1]
    %v4061 = vlaneseq
    %v4062 = vshrl.u32 %v4061, 7
    %v4063 = vsub.s32 0, %v4062
    %v4064 = vrot.slane %v4059, %v4063
    %v4098 = vunpack.c.l.b16 %v4027
    %v4099 = vunpack.c.l.b16 %v4028
    %v4100 = vunpack.c.l.b16 %v4029
    %v4101 = vunpack.c.l.b16 %v4030
    %v4102 = vunpack.c.l.b16 %v4031
    %v4103 = vunpack.c.l.b16 %v4032
    %v4104 = vunpack.c.l.b16 %v4033
    %v4105 = vunpack.c.l.b16 %v4034
    %v4106 = vunpack.c.l.b16 %v4035
    %v4107 = vunpack.c.l.b16 %v4036
    %v4108 = vunpack.c.l.b16 %v4037
    %v4109 = vunpack.c.l.b16 %v4038
    %v4110 = vunpack.c.l.b16 %v4039
    %v4111 = vunpack.c.l.b16 %v4040
    %v4112 = vunpack.c.l.b16 %v4041
    %v4113 = vunpack.c.l.b16 %v4042
    %v4114 = vunpack.c.l.b16 %v4043
    %v4115 = vunpack.c.l.b16 %v4044
    %v4116 = vunpack.c.l.b16 %v4045
    %v4117 = vunpack.c.l.b16 %v4046
    %v4118 = vunpack.c.l.b16 %v4047
    %v4119 = vunpack.c.l.b16 %v4048
    %v4120 = vunpack.c.l.b16 %v4049
    %v4121 = vunpack.c.l.b16 %v4050
    %v4122 = vunpack.c.l.b16 %v4051
    %v4123 = vunpack.c.l.b16 %v4052
    %v4124 = vunpack.c.l.b16 %v4053
    %v4125 = vunpack.c.l.b16 %v4054
    %v4126 = vunpack.c.l.b16 %v4055
    %v4127 = vunpack.c.l.b16 %v4056
    %v4128 = vunpack.c.l.b16 %v4057
    %v4129 = vunpack.c.l.b16 %v4058
    %v4130 = vpack.c.b16 %v4099, %v4098
    %v4131 = vpack.c.b16 %v4101, %v4100
    %v4132 = vpack.c.b16 %v4103, %v4102
    %v4133 = vpack.c.b16 %v4105, %v4104
    %v4134 = vpack.c.b16 %v4107, %v4106
    %v4135 = vpack.c.b16 %v4109, %v4108
    %v4136 = vpack.c.b16 %v4111, %v4110
    %v4137 = vpack.c.b16 %v4113, %v4112
    %v4138 = vpack.c.b16 %v4115, %v4114
    %v4139 = vpack.c.b16 %v4117, %v4116
    %v4140 = vpack.c.b16 %v4119, %v4118
    %v4141 = vpack.c.b16 %v4121, %v4120
    %v4142 = vpack.c.b16 %v4123, %v4122
    %v4143 = vpack.c.b16 %v4125, %v4124
    %v4144 = vpack.c.b16 %v4127, %v4126
    %v4145 = vpack.c.b16 %v4129, %v4128
    %4162 = vmatprep.subr.bf16.mxu0 0
    %4163 = vmatpush1.bf16.msra.mxu0 %v4130
    %4164 = vmatprep.subr.bf16.mxu0 0
    %4165 = vmatpush1.bf16.msra.mxu0 %v4131
    %4166 = vmatprep.subr.bf16.mxu0 0
    %4167 = vmatpush1.bf16.msra.mxu0 %v4132
    %4168 = vmatprep.subr.bf16.mxu0 0
    %4169 = vmatpush1.bf16.msra.mxu0 %v4133
    %4170 = vmatprep.subr.bf16.mxu0 0
    %4171 = vmatpush1.bf16.msra.mxu0 %v4134
    %4172 = vmatprep.subr.bf16.mxu0 0
    %4173 = vmatpush1.bf16.msra.mxu0 %v4135
    %4174 = vmatprep.subr.bf16.mxu0 0
    %4175 = vmatpush1.bf16.msra.mxu0 %v4136
    %4176 = vmatprep.subr.bf16.mxu0 0
    %4177 = vmatpush1.bf16.msra.mxu0 %v4137
    %4178 = vmatprep.subr.bf16.mxu0 0
    %4179 = vmatpush1.bf16.msra.mxu0 %v4138
    %4180 = vmatprep.subr.bf16.mxu0 0
    %4181 = vmatpush1.bf16.msra.mxu0 %v4139
    %4182 = vmatprep.subr.bf16.mxu0 0
    %4183 = vmatpush1.bf16.msra.mxu0 %v4140
    %4184 = vmatprep.subr.bf16.mxu0 0
    %4185 = vmatpush1.bf16.msra.mxu0 %v4141
    %4186 = vmatprep.subr.bf16.mxu0 0
    %4187 = vmatpush1.bf16.msra.mxu0 %v4142
    %4188 = vmatprep.subr.bf16.mxu0 0
    %4189 = vmatpush1.bf16.msra.mxu0 %v4143
    %4190 = vmatprep.subr.bf16.mxu0 0
    %4191 = vmatpush1.bf16.msra.mxu0 %v4144
    %4192 = vmatprep.subr.bf16.mxu0 0
    %4193 = vmatpush1.bf16.msra.mxu0 %v4145
    %4194 = vmatprep.mubr.bf16.mxu0 %v4026
    %4195 = vmatmul.mubr.bf16.gmra.mrb[0].mxu0 %v4025
    %v4196 = vpop.f32.mrb[0].mxu0
    %v4197 = vadd.f32 %v4064, %v4196
    %v4198 = vpop.f32.mrb[0].mxu0
    %v4199 = vpop.f32.mrb[0].mxu0
    %v4200 = vadd.f32 %v4064, %v4199
    %v4201 = vpop.f32.mrb[0].mxu0
    %4202 = vdwg.mxu0
    %v4203 = vmax.f32 %v4197, 0.0
    %v4204 = vmax.f32 %v4200, 0.0
    %v4205 = vpack.c.bf16 %v4204, %v4203
    %v4206 = vld [vmem:[#allocation11] sm:$0xf]
    %v4207 = vld [vmem:[#allocation11 + $0x4] sm:$0xf]
    %v4208 = vld [vmem:[#allocation11 + $0x8] sm:$0xf]
    %v4209 = vld [vmem:[#allocation11 + $0xc] sm:$0xf]
    %v4210 = vld [vmem:[#allocation11 + $0x10] sm:$0xf]
    %v4211 = vld [vmem:[#allocation11 + $0x14] sm:$0xf]
    %v4212 = vld [vmem:[#allocation11 + $0x18] sm:$0xf]
    %v4213 = vld [vmem:[#allocation11 + $0x1c] sm:$0xf]
    %v4214 = vld [vmem:[#allocation11 + $0x20] sm:$0xf]
    %v4215 = vld [vmem:[#allocation11 + $0x24] sm:$0xf]
    %v4216 = vld [vmem:[#allocation11 + $0x28] sm:$0xf]
    %v4217 = vld [vmem:[#allocation11 + $0x2c] sm:$0xf]
    %v4218 = vld [vmem:[#allocation11 + $0x30] sm:$0xf]
    %v4219 = vld [vmem:[#allocation11 + $0x34] sm:$0xf]
    %v4220 = vld [vmem:[#allocation11 + $0x38] sm:$0xf]
    %v4221 = vld [vmem:[#allocation11 + $0x3c] sm:$0xf]
    %v4222 = vld [vmem:[%s10] sm:$0x1]
    %v4224 = vlaneseq
    %v4225 = vshrl.u32 %v4224, 7
    %v4226 = vsub.s32 0, %v4225
    %v4227 = vrot.slane %v4222, %v4226
    %v4245 = vunpack.c.l.b16 %v4206
    %v4246 = vunpack.c.l.b16 %v4207
    %v4247 = vunpack.c.l.b16 %v4208
    %v4248 = vunpack.c.l.b16 %v4209
    %v4249 = vunpack.c.l.b16 %v4210
    %v4250 = vunpack.c.l.b16 %v4211
    %v4251 = vunpack.c.l.b16 %v4212
    %v4252 = vunpack.c.l.b16 %v4213
    %v4253 = vunpack.c.l.b16 %v4214
    %v4254 = vunpack.c.l.b16 %v4215
    %v4255 = vunpack.c.l.b16 %v4216
    %v4256 = vunpack.c.l.b16 %v4217
    %v4257 = vunpack.c.l.b16 %v4218
    %v4258 = vunpack.c.l.b16 %v4219
    %v4259 = vunpack.c.l.b16 %v4220
    %v4260 = vunpack.c.l.b16 %v4221
    %v4261 = vpack.c.b16 %v4246, %v4245
    %v4262 = vpack.c.b16 %v4248, %v4247
    %v4263 = vpack.c.b16 %v4250, %v4249
    %v4264 = vpack.c.b16 %v4252, %v4251
    %v4265 = vpack.c.b16 %v4254, %v4253
    %v4266 = vpack.c.b16 %v4256, %v4255
    %v4267 = vpack.c.b16 %v4258, %v4257
    %v4268 = vpack.c.b16 %v4260, %v4259
    %4277 = vmatprep.subr.bf16.mxu0 0
    %4278 = vmatpush1.bf16.msra.mxu0 %v4261
    %4279 = vmatprep.subr.bf16.mxu0 0
    %4280 = vmatpush1.bf16.msra.mxu0 %v4262
    %4281 = vmatprep.subr.bf16.mxu0 0
    %4282 = vmatpush1.bf16.msra.mxu0 %v4263
    %4283 = vmatprep.subr.bf16.mxu0 0
    %4284 = vmatpush1.bf16.msra.mxu0 %v4264
    %4285 = vmatprep.subr.bf16.mxu0 0
    %4286 = vmatpush1.bf16.msra.mxu0 %v4265
    %4287 = vmatprep.subr.bf16.mxu0 0
    %4288 = vmatpush1.bf16.msra.mxu0 %v4266
    %4289 = vmatprep.subr.bf16.mxu0 0
    %4290 = vmatpush1.bf16.msra.mxu0 %v4267
    %4291 = vmatprep.subr.bf16.mxu0 0
    %4292 = vmatpush1.bf16.msra.mxu0 %v4268
    %4293 = vmatprep.subr.bf16.mxu0 0
    %4294 = vmatpush1.bf16.msra.mxu0 0
    %4295 = vmatprep.subr.bf16.mxu0 0
    %4296 = vmatpush1.bf16.msra.mxu0 0
    %4297 = vmatprep.subr.bf16.mxu0 0
    %4298 = vmatpush1.bf16.msra.mxu0 0
    %4299 = vmatprep.subr.bf16.mxu0 0
    %4300 = vmatpush1.bf16.msra.mxu0 0
    %4301 = vmatprep.subr.bf16.mxu0 0
    %4302 = vmatpush1.bf16.msra.mxu0 0
    %4303 = vmatprep.subr.bf16.mxu0 0
    %4304 = vmatpush1.bf16.msra.mxu0 0
    %4305 = vmatprep.subr.bf16.mxu0 0
    %4306 = vmatpush1.bf16.msra.mxu0 0
    %4307 = vmatprep.subr.bf16.mxu0 0
    %4308 = vmatpush1.bf16.msra.mxu0 0
    %4309 = vmatprep.mubr.bf16.mxu0 0
    %4310 = vmatmul.mubr.bf16.gmra.mrb[0].mxu0 %v4205
    %v4311 = vpop.f32.mrb[0].mxu0
    %v4312 = vadd.f32 %v4227, %v4311
    %v4313 = vpop.f32.mrb[0].mxu0
    %v4314 = vpop.f32.mrb[0].mxu0
    %v4315 = vadd.f32 %v4227, %v4314
    %v4316 = vpop.f32.mrb[0].mxu0
    %4317 = vdwg.mxu0
    %4318 = vst [vmem:[#allocation13] sm:$0xff] %v4312
    %4319 = vst [vmem:[#allocation13 + $0x8] sm:$0xff] %v4315
    // Predicated region
    $region70: #{tpu_custom_call.1} parent=1 // pred_check
      _
    $region71: #{tpu_custom_call.1} parent=1 // pred_check_branch
      %4321 = sbr.rel (0) target = $region73
    $region72: #{tpu_custom_call.1} parent=1 // pred_region
      %s4323 = ssub.s32 256, 256
      %4324 = vsyncadd [#allocation4], %s4323
      %s4325 = sshll.u32 [#allocation13], 4
      %s4326 = int_to_ptr.vmem [resolvable:$true] %s4325
      %4331 = dma.vmem_to_hbm [thread:$0]  %s4326, 256, %s11, [#allocation4], 128, 128, 8
    $region73: #{tpu_custom_call.1} parent=1 // pred_fallthru
      _
    // Predicated region
    $region74: #{tpu_custom_call.1} parent=1 // pred_check
      _
    $region75: #{tpu_custom_call.1} parent=1 // pred_check_branch
      %4333 = sbr.rel (0) target = $region77
    $region76: #{tpu_custom_call.1} parent=1 // pred_region
      %4334 = dma.done [#allocation4], 256
    $region77: #{tpu_custom_call.1} parent=1 // pred_fallthru
      _
    %4335 = vsyncpa [#allocation3], 1
    %4336 = vsyncpa [#allocation6], 1
    %4337 = vsyncpa [#allocation9], 1
    %4338 = vsyncpa [#allocation12], 1
    %4339 = vsyncpa [#allocation4], 1

</llo_original>
